<compile_context>
chip_gen: v6e
topology: v6e:2x2x1
jax: 0.10.0
libtpu: 0.0.40
codegen_flags: <defaults>
</compile_context>

<pallas_src>
import jax
import jax.numpy as jnp
from jax.experimental import pallas as pl
from jax.experimental.pallas import tpu as pltpu

# ---------------- model hyper-parameters (small, synthetic) ----------------
B = 2            # batch
S = 8            # sequence length
H = 32           # hidden size
NUM_HEADS = 2
HEAD_DIM = H // NUM_HEADS
FFN = 64
NUM_LAYERS = 2
VOCAB = 100
NUM_CLASSES = 3
LN_EPS = 1e-12

NC_PAD = 128     # classifier output padded to a full 128-lane width (dense store)


# ---------------- the single fused Pallas kernel ----------------
def fused_forward_kernel(x_ref, bias_ref,
                         wqkv_ref, bqkv_ref, wo_ref, bo_ref,
                         ln1g_ref, ln1b_ref,
                         w1_ref, b1_ref, w2_ref, b2_ref,
                         ln2g_ref, ln2b_ref,
                         wc_ref, bc_ref,
                         out_ref):
    f32 = jnp.float32
    scale = 1.0 / (HEAD_DIM ** 0.5)

    h = x_ref[...].reshape(B * S, H)          # (B*S, H) flattened, VMEM-resident
    bias = bias_ref[...]                      # (B, 1, S) additive key mask

    # Static unroll over layers: all (tiny) layer weights stay VMEM-resident.
    # TODO(synk): at real BERT sizes stream weights per layer (grid axis /
    # emit_pipeline, bf16 operands) — all-layer f32 weights will not fit v7x VMEM.
    for li in range(NUM_LAYERS):
        # ---- fused QKV projection: ONE 2D matmul ----
        qkv = jnp.dot(h, wqkv_ref[li],
                      preferred_element_type=f32) + bqkv_ref[li]       # (B*S, 3H)
        q3 = qkv[:, 0 * H:1 * H].reshape(B, S, H)
        k3 = qkv[:, 1 * H:2 * H].reshape(B, S, H)
        v3 = qkv[:, 2 * H:3 * H].reshape(B, S, H)

        # ---- per-head attention (heads = lane slices; tiny static loop) ----
        ctx_heads = []
        for n in range(NUM_HEADS):
            sl = slice(n * HEAD_DIM, (n + 1) * HEAD_DIM)
            qh, kh, vh = q3[:, :, sl], k3[:, :, sl], v3[:, :, sl]        # (B, S, HD)
            scores = jnp.einsum('bqd,bkd->bqk', qh, kh,
                                preferred_element_type=f32) * scale + bias   # (B, S, S)
            m = jnp.max(scores, axis=-1, keepdims=True)
            p = jnp.exp(scores - m)
            p = p * pl.reciprocal(jnp.sum(p, axis=-1, keepdims=True), approx=True)
            ctx_heads.append(jnp.einsum('bqk,bkd->bqd', p, vh,
                                        preferred_element_type=f32))     # (B, S, HD)

        # concat head contexts on lanes -> (B*S, H), ONE output-projection matmul
        ctx = jnp.concatenate(ctx_heads, axis=-1).reshape(B * S, H)
        attn = jnp.dot(ctx, wo_ref[li],
                       preferred_element_type=f32) + bo_ref[li]          # (B*S, H)

        # ---- residual + layernorm 1 ----
        h1 = h + attn
        mu1 = jnp.mean(h1, axis=-1, keepdims=True)
        var1 = jnp.mean(jnp.square(h1 - mu1), axis=-1, keepdims=True)
        h1n = (h1 - mu1) * jax.lax.rsqrt(var1 + LN_EPS) * ln1g_ref[li] + ln1b_ref[li]

        # ---- feed-forward: two flat 2D matmuls ----
        ff = jnp.dot(h1n, w1_ref[li],
                     preferred_element_type=f32) + b1_ref[li]            # (B*S, FFN)
        # TODO(synk): HF BERT uses exact erf-GELU; jax.nn.gelu default is the tanh approximation.
        ff = jax.nn.gelu(ff)
        ff2 = jnp.dot(ff, w2_ref[li],
                      preferred_element_type=f32) + b2_ref[li]           # (B*S, H)

        # ---- residual + layernorm 2 ----
        h2 = h1n + ff2
        mu2 = jnp.mean(h2, axis=-1, keepdims=True)
        var2 = jnp.mean(jnp.square(h2 - mu2), axis=-1, keepdims=True)
        h = (h2 - mu2) * jax.lax.rsqrt(var2 + LN_EPS) * ln2g_ref[li] + ln2b_ref[li]

    # ---- classifier head on the CLS token (== narrow(1,0,1).squeeze(1)) ----
    pooled = h.reshape(B, S, H)[:, 0, :]                                 # (B, H)
    out_ref[...] = jnp.dot(pooled, wc_ref[...],
                           preferred_element_type=f32) + bc_ref[...]     # (B, 128)


# ---------------- wrapper ----------------
def _full_spec(a):
    nd = a.ndim
    return pl.BlockSpec(a.shape, lambda i, _nd=nd: (0,) * _nd)


def fused_forward(x, bias, packed):
    args = (x, bias) + tuple(packed)
    return pl.pallas_call(
        fused_forward_kernel,
        out_shape=jax.ShapeDtypeStruct((B, NC_PAD), jnp.float32),
        grid_spec=pltpu.PrefetchScalarGridSpec(
            num_scalar_prefetch=0,
            grid=(1,),                                  # whole batch in one grid step
            in_specs=[_full_spec(a) for a in args],
            out_specs=pl.BlockSpec((B, NC_PAD), lambda i: (0, 0)),
        ),
        # TODO(synk): at real sizes add a "parallel" batch/seq-tile axis (v7x megacore).
        compiler_params=pltpu.CompilerParams(dimension_semantics=("arbitrary",)),
    )(*args)


# ---------------- deterministic parameter construction ----------------
def init_params(key):
    def nrm(k, shape, scale=0.02):
        return (scale * jax.random.normal(k, shape)).astype(jnp.float32)

    keys = jax.random.split(key, 4 + NUM_LAYERS)
    tok_emb = nrm(keys[0], (VOCAB, H))
    pos_emb = nrm(keys[1], (S, H))
    wc = nrm(keys[2], (H, NUM_CLASSES))
    bc = jnp.zeros((1, NUM_CLASSES), jnp.float32)

    layers = []
    for li in range(NUM_LAYERS):
        lk = jax.random.split(keys[4 + li], 6)
        layers.append((
            nrm(lk[0], (H, H)), jnp.zeros((1, H), jnp.float32),   # wq, bq
            nrm(lk[1], (H, H)), jnp.zeros((1, H), jnp.float32),   # wk, bk
            nrm(lk[2], (H, H)), jnp.zeros((1, H), jnp.float32),   # wv, bv
            nrm(lk[3], (H, H)), jnp.zeros((1, H), jnp.float32),   # wo, bo
            jnp.ones((1, H), jnp.float32), jnp.zeros((1, H), jnp.float32),   # ln1
            nrm(lk[4], (H, FFN)), jnp.zeros((1, FFN), jnp.float32),          # w1, b1
            nrm(lk[5], (FFN, H)), jnp.zeros((1, H), jnp.float32),            # w2, b2
            jnp.ones((1, H), jnp.float32), jnp.zeros((1, H), jnp.float32),   # ln2
        ))
    return tok_emb, pos_emb, layers, wc, bc


def pack_params(layers, wc, bc):
    """Stack per-layer weights in the layout the fused kernel consumes.
    Runs ONCE on the host (hoisted out of the inference hot path).
    No batch replication: wqkv is (L,H,3H) [Q|K|V, heads contiguous inside each slab],
    wo is (L,H,H)."""
    wqkv_L, bqkv_L, wo_L, bo_L = [], [], [], []
    ln1g_L, ln1b_L, w1_L, b1_L, w2_L, b2_L, ln2g_L, ln2b_L = ([] for _ in range(8))

    for (wq, bq, wk, bk, wv, bv, wo, bo, ln1g, ln1b,
         w1, b1, w2, b2, ln2g, ln2b) in layers:
        wqkv_L.append(jnp.concatenate([wq, wk, wv], axis=1))   # (H, 3H)
        bqkv_L.append(jnp.concatenate([bq, bk, bv], axis=1))   # (1, 3H)
        wo_L.append(wo)                                        # (H, H)
        bo_L.append(bo)                                        # (1, H)
        ln1g_L.append(ln1g); ln1b_L.append(ln1b)
        w1_L.append(w1);     b1_L.append(b1)
        w2_L.append(w2);     b2_L.append(b2)
        ln2g_L.append(ln2g); ln2b_L.append(ln2b)

    wc_pad = jnp.zeros((H, NC_PAD), jnp.float32).at[:, :NUM_CLASSES].set(wc)
    bc_pad = jnp.zeros((1, NC_PAD), jnp.float32).at[0, :NUM_CLASSES].set(bc[0])

    return (jnp.stack(wqkv_L), jnp.stack(bqkv_L), jnp.stack(wo_L), jnp.stack(bo_L),
            jnp.stack(ln1g_L), jnp.stack(ln1b_L),
            jnp.stack(w1_L), jnp.stack(b1_L), jnp.stack(w2_L), jnp.stack(b2_L),
            jnp.stack(ln2g_L), jnp.stack(ln2b_L),
            wc_pad, bc_pad)


# ---------------- forward pass (mirrors the PyTorch module) ----------------
def forward(input_ids, attention_mask, tok_emb, pos_emb, packed):
    # embedding gather + mask preprocessing are cheap glue, done in plain XLA
    x = (jnp.take(tok_emb, input_ids, axis=0) + pos_emb[None]).astype(jnp.float32)  # (B, S, H)
    bias = ((1.0 - attention_mask.astype(jnp.float32)) * (-1e9))[:, None, :]        # (B, 1, S)

    # one fused kernel: encoder layers + dropout(eval=identity) + classifier on CLS
    out = fused_forward(x, bias, packed)      # (B, 128), lanes >= NUM_CLASSES carry zero weight
    return out[:, :NUM_CLASSES]               # (B, NUM_CLASSES)


if __name__ == "__main__":
    key = jax.random.PRNGKey(0)
    pkey, ikey, mkey = jax.random.split(key, 3)

    tok_emb, pos_emb, layers, wc, bc = init_params(pkey)
    packed = pack_params(layers, wc, bc)      # hoisted: packing happens once, off the hot path

    input_ids = jax.random.randint(ikey, (B, S), 0, VOCAB, dtype=jnp.int32)
    attention_mask = jnp.ones((B, S), dtype=jnp.int32).at[:, -2:].set(0)  # last 2 tokens padded

    logits = jax.jit(forward)(input_ids, attention_mask, tok_emb, pos_emb, packed)
    jax.block_until_ready(logits)

    assert logits.shape == (B, NUM_CLASSES), logits.shape
    assert logits.dtype == jnp.float32
    assert bool(jnp.all(jnp.isfinite(logits)))
    print("KERNEL_OK")
</pallas_src>

<mosaic_0001>
module attributes {stable_mosaic.version = 11 : i64} {
  func.func @fused_forward_kernel(%arg0: i32, %arg1: memref<2x8x32xf32, #tpu.memory_space<vmem>>, %arg2: memref<2x1x8xf32, #tpu.memory_space<vmem>>, %arg3: memref<2x32x96xf32, #tpu.memory_space<vmem>>, %arg4: memref<2x1x96xf32, #tpu.memory_space<vmem>>, %arg5: memref<2x32x32xf32, #tpu.memory_space<vmem>>, %arg6: memref<2x1x32xf32, #tpu.memory_space<vmem>>, %arg7: memref<2x1x32xf32, #tpu.memory_space<vmem>>, %arg8: memref<2x1x32xf32, #tpu.memory_space<vmem>>, %arg9: memref<2x32x64xf32, #tpu.memory_space<vmem>>, %arg10: memref<2x1x64xf32, #tpu.memory_space<vmem>>, %arg11: memref<2x64x32xf32, #tpu.memory_space<vmem>>, %arg12: memref<2x1x32xf32, #tpu.memory_space<vmem>>, %arg13: memref<2x1x32xf32, #tpu.memory_space<vmem>>, %arg14: memref<2x1x32xf32, #tpu.memory_space<vmem>>, %arg15: memref<32x128xf32, #tpu.memory_space<vmem>>, %arg16: memref<1x128xf32, #tpu.memory_space<vmem>>, %arg17: memref<2x128xf32, #tpu.memory_space<vmem>>) attributes {dimension_semantics = [#tpu.dimension_semantics<arbitrary>], iteration_bounds = array<i64: 1>, scalar_prefetch = 0 : i64, scratch_operands = 0 : i64, tpu.core_type = #tpu.core_type<tc>, window_params = [{pipeline_mode = #tpu.pipeline_mode<synchronous>, transform_indices = @transform_0, window_bounds = array<i64: 2, 8, 32>}, {pipeline_mode = #tpu.pipeline_mode<synchronous>, transform_indices = @transform_1, window_bounds = array<i64: 2, 1, 8>}, {pipeline_mode = #tpu.pipeline_mode<synchronous>, transform_indices = @transform_2, window_bounds = array<i64: 2, 32, 96>}, {pipeline_mode = #tpu.pipeline_mode<synchronous>, transform_indices = @transform_3, window_bounds = array<i64: 2, 1, 96>}, {pipeline_mode = #tpu.pipeline_mode<synchronous>, transform_indices = @transform_4, window_bounds = array<i64: 2, 32, 32>}, {pipeline_mode = #tpu.pipeline_mode<synchronous>, transform_indices = @transform_5, window_bounds = array<i64: 2, 1, 32>}, {pipeline_mode = #tpu.pipeline_mode<synchronous>, transform_indices = @transform_6, window_bounds = array<i64: 2, 1, 32>}, {pipeline_mode = #tpu.pipeline_mode<synchronous>, transform_indices = @transform_7, window_bounds = array<i64: 2, 1, 32>}, {pipeline_mode = #tpu.pipeline_mode<synchronous>, transform_indices = @transform_8, window_bounds = array<i64: 2, 32, 64>}, {pipeline_mode = #tpu.pipeline_mode<synchronous>, transform_indices = @transform_9, window_bounds = array<i64: 2, 1, 64>}, {pipeline_mode = #tpu.pipeline_mode<synchronous>, transform_indices = @transform_10, window_bounds = array<i64: 2, 64, 32>}, {pipeline_mode = #tpu.pipeline_mode<synchronous>, transform_indices = @transform_11, window_bounds = array<i64: 2, 1, 32>}, {pipeline_mode = #tpu.pipeline_mode<synchronous>, transform_indices = @transform_12, window_bounds = array<i64: 2, 1, 32>}, {pipeline_mode = #tpu.pipeline_mode<synchronous>, transform_indices = @transform_13, window_bounds = array<i64: 2, 1, 32>}, {pipeline_mode = #tpu.pipeline_mode<synchronous>, transform_indices = @transform_14, window_bounds = array<i64: 32, 128>}, {pipeline_mode = #tpu.pipeline_mode<synchronous>, transform_indices = @transform_15, window_bounds = array<i64: 1, 128>}, {pipeline_mode = #tpu.pipeline_mode<synchronous>, transform_indices = @transform_16, window_bounds = array<i64: 2, 128>}]} {
    %c0 = arith.constant 0 : index
    %c0_0 = arith.constant 0 : index
    %c0_1 = arith.constant 0 : index
    %0 = vector.load %arg1[%c0, %c0_0, %c0_1] : memref<2x8x32xf32, #tpu.memory_space<vmem>>, vector<2x8x32xf32>
    %1 = vector.shape_cast %0 : vector<2x8x32xf32> to vector<16x32xf32>
    %c0_2 = arith.constant 0 : index
    %c0_3 = arith.constant 0 : index
    %c0_4 = arith.constant 0 : index
    %2 = vector.load %arg2[%c0_2, %c0_3, %c0_4] : memref<2x1x8xf32, #tpu.memory_space<vmem>>, vector<2x1x8xf32>
    %c0_5 = arith.constant 0 : index
    %c0_6 = arith.constant 0 : index
    %c0_7 = arith.constant 0 : index
    %3 = vector.load %arg3[%c0_5, %c0_6, %c0_7] : memref<2x32x96xf32, #tpu.memory_space<vmem>>, vector<1x32x96xf32>
    %4 = vector.shape_cast %3 : vector<1x32x96xf32> to vector<32x96xf32>
    %cst = arith.constant dense<0.000000e+00> : vector<16x96xf32>
    %5 = tpu.matmul %1, %4, %cst {dimension_numbers = #tpu.dot_dimension_numbers<[1], [0], [0], [1], [0, 0, 1, 1], [], []>} : vector<16x32xf32>, vector<32x96xf32>, vector<16x96xf32> -> vector<16x96xf32>
    %c0_8 = arith.constant 0 : index
    %c0_9 = arith.constant 0 : index
    %c0_10 = arith.constant 0 : index
    %6 = vector.load %arg4[%c0_8, %c0_9, %c0_10] : memref<2x1x96xf32, #tpu.memory_space<vmem>>, vector<1x1x96xf32>
    %7 = vector.shape_cast %6 : vector<1x1x96xf32> to vector<1x96xf32>
    %8 = vector.broadcast %7 : vector<1x96xf32> to vector<16x96xf32>
    %9 = arith.addf %5, %8 : vector<16x96xf32>
    %10 = vector.extract_strided_slice %9 {offsets = [0, 0], sizes = [16, 32], strides = [1, 1]} : vector<16x96xf32> to vector<16x32xf32>
    %11 = vector.shape_cast %10 : vector<16x32xf32> to vector<2x8x32xf32>
    %12 = vector.extract_strided_slice %9 {offsets = [0, 32], sizes = [16, 32], strides = [1, 1]} : vector<16x96xf32> to vector<16x32xf32>
    %13 = vector.shape_cast %12 : vector<16x32xf32> to vector<2x8x32xf32>
    %14 = vector.extract_strided_slice %9 {offsets = [0, 64], sizes = [16, 32], strides = [1, 1]} : vector<16x96xf32> to vector<16x32xf32>
    %15 = vector.shape_cast %14 : vector<16x32xf32> to vector<2x8x32xf32>
    %16 = vector.extract_strided_slice %11 {offsets = [0, 0, 0], sizes = [2, 8, 16], strides = [1, 1, 1]} : vector<2x8x32xf32> to vector<2x8x16xf32>
    %17 = vector.extract_strided_slice %13 {offsets = [0, 0, 0], sizes = [2, 8, 16], strides = [1, 1, 1]} : vector<2x8x32xf32> to vector<2x8x16xf32>
    %18 = vector.extract_strided_slice %15 {offsets = [0, 0, 0], sizes = [2, 8, 16], strides = [1, 1, 1]} : vector<2x8x32xf32> to vector<2x8x16xf32>
    "tpu.trace_start"() <{level = 10 : i32, message = "bqd,bkd->bqk"}> : () -> ()
    %cst_11 = arith.constant dense<0.000000e+00> : vector<2x8x8xf32>
    %19 = tpu.matmul %16, %17, %cst_11 {dimension_numbers = #tpu.dot_dimension_numbers<[2], [2], [1], [1], [0, 0, 0, 1, 1, 1], [0], [0]>} : vector<2x8x16xf32>, vector<2x8x16xf32>, vector<2x8x8xf32> -> vector<2x8x8xf32>
    "tpu.trace_stop"() : () -> ()
    %cst_12 = arith.constant 2.500000e-01 : f32
    %20 = vector.broadcast %cst_12 : f32 to vector<2x8x8xf32>
    %21 = arith.mulf %19, %20 : vector<2x8x8xf32>
    %22 = vector.broadcast %2 : vector<2x1x8xf32> to vector<2x8x8xf32>
    %23 = arith.addf %21, %22 : vector<2x8x8xf32>
    %cst_13 = arith.constant dense<0xFF800000> : vector<2x8xf32>
    %24 = vector.multi_reduction <maximumf>, %23, %cst_13 [2] : vector<2x8x8xf32> to vector<2x8xf32>
    %25 = vector.shape_cast %24 : vector<2x8xf32> to vector<2x8x1xf32>
    %26 = vector.broadcast %25 : vector<2x8x1xf32> to vector<2x8x8xf32>
    %27 = arith.subf %23, %26 : vector<2x8x8xf32>
    %28 = math.exp %27 : vector<2x8x8xf32>
    %cst_14 = arith.constant dense<0.000000e+00> : vector<2x8xf32>
    %29 = vector.multi_reduction <add>, %28, %cst_14 [2] : vector<2x8x8xf32> to vector<2x8xf32>
    %30 = vector.shape_cast %29 : vector<2x8xf32> to vector<2x8x1xf32>
    %31 = tpu.reciprocal %30 {approx = true} : vector<2x8x1xf32> -> vector<2x8x1xf32>
    %32 = vector.broadcast %31 : vector<2x8x1xf32> to vector<2x8x8xf32>
    %33 = arith.mulf %28, %32 : vector<2x8x8xf32>
    "tpu.trace_start"() <{level = 10 : i32, message = "bqk,bkd->bqd"}> : () -> ()
    %cst_15 = arith.constant dense<0.000000e+00> : vector<2x8x16xf32>
    %34 = tpu.matmul %33, %18, %cst_15 {dimension_numbers = #tpu.dot_dimension_numbers<[2], [1], [1], [2], [0, 0, 0, 1, 1, 2], [0], [0]>} : vector<2x8x8xf32>, vector<2x8x16xf32>, vector<2x8x16xf32> -> vector<2x8x16xf32>
    "tpu.trace_stop"() : () -> ()
    %35 = vector.extract_strided_slice %11 {offsets = [0, 0, 16], sizes = [2, 8, 16], strides = [1, 1, 1]} : vector<2x8x32xf32> to vector<2x8x16xf32>
    %36 = vector.extract_strided_slice %13 {offsets = [0, 0, 16], sizes = [2, 8, 16], strides = [1, 1, 1]} : vector<2x8x32xf32> to vector<2x8x16xf32>
    %37 = vector.extract_strided_slice %15 {offsets = [0, 0, 16], sizes = [2, 8, 16], strides = [1, 1, 1]} : vector<2x8x32xf32> to vector<2x8x16xf32>
    "tpu.trace_start"() <{level = 10 : i32, message = "bqd,bkd->bqk"}> : () -> ()
    %cst_16 = arith.constant dense<0.000000e+00> : vector<2x8x8xf32>
    %38 = tpu.matmul %35, %36, %cst_16 {dimension_numbers = #tpu.dot_dimension_numbers<[2], [2], [1], [1], [0, 0, 0, 1, 1, 1], [0], [0]>} : vector<2x8x16xf32>, vector<2x8x16xf32>, vector<2x8x8xf32> -> vector<2x8x8xf32>
    "tpu.trace_stop"() : () -> ()
    %cst_17 = arith.constant 2.500000e-01 : f32
    %39 = vector.broadcast %cst_17 : f32 to vector<2x8x8xf32>
    %40 = arith.mulf %38, %39 : vector<2x8x8xf32>
    %41 = vector.broadcast %2 : vector<2x1x8xf32> to vector<2x8x8xf32>
    %42 = arith.addf %40, %41 : vector<2x8x8xf32>
    %cst_18 = arith.constant dense<0xFF800000> : vector<2x8xf32>
    %43 = vector.multi_reduction <maximumf>, %42, %cst_18 [2] : vector<2x8x8xf32> to vector<2x8xf32>
    %44 = vector.shape_cast %43 : vector<2x8xf32> to vector<2x8x1xf32>
    %45 = vector.broadcast %44 : vector<2x8x1xf32> to vector<2x8x8xf32>
    %46 = arith.subf %42, %45 : vector<2x8x8xf32>
    %47 = math.exp %46 : vector<2x8x8xf32>
    %cst_19 = arith.constant dense<0.000000e+00> : vector<2x8xf32>
    %48 = vector.multi_reduction <add>, %47, %cst_19 [2] : vector<2x8x8xf32> to vector<2x8xf32>
    %49 = vector.shape_cast %48 : vector<2x8xf32> to vector<2x8x1xf32>
    %50 = tpu.reciprocal %49 {approx = true} : vector<2x8x1xf32> -> vector<2x8x1xf32>
    %51 = vector.broadcast %50 : vector<2x8x1xf32> to vector<2x8x8xf32>
    %52 = arith.mulf %47, %51 : vector<2x8x8xf32>
    "tpu.trace_start"() <{level = 10 : i32, message = "bqk,bkd->bqd"}> : () -> ()
    %cst_20 = arith.constant dense<0.000000e+00> : vector<2x8x16xf32>
    %53 = tpu.matmul %52, %37, %cst_20 {dimension_numbers = #tpu.dot_dimension_numbers<[2], [1], [1], [2], [0, 0, 0, 1, 1, 2], [0], [0]>} : vector<2x8x8xf32>, vector<2x8x16xf32>, vector<2x8x16xf32> -> vector<2x8x16xf32>
    "tpu.trace_stop"() : () -> ()
    %54 = tpu.concatenate %34, %53 in 2 : vector<2x8x16xf32>, vector<2x8x16xf32> -> vector<2x8x32xf32>
    %55 = vector.shape_cast %54 : vector<2x8x32xf32> to vector<16x32xf32>
    %c0_21 = arith.constant 0 : index
    %c0_22 = arith.constant 0 : index
    %c0_23 = arith.constant 0 : index
    %56 = vector.load %arg5[%c0_21, %c0_22, %c0_23] : memref<2x32x32xf32, #tpu.memory_space<vmem>>, vector<1x32x32xf32>
    %57 = vector.shape_cast %56 : vector<1x32x32xf32> to vector<32x32xf32>
    %cst_24 = arith.constant dense<0.000000e+00> : vector<16x32xf32>
    %58 = tpu.matmul %55, %57, %cst_24 {dimension_numbers = #tpu.dot_dimension_numbers<[1], [0], [0], [1], [0, 0, 1, 1], [], []>} : vector<16x32xf32>, vector<32x32xf32>, vector<16x32xf32> -> vector<16x32xf32>
    %c0_25 = arith.constant 0 : index
    %c0_26 = arith.constant 0 : index
    %c0_27 = arith.constant 0 : index
    %59 = vector.load %arg6[%c0_25, %c0_26, %c0_27] : memref<2x1x32xf32, #tpu.memory_space<vmem>>, vector<1x1x32xf32>
    %60 = vector.shape_cast %59 : vector<1x1x32xf32> to vector<1x32xf32>
    %61 = vector.broadcast %60 : vector<1x32xf32> to vector<16x32xf32>
    %62 = arith.addf %58, %61 : vector<16x32xf32>
    %63 = arith.addf %1, %62 : vector<16x32xf32>
    %cst_28 = arith.constant dense<0.000000e+00> : vector<16xf32>
    %64 = vector.multi_reduction <add>, %63, %cst_28 [1] : vector<16x32xf32> to vector<16xf32>
    %65 = vector.shape_cast %64 : vector<16xf32> to vector<16x1xf32>
    %cst_29 = arith.constant 3.200000e+01 : f32
    %66 = vector.broadcast %cst_29 : f32 to vector<16x1xf32>
    %67 = arith.divf %65, %66 : vector<16x1xf32>
    %68 = vector.broadcast %67 : vector<16x1xf32> to vector<16x32xf32>
    %69 = arith.subf %63, %68 : vector<16x32xf32>
    %70 = arith.mulf %69, %69 : vector<16x32xf32>
    %cst_30 = arith.constant dense<0.000000e+00> : vector<16xf32>
    %71 = vector.multi_reduction <add>, %70, %cst_30 [1] : vector<16x32xf32> to vector<16xf32>
    %72 = vector.shape_cast %71 : vector<16xf32> to vector<16x1xf32>
    %cst_31 = arith.constant 3.200000e+01 : f32
    %73 = vector.broadcast %cst_31 : f32 to vector<16x1xf32>
    %74 = arith.divf %72, %73 : vector<16x1xf32>
    %75 = vector.broadcast %67 : vector<16x1xf32> to vector<16x32xf32>
    %76 = arith.subf %63, %75 : vector<16x32xf32>
    %cst_32 = arith.constant 9.99999996E-13 : f32
    %77 = vector.broadcast %cst_32 : f32 to vector<16x1xf32>
    %78 = arith.addf %74, %77 : vector<16x1xf32>
    %79 = math.rsqrt %78 : vector<16x1xf32>
    %80 = vector.broadcast %79 : vector<16x1xf32> to vector<16x32xf32>
    %81 = arith.mulf %76, %80 : vector<16x32xf32>
    %c0_33 = arith.constant 0 : index
    %c0_34 = arith.constant 0 : index
    %c0_35 = arith.constant 0 : index
    %82 = vector.load %arg7[%c0_33, %c0_34, %c0_35] : memref<2x1x32xf32, #tpu.memory_space<vmem>>, vector<1x1x32xf32>
    %83 = vector.shape_cast %82 : vector<1x1x32xf32> to vector<1x32xf32>
    %84 = vector.broadcast %83 : vector<1x32xf32> to vector<16x32xf32>
    %85 = arith.mulf %81, %84 : vector<16x32xf32>
    %c0_36 = arith.constant 0 : index
    %c0_37 = arith.constant 0 : index
    %c0_38 = arith.constant 0 : index
    %86 = vector.load %arg8[%c0_36, %c0_37, %c0_38] : memref<2x1x32xf32, #tpu.memory_space<vmem>>, vector<1x1x32xf32>
    %87 = vector.shape_cast %86 : vector<1x1x32xf32> to vector<1x32xf32>
    %88 = vector.broadcast %87 : vector<1x32xf32> to vector<16x32xf32>
    %89 = arith.addf %85, %88 : vector<16x32xf32>
    %c0_39 = arith.constant 0 : index
    %c0_40 = arith.constant 0 : index
    %c0_41 = arith.constant 0 : index
    %90 = vector.load %arg9[%c0_39, %c0_40, %c0_41] : memref<2x32x64xf32, #tpu.memory_space<vmem>>, vector<1x32x64xf32>
    %91 = vector.shape_cast %90 : vector<1x32x64xf32> to vector<32x64xf32>
    %cst_42 = arith.constant dense<0.000000e+00> : vector<16x64xf32>
    %92 = tpu.matmul %89, %91, %cst_42 {dimension_numbers = #tpu.dot_dimension_numbers<[1], [0], [0], [1], [0, 0, 1, 1], [], []>} : vector<16x32xf32>, vector<32x64xf32>, vector<16x64xf32> -> vector<16x64xf32>
    %c0_43 = arith.constant 0 : index
    %c0_44 = arith.constant 0 : index
    %c0_45 = arith.constant 0 : index
    %93 = vector.load %arg10[%c0_43, %c0_44, %c0_45] : memref<2x1x64xf32, #tpu.memory_space<vmem>>, vector<1x1x64xf32>
    %94 = vector.shape_cast %93 : vector<1x1x64xf32> to vector<1x64xf32>
    %95 = vector.broadcast %94 : vector<1x64xf32> to vector<16x64xf32>
    %96 = arith.addf %92, %95 : vector<16x64xf32>
    %97 = arith.mulf %96, %96 : vector<16x64xf32>
    %98 = arith.mulf %96, %97 : vector<16x64xf32>
    %cst_46 = arith.constant 4.471500e-02 : f32
    %99 = vector.broadcast %cst_46 : f32 to vector<16x64xf32>
    %100 = arith.mulf %99, %98 : vector<16x64xf32>
    %101 = arith.addf %96, %100 : vector<16x64xf32>
    %cst_47 = arith.constant 0.797884583 : f32
    %102 = vector.broadcast %cst_47 : f32 to vector<16x64xf32>
    %103 = arith.mulf %102, %101 : vector<16x64xf32>
    %104 = math.tanh %103 : vector<16x64xf32>
    %cst_48 = arith.constant 1.000000e+00 : f32
    %105 = vector.broadcast %cst_48 : f32 to vector<16x64xf32>
    %106 = arith.addf %105, %104 : vector<16x64xf32>
    %cst_49 = arith.constant 5.000000e-01 : f32
    %107 = vector.broadcast %cst_49 : f32 to vector<16x64xf32>
    %108 = arith.mulf %107, %106 : vector<16x64xf32>
    %109 = arith.mulf %96, %108 : vector<16x64xf32>
    %c0_50 = arith.constant 0 : index
    %c0_51 = arith.constant 0 : index
    %c0_52 = arith.constant 0 : index
    %110 = vector.load %arg11[%c0_50, %c0_51, %c0_52] : memref<2x64x32xf32, #tpu.memory_space<vmem>>, vector<1x64x32xf32>
    %111 = vector.shape_cast %110 : vector<1x64x32xf32> to vector<64x32xf32>
    %cst_53 = arith.constant dense<0.000000e+00> : vector<16x32xf32>
    %112 = tpu.matmul %109, %111, %cst_53 {dimension_numbers = #tpu.dot_dimension_numbers<[1], [0], [0], [1], [0, 0, 1, 1], [], []>} : vector<16x64xf32>, vector<64x32xf32>, vector<16x32xf32> -> vector<16x32xf32>
    %c0_54 = arith.constant 0 : index
    %c0_55 = arith.constant 0 : index
    %c0_56 = arith.constant 0 : index
    %113 = vector.load %arg12[%c0_54, %c0_55, %c0_56] : memref<2x1x32xf32, #tpu.memory_space<vmem>>, vector<1x1x32xf32>
    %114 = vector.shape_cast %113 : vector<1x1x32xf32> to vector<1x32xf32>
    %115 = vector.broadcast %114 : vector<1x32xf32> to vector<16x32xf32>
    %116 = arith.addf %112, %115 : vector<16x32xf32>
    %117 = arith.addf %89, %116 : vector<16x32xf32>
    %cst_57 = arith.constant dense<0.000000e+00> : vector<16xf32>
    %118 = vector.multi_reduction <add>, %117, %cst_57 [1] : vector<16x32xf32> to vector<16xf32>
    %119 = vector.shape_cast %118 : vector<16xf32> to vector<16x1xf32>
    %cst_58 = arith.constant 3.200000e+01 : f32
    %120 = vector.broadcast %cst_58 : f32 to vector<16x1xf32>
    %121 = arith.divf %119, %120 : vector<16x1xf32>
    %122 = vector.broadcast %121 : vector<16x1xf32> to vector<16x32xf32>
    %123 = arith.subf %117, %122 : vector<16x32xf32>
    %124 = arith.mulf %123, %123 : vector<16x32xf32>
    %cst_59 = arith.constant dense<0.000000e+00> : vector<16xf32>
    %125 = vector.multi_reduction <add>, %124, %cst_59 [1] : vector<16x32xf32> to vector<16xf32>
    %126 = vector.shape_cast %125 : vector<16xf32> to vector<16x1xf32>
    %cst_60 = arith.constant 3.200000e+01 : f32
    %127 = vector.broadcast %cst_60 : f32 to vector<16x1xf32>
    %128 = arith.divf %126, %127 : vector<16x1xf32>
    %129 = vector.broadcast %121 : vector<16x1xf32> to vector<16x32xf32>
    %130 = arith.subf %117, %129 : vector<16x32xf32>
    %cst_61 = arith.constant 9.99999996E-13 : f32
    %131 = vector.broadcast %cst_61 : f32 to vector<16x1xf32>
    %132 = arith.addf %128, %131 : vector<16x1xf32>
    %133 = math.rsqrt %132 : vector<16x1xf32>
    %134 = vector.broadcast %133 : vector<16x1xf32> to vector<16x32xf32>
    %135 = arith.mulf %130, %134 : vector<16x32xf32>
    %c0_62 = arith.constant 0 : index
    %c0_63 = arith.constant 0 : index
    %c0_64 = arith.constant 0 : index
    %136 = vector.load %arg13[%c0_62, %c0_63, %c0_64] : memref<2x1x32xf32, #tpu.memory_space<vmem>>, vector<1x1x32xf32>
    %137 = vector.shape_cast %136 : vector<1x1x32xf32> to vector<1x32xf32>
    %138 = vector.broadcast %137 : vector<1x32xf32> to vector<16x32xf32>
    %139 = arith.mulf %135, %138 : vector<16x32xf32>
    %c0_65 = arith.constant 0 : index
    %c0_66 = arith.constant 0 : index
    %c0_67 = arith.constant 0 : index
    %140 = vector.load %arg14[%c0_65, %c0_66, %c0_67] : memref<2x1x32xf32, #tpu.memory_space<vmem>>, vector<1x1x32xf32>
    %141 = vector.shape_cast %140 : vector<1x1x32xf32> to vector<1x32xf32>
    %142 = vector.broadcast %141 : vector<1x32xf32> to vector<16x32xf32>
    %143 = arith.addf %139, %142 : vector<16x32xf32>
    %c1 = arith.constant 1 : index
    %c0_68 = arith.constant 0 : index
    %c0_69 = arith.constant 0 : index
    %144 = vector.load %arg3[%c1, %c0_68, %c0_69] : memref<2x32x96xf32, #tpu.memory_space<vmem>>, vector<1x32x96xf32>
    %145 = vector.shape_cast %144 : vector<1x32x96xf32> to vector<32x96xf32>
    %cst_70 = arith.constant dense<0.000000e+00> : vector<16x96xf32>
    %146 = tpu.matmul %143, %145, %cst_70 {dimension_numbers = #tpu.dot_dimension_numbers<[1], [0], [0], [1], [0, 0, 1, 1], [], []>} : vector<16x32xf32>, vector<32x96xf32>, vector<16x96xf32> -> vector<16x96xf32>
    %c1_71 = arith.constant 1 : index
    %c0_72 = arith.constant 0 : index
    %c0_73 = arith.constant 0 : index
    %147 = vector.load %arg4[%c1_71, %c0_72, %c0_73] : memref<2x1x96xf32, #tpu.memory_space<vmem>>, vector<1x1x96xf32>
    %148 = vector.shape_cast %147 : vector<1x1x96xf32> to vector<1x96xf32>
    %149 = vector.broadcast %148 : vector<1x96xf32> to vector<16x96xf32>
    %150 = arith.addf %146, %149 : vector<16x96xf32>
    %151 = vector.extract_strided_slice %150 {offsets = [0, 0], sizes = [16, 32], strides = [1, 1]} : vector<16x96xf32> to vector<16x32xf32>
    %152 = vector.shape_cast %151 : vector<16x32xf32> to vector<2x8x32xf32>
    %153 = vector.extract_strided_slice %150 {offsets = [0, 32], sizes = [16, 32], strides = [1, 1]} : vector<16x96xf32> to vector<16x32xf32>
    %154 = vector.shape_cast %153 : vector<16x32xf32> to vector<2x8x32xf32>
    %155 = vector.extract_strided_slice %150 {offsets = [0, 64], sizes = [16, 32], strides = [1, 1]} : vector<16x96xf32> to vector<16x32xf32>
    %156 = vector.shape_cast %155 : vector<16x32xf32> to vector<2x8x32xf32>
    %157 = vector.extract_strided_slice %152 {offsets = [0, 0, 0], sizes = [2, 8, 16], strides = [1, 1, 1]} : vector<2x8x32xf32> to vector<2x8x16xf32>
    %158 = vector.extract_strided_slice %154 {offsets = [0, 0, 0], sizes = [2, 8, 16], strides = [1, 1, 1]} : vector<2x8x32xf32> to vector<2x8x16xf32>
    %159 = vector.extract_strided_slice %156 {offsets = [0, 0, 0], sizes = [2, 8, 16], strides = [1, 1, 1]} : vector<2x8x32xf32> to vector<2x8x16xf32>
    "tpu.trace_start"() <{level = 10 : i32, message = "bqd,bkd->bqk"}> : () -> ()
    %cst_74 = arith.constant dense<0.000000e+00> : vector<2x8x8xf32>
    %160 = tpu.matmul %157, %158, %cst_74 {dimension_numbers = #tpu.dot_dimension_numbers<[2], [2], [1], [1], [0, 0, 0, 1, 1, 1], [0], [0]>} : vector<2x8x16xf32>, vector<2x8x16xf32>, vector<2x8x8xf32> -> vector<2x8x8xf32>
    "tpu.trace_stop"() : () -> ()
    %cst_75 = arith.constant 2.500000e-01 : f32
    %161 = vector.broadcast %cst_75 : f32 to vector<2x8x8xf32>
    %162 = arith.mulf %160, %161 : vector<2x8x8xf32>
    %163 = vector.broadcast %2 : vector<2x1x8xf32> to vector<2x8x8xf32>
    %164 = arith.addf %162, %163 : vector<2x8x8xf32>
    %cst_76 = arith.constant dense<0xFF800000> : vector<2x8xf32>
    %165 = vector.multi_reduction <maximumf>, %164, %cst_76 [2] : vector<2x8x8xf32> to vector<2x8xf32>
    %166 = vector.shape_cast %165 : vector<2x8xf32> to vector<2x8x1xf32>
    %167 = vector.broadcast %166 : vector<2x8x1xf32> to vector<2x8x8xf32>
    %168 = arith.subf %164, %167 : vector<2x8x8xf32>
    %169 = math.exp %168 : vector<2x8x8xf32>
    %cst_77 = arith.constant dense<0.000000e+00> : vector<2x8xf32>
    %170 = vector.multi_reduction <add>, %169, %cst_77 [2] : vector<2x8x8xf32> to vector<2x8xf32>
    %171 = vector.shape_cast %170 : vector<2x8xf32> to vector<2x8x1xf32>
    %172 = tpu.reciprocal %171 {approx = true} : vector<2x8x1xf32> -> vector<2x8x1xf32>
    %173 = vector.broadcast %172 : vector<2x8x1xf32> to vector<2x8x8xf32>
    %174 = arith.mulf %169, %173 : vector<2x8x8xf32>
    "tpu.trace_start"() <{level = 10 : i32, message = "bqk,bkd->bqd"}> : () -> ()
    %cst_78 = arith.constant dense<0.000000e+00> : vector<2x8x16xf32>
    %175 = tpu.matmul %174, %159, %cst_78 {dimension_numbers = #tpu.dot_dimension_numbers<[2], [1], [1], [2], [0, 0, 0, 1, 1, 2], [0], [0]>} : vector<2x8x8xf32>, vector<2x8x16xf32>, vector<2x8x16xf32> -> vector<2x8x16xf32>
    "tpu.trace_stop"() : () -> ()
    %176 = vector.extract_strided_slice %152 {offsets = [0, 0, 16], sizes = [2, 8, 16], strides = [1, 1, 1]} : vector<2x8x32xf32> to vector<2x8x16xf32>
    %177 = vector.extract_strided_slice %154 {offsets = [0, 0, 16], sizes = [2, 8, 16], strides = [1, 1, 1]} : vector<2x8x32xf32> to vector<2x8x16xf32>
    %178 = vector.extract_strided_slice %156 {offsets = [0, 0, 16], sizes = [2, 8, 16], strides = [1, 1, 1]} : vector<2x8x32xf32> to vector<2x8x16xf32>
    "tpu.trace_start"() <{level = 10 : i32, message = "bqd,bkd->bqk"}> : () -> ()
    %cst_79 = arith.constant dense<0.000000e+00> : vector<2x8x8xf32>
    %179 = tpu.matmul %176, %177, %cst_79 {dimension_numbers = #tpu.dot_dimension_numbers<[2], [2], [1], [1], [0, 0, 0, 1, 1, 1], [0], [0]>} : vector<2x8x16xf32>, vector<2x8x16xf32>, vector<2x8x8xf32> -> vector<2x8x8xf32>
    "tpu.trace_stop"() : () -> ()
    %cst_80 = arith.constant 2.500000e-01 : f32
    %180 = vector.broadcast %cst_80 : f32 to vector<2x8x8xf32>
    %181 = arith.mulf %179, %180 : vector<2x8x8xf32>
    %182 = vector.broadcast %2 : vector<2x1x8xf32> to vector<2x8x8xf32>
    %183 = arith.addf %181, %182 : vector<2x8x8xf32>
    %cst_81 = arith.constant dense<0xFF800000> : vector<2x8xf32>
    %184 = vector.multi_reduction <maximumf>, %183, %cst_81 [2] : vector<2x8x8xf32> to vector<2x8xf32>
    %185 = vector.shape_cast %184 : vector<2x8xf32> to vector<2x8x1xf32>
    %186 = vector.broadcast %185 : vector<2x8x1xf32> to vector<2x8x8xf32>
    %187 = arith.subf %183, %186 : vector<2x8x8xf32>
    %188 = math.exp %187 : vector<2x8x8xf32>
    %cst_82 = arith.constant dense<0.000000e+00> : vector<2x8xf32>
    %189 = vector.multi_reduction <add>, %188, %cst_82 [2] : vector<2x8x8xf32> to vector<2x8xf32>
    %190 = vector.shape_cast %189 : vector<2x8xf32> to vector<2x8x1xf32>
    %191 = tpu.reciprocal %190 {approx = true} : vector<2x8x1xf32> -> vector<2x8x1xf32>
    %192 = vector.broadcast %191 : vector<2x8x1xf32> to vector<2x8x8xf32>
    %193 = arith.mulf %188, %192 : vector<2x8x8xf32>
    "tpu.trace_start"() <{level = 10 : i32, message = "bqk,bkd->bqd"}> : () -> ()
    %cst_83 = arith.constant dense<0.000000e+00> : vector<2x8x16xf32>
    %194 = tpu.matmul %193, %178, %cst_83 {dimension_numbers = #tpu.dot_dimension_numbers<[2], [1], [1], [2], [0, 0, 0, 1, 1, 2], [0], [0]>} : vector<2x8x8xf32>, vector<2x8x16xf32>, vector<2x8x16xf32> -> vector<2x8x16xf32>
    "tpu.trace_stop"() : () -> ()
    %195 = tpu.concatenate %175, %194 in 2 : vector<2x8x16xf32>, vector<2x8x16xf32> -> vector<2x8x32xf32>
    %196 = vector.shape_cast %195 : vector<2x8x32xf32> to vector<16x32xf32>
    %c1_84 = arith.constant 1 : index
    %c0_85 = arith.constant 0 : index
    %c0_86 = arith.constant 0 : index
    %197 = vector.load %arg5[%c1_84, %c0_85, %c0_86] : memref<2x32x32xf32, #tpu.memory_space<vmem>>, vector<1x32x32xf32>
    %198 = vector.shape_cast %197 : vector<1x32x32xf32> to vector<32x32xf32>
    %cst_87 = arith.constant dense<0.000000e+00> : vector<16x32xf32>
    %199 = tpu.matmul %196, %198, %cst_87 {dimension_numbers = #tpu.dot_dimension_numbers<[1], [0], [0], [1], [0, 0, 1, 1], [], []>} : vector<16x32xf32>, vector<32x32xf32>, vector<16x32xf32> -> vector<16x32xf32>
    %c1_88 = arith.constant 1 : index
    %c0_89 = arith.constant 0 : index
    %c0_90 = arith.constant 0 : index
    %200 = vector.load %arg6[%c1_88, %c0_89, %c0_90] : memref<2x1x32xf32, #tpu.memory_space<vmem>>, vector<1x1x32xf32>
    %201 = vector.shape_cast %200 : vector<1x1x32xf32> to vector<1x32xf32>
    %202 = vector.broadcast %201 : vector<1x32xf32> to vector<16x32xf32>
    %203 = arith.addf %199, %202 : vector<16x32xf32>
    %204 = arith.addf %143, %203 : vector<16x32xf32>
    %cst_91 = arith.constant dense<0.000000e+00> : vector<16xf32>
    %205 = vector.multi_reduction <add>, %204, %cst_91 [1] : vector<16x32xf32> to vector<16xf32>
    %206 = vector.shape_cast %205 : vector<16xf32> to vector<16x1xf32>
    %cst_92 = arith.constant 3.200000e+01 : f32
    %207 = vector.broadcast %cst_92 : f32 to vector<16x1xf32>
    %208 = arith.divf %206, %207 : vector<16x1xf32>
    %209 = vector.broadcast %208 : vector<16x1xf32> to vector<16x32xf32>
    %210 = arith.subf %204, %209 : vector<16x32xf32>
    %211 = arith.mulf %210, %210 : vector<16x32xf32>
    %cst_93 = arith.constant dense<0.000000e+00> : vector<16xf32>
    %212 = vector.multi_reduction <add>, %211, %cst_93 [1] : vector<16x32xf32> to vector<16xf32>
    %213 = vector.shape_cast %212 : vector<16xf32> to vector<16x1xf32>
    %cst_94 = arith.constant 3.200000e+01 : f32
    %214 = vector.broadcast %cst_94 : f32 to vector<16x1xf32>
    %215 = arith.divf %213, %214 : vector<16x1xf32>
    %216 = vector.broadcast %208 : vector<16x1xf32> to vector<16x32xf32>
    %217 = arith.subf %204, %216 : vector<16x32xf32>
    %cst_95 = arith.constant 9.99999996E-13 : f32
    %218 = vector.broadcast %cst_95 : f32 to vector<16x1xf32>
    %219 = arith.addf %215, %218 : vector<16x1xf32>
    %220 = math.rsqrt %219 : vector<16x1xf32>
    %221 = vector.broadcast %220 : vector<16x1xf32> to vector<16x32xf32>
    %222 = arith.mulf %217, %221 : vector<16x32xf32>
    %c1_96 = arith.constant 1 : index
    %c0_97 = arith.constant 0 : index
    %c0_98 = arith.constant 0 : index
    %223 = vector.load %arg7[%c1_96, %c0_97, %c0_98] : memref<2x1x32xf32, #tpu.memory_space<vmem>>, vector<1x1x32xf32>
    %224 = vector.shape_cast %223 : vector<1x1x32xf32> to vector<1x32xf32>
    %225 = vector.broadcast %224 : vector<1x32xf32> to vector<16x32xf32>
    %226 = arith.mulf %222, %225 : vector<16x32xf32>
    %c1_99 = arith.constant 1 : index
    %c0_100 = arith.constant 0 : index
    %c0_101 = arith.constant 0 : index
    %227 = vector.load %arg8[%c1_99, %c0_100, %c0_101] : memref<2x1x32xf32, #tpu.memory_space<vmem>>, vector<1x1x32xf32>
    %228 = vector.shape_cast %227 : vector<1x1x32xf32> to vector<1x32xf32>
    %229 = vector.broadcast %228 : vector<1x32xf32> to vector<16x32xf32>
    %230 = arith.addf %226, %229 : vector<16x32xf32>
    %c1_102 = arith.constant 1 : index
    %c0_103 = arith.constant 0 : index
    %c0_104 = arith.constant 0 : index
    %231 = vector.load %arg9[%c1_102, %c0_103, %c0_104] : memref<2x32x64xf32, #tpu.memory_space<vmem>>, vector<1x32x64xf32>
    %232 = vector.shape_cast %231 : vector<1x32x64xf32> to vector<32x64xf32>
    %cst_105 = arith.constant dense<0.000000e+00> : vector<16x64xf32>
    %233 = tpu.matmul %230, %232, %cst_105 {dimension_numbers = #tpu.dot_dimension_numbers<[1], [0], [0], [1], [0, 0, 1, 1], [], []>} : vector<16x32xf32>, vector<32x64xf32>, vector<16x64xf32> -> vector<16x64xf32>
    %c1_106 = arith.constant 1 : index
    %c0_107 = arith.constant 0 : index
    %c0_108 = arith.constant 0 : index
    %234 = vector.load %arg10[%c1_106, %c0_107, %c0_108] : memref<2x1x64xf32, #tpu.memory_space<vmem>>, vector<1x1x64xf32>
    %235 = vector.shape_cast %234 : vector<1x1x64xf32> to vector<1x64xf32>
    %236 = vector.broadcast %235 : vector<1x64xf32> to vector<16x64xf32>
    %237 = arith.addf %233, %236 : vector<16x64xf32>
    %238 = arith.mulf %237, %237 : vector<16x64xf32>
    %239 = arith.mulf %237, %238 : vector<16x64xf32>
    %cst_109 = arith.constant 4.471500e-02 : f32
    %240 = vector.broadcast %cst_109 : f32 to vector<16x64xf32>
    %241 = arith.mulf %240, %239 : vector<16x64xf32>
    %242 = arith.addf %237, %241 : vector<16x64xf32>
    %cst_110 = arith.constant 0.797884583 : f32
    %243 = vector.broadcast %cst_110 : f32 to vector<16x64xf32>
    %244 = arith.mulf %243, %242 : vector<16x64xf32>
    %245 = math.tanh %244 : vector<16x64xf32>
    %cst_111 = arith.constant 1.000000e+00 : f32
    %246 = vector.broadcast %cst_111 : f32 to vector<16x64xf32>
    %247 = arith.addf %246, %245 : vector<16x64xf32>
    %cst_112 = arith.constant 5.000000e-01 : f32
    %248 = vector.broadcast %cst_112 : f32 to vector<16x64xf32>
    %249 = arith.mulf %248, %247 : vector<16x64xf32>
    %250 = arith.mulf %237, %249 : vector<16x64xf32>
    %c1_113 = arith.constant 1 : index
    %c0_114 = arith.constant 0 : index
    %c0_115 = arith.constant 0 : index
    %251 = vector.load %arg11[%c1_113, %c0_114, %c0_115] : memref<2x64x32xf32, #tpu.memory_space<vmem>>, vector<1x64x32xf32>
    %252 = vector.shape_cast %251 : vector<1x64x32xf32> to vector<64x32xf32>
    %cst_116 = arith.constant dense<0.000000e+00> : vector<16x32xf32>
    %253 = tpu.matmul %250, %252, %cst_116 {dimension_numbers = #tpu.dot_dimension_numbers<[1], [0], [0], [1], [0, 0, 1, 1], [], []>} : vector<16x64xf32>, vector<64x32xf32>, vector<16x32xf32> -> vector<16x32xf32>
    %c1_117 = arith.constant 1 : index
    %c0_118 = arith.constant 0 : index
    %c0_119 = arith.constant 0 : index
    %254 = vector.load %arg12[%c1_117, %c0_118, %c0_119] : memref<2x1x32xf32, #tpu.memory_space<vmem>>, vector<1x1x32xf32>
    %255 = vector.shape_cast %254 : vector<1x1x32xf32> to vector<1x32xf32>
    %256 = vector.broadcast %255 : vector<1x32xf32> to vector<16x32xf32>
    %257 = arith.addf %253, %256 : vector<16x32xf32>
    %258 = arith.addf %230, %257 : vector<16x32xf32>
    %cst_120 = arith.constant dense<0.000000e+00> : vector<16xf32>
    %259 = vector.multi_reduction <add>, %258, %cst_120 [1] : vector<16x32xf32> to vector<16xf32>
    %260 = vector.shape_cast %259 : vector<16xf32> to vector<16x1xf32>
    %cst_121 = arith.constant 3.200000e+01 : f32
    %261 = vector.broadcast %cst_121 : f32 to vector<16x1xf32>
    %262 = arith.divf %260, %261 : vector<16x1xf32>
    %263 = vector.broadcast %262 : vector<16x1xf32> to vector<16x32xf32>
    %264 = arith.subf %258, %263 : vector<16x32xf32>
    %265 = arith.mulf %264, %264 : vector<16x32xf32>
    %cst_122 = arith.constant dense<0.000000e+00> : vector<16xf32>
    %266 = vector.multi_reduction <add>, %265, %cst_122 [1] : vector<16x32xf32> to vector<16xf32>
    %267 = vector.shape_cast %266 : vector<16xf32> to vector<16x1xf32>
    %cst_123 = arith.constant 3.200000e+01 : f32
    %268 = vector.broadcast %cst_123 : f32 to vector<16x1xf32>
    %269 = arith.divf %267, %268 : vector<16x1xf32>
    %270 = vector.broadcast %262 : vector<16x1xf32> to vector<16x32xf32>
    %271 = arith.subf %258, %270 : vector<16x32xf32>
    %cst_124 = arith.constant 9.99999996E-13 : f32
    %272 = vector.broadcast %cst_124 : f32 to vector<16x1xf32>
    %273 = arith.addf %269, %272 : vector<16x1xf32>
    %274 = math.rsqrt %273 : vector<16x1xf32>
    %275 = vector.broadcast %274 : vector<16x1xf32> to vector<16x32xf32>
    %276 = arith.mulf %271, %275 : vector<16x32xf32>
    %c1_125 = arith.constant 1 : index
    %c0_126 = arith.constant 0 : index
    %c0_127 = arith.constant 0 : index
    %277 = vector.load %arg13[%c1_125, %c0_126, %c0_127] : memref<2x1x32xf32, #tpu.memory_space<vmem>>, vector<1x1x32xf32>
    %278 = vector.shape_cast %277 : vector<1x1x32xf32> to vector<1x32xf32>
    %279 = vector.broadcast %278 : vector<1x32xf32> to vector<16x32xf32>
    %280 = arith.mulf %276, %279 : vector<16x32xf32>
    %c1_128 = arith.constant 1 : index
    %c0_129 = arith.constant 0 : index
    %c0_130 = arith.constant 0 : index
    %281 = vector.load %arg14[%c1_128, %c0_129, %c0_130] : memref<2x1x32xf32, #tpu.memory_space<vmem>>, vector<1x1x32xf32>
    %282 = vector.shape_cast %281 : vector<1x1x32xf32> to vector<1x32xf32>
    %283 = vector.broadcast %282 : vector<1x32xf32> to vector<16x32xf32>
    %284 = arith.addf %280, %283 : vector<16x32xf32>
    %285 = vector.shape_cast %284 : vector<16x32xf32> to vector<2x8x32xf32>
    %286 = vector.extract_strided_slice %285 {offsets = [0, 0, 0], sizes = [2, 1, 32], strides = [1, 1, 1]} : vector<2x8x32xf32> to vector<2x1x32xf32>
    %287 = vector.shape_cast %286 : vector<2x1x32xf32> to vector<2x32xf32>
    %c0_131 = arith.constant 0 : index
    %c0_132 = arith.constant 0 : index
    %288 = vector.load %arg15[%c0_131, %c0_132] : memref<32x128xf32, #tpu.memory_space<vmem>>, vector<32x128xf32>
    %cst_133 = arith.constant dense<0.000000e+00> : vector<2x128xf32>
    %289 = tpu.matmul %287, %288, %cst_133 {dimension_numbers = #tpu.dot_dimension_numbers<[1], [0], [0], [1], [0, 0, 1, 1], [], []>} : vector<2x32xf32>, vector<32x128xf32>, vector<2x128xf32> -> vector<2x128xf32>
    %c0_134 = arith.constant 0 : index
    %c0_135 = arith.constant 0 : index
    %290 = vector.load %arg16[%c0_134, %c0_135] : memref<1x128xf32, #tpu.memory_space<vmem>>, vector<1x128xf32>
    %291 = vector.broadcast %290 : vector<1x128xf32> to vector<2x128xf32>
    %292 = arith.addf %289, %291 : vector<2x128xf32>
    %c0_136 = arith.constant 0 : index
    %c0_137 = arith.constant 0 : index
    %293 = vector.load %arg17[%c0_136, %c0_137] : memref<2x128xf32, #tpu.memory_space<vmem>>, vector<2x128xf32>
    tpu.vector_store %arg17[%c0_136, %c0_137], %292 {strides = array<i32>} : memref<2x128xf32, #tpu.memory_space<vmem>>, vector<2x128xf32>,
    return
  }
  func.func @transform_0(%arg0: i32) -> (i32, i32, i32) {
    %c0_i32 = arith.constant 0 : i32
    %c0_i32_0 = arith.constant 0 : i32
    %c0_i32_1 = arith.constant 0 : i32
    %c0_i32_2 = arith.constant 0 : i32
    return %c0_i32, %c0_i32_0, %c0_i32_1 : i32, i32, i32
  }
  func.func @transform_1(%arg0: i32) -> (i32, i32, i32) {
    %c0_i32 = arith.constant 0 : i32
    %c0_i32_0 = arith.constant 0 : i32
    %c0_i32_1 = arith.constant 0 : i32
    %c0_i32_2 = arith.constant 0 : i32
    return %c0_i32, %c0_i32_0, %c0_i32_1 : i32, i32, i32
  }
  func.func @transform_2(%arg0: i32) -> (i32, i32, i32) {
    %c0_i32 = arith.constant 0 : i32
    %c0_i32_0 = arith.constant 0 : i32
    %c0_i32_1 = arith.constant 0 : i32
    %c0_i32_2 = arith.constant 0 : i32
    return %c0_i32, %c0_i32_0, %c0_i32_1 : i32, i32, i32
  }
  func.func @transform_3(%arg0: i32) -> (i32, i32, i32) {
    %c0_i32 = arith.constant 0 : i32
    %c0_i32_0 = arith.constant 0 : i32
    %c0_i32_1 = arith.constant 0 : i32
    %c0_i32_2 = arith.constant 0 : i32
    return %c0_i32, %c0_i32_0, %c0_i32_1 : i32, i32, i32
  }
  func.func @transform_4(%arg0: i32) -> (i32, i32, i32) {
    %c0_i32 = arith.constant 0 : i32
    %c0_i32_0 = arith.constant 0 : i32
    %c0_i32_1 = arith.constant 0 : i32
    %c0_i32_2 = arith.constant 0 : i32
    return %c0_i32, %c0_i32_0, %c0_i32_1 : i32, i32, i32
  }
  func.func @transform_5(%arg0: i32) -> (i32, i32, i32) {
    %c0_i32 = arith.constant 0 : i32
    %c0_i32_0 = arith.constant 0 : i32
    %c0_i32_1 = arith.constant 0 : i32
    %c0_i32_2 = arith.constant 0 : i32
    return %c0_i32, %c0_i32_0, %c0_i32_1 : i32, i32, i32
  }
  func.func @transform_6(%arg0: i32) -> (i32, i32, i32) {
    %c0_i32 = arith.constant 0 : i32
    %c0_i32_0 = arith.constant 0 : i32
    %c0_i32_1 = arith.constant 0 : i32
    %c0_i32_2 = arith.constant 0 : i32
    return %c0_i32, %c0_i32_0, %c0_i32_1 : i32, i32, i32
  }
  func.func @transform_7(%arg0: i32) -> (i32, i32, i32) {
    %c0_i32 = arith.constant 0 : i32
    %c0_i32_0 = arith.constant 0 : i32
    %c0_i32_1 = arith.constant 0 : i32
    %c0_i32_2 = arith.constant 0 : i32
    return %c0_i32, %c0_i32_0, %c0_i32_1 : i32, i32, i32
  }
  func.func @transform_8(%arg0: i32) -> (i32, i32, i32) {
    %c0_i32 = arith.constant 0 : i32
    %c0_i32_0 = arith.constant 0 : i32
    %c0_i32_1 = arith.constant 0 : i32
    %c0_i32_2 = arith.constant 0 : i32
    return %c0_i32, %c0_i32_0, %c0_i32_1 : i32, i32, i32
  }
  func.func @transform_9(%arg0: i32) -> (i32, i32, i32) {
    %c0_i32 = arith.constant 0 : i32
    %c0_i32_0 = arith.constant 0 : i32
    %c0_i32_1 = arith.constant 0 : i32
    %c0_i32_2 = arith.constant 0 : i32
    return %c0_i32, %c0_i32_0, %c0_i32_1 : i32, i32, i32
  }
  func.func @transform_10(%arg0: i32) -> (i32, i32, i32) {
    %c0_i32 = arith.constant 0 : i32
    %c0_i32_0 = arith.constant 0 : i32
    %c0_i32_1 = arith.constant 0 : i32
    %c0_i32_2 = arith.constant 0 : i32
    return %c0_i32, %c0_i32_0, %c0_i32_1 : i32, i32, i32
  }
  func.func @transform_11(%arg0: i32) -> (i32, i32, i32) {
    %c0_i32 = arith.constant 0 : i32
    %c0_i32_0 = arith.constant 0 : i32
    %c0_i32_1 = arith.constant 0 : i32
    %c0_i32_2 = arith.constant 0 : i32
    return %c0_i32, %c0_i32_0, %c0_i32_1 : i32, i32, i32
  }
  func.func @transform_12(%arg0: i32) -> (i32, i32, i32) {
    %c0_i32 = arith.constant 0 : i32
    %c0_i32_0 = arith.constant 0 : i32
    %c0_i32_1 = arith.constant 0 : i32
    %c0_i32_2 = arith.constant 0 : i32
    return %c0_i32, %c0_i32_0, %c0_i32_1 : i32, i32, i32
  }
  func.func @transform_13(%arg0: i32) -> (i32, i32, i32) {
    %c0_i32 = arith.constant 0 : i32
    %c0_i32_0 = arith.constant 0 : i32
    %c0_i32_1 = arith.constant 0 : i32
    %c0_i32_2 = arith.constant 0 : i32
    return %c0_i32, %c0_i32_0, %c0_i32_1 : i32, i32, i32
  }
  func.func @transform_14(%arg0: i32) -> (i32, i32) {
    %c0_i32 = arith.constant 0 : i32
    %c0_i32_0 = arith.constant 0 : i32
    %c0_i32_1 = arith.constant 0 : i32
    return %c0_i32, %c0_i32_0 : i32, i32
  }
  func.func @transform_15(%arg0: i32) -> (i32, i32) {
    %c0_i32 = arith.constant 0 : i32
    %c0_i32_0 = arith.constant 0 : i32
    %c0_i32_1 = arith.constant 0 : i32
    return %c0_i32, %c0_i32_0 : i32, i32
  }
  func.func @transform_16(%arg0: i32) -> (i32, i32) {
    %c0_i32 = arith.constant 0 : i32
    %c0_i32_0 = arith.constant 0 : i32
    %c0_i32_1 = arith.constant 0 : i32
    return %c0_i32, %c0_i32_0 : i32, i32
  }
}

</mosaic_0001>

<llo_original>
// kernel: forward.1
$region0: #{forward.1}
  #allocation0 [shape = 'u32[]', space=smem, size = 0x4, offset = 0x4, fixed_abs, tag = 'smem constant byte address 0x4 - core index']
  #allocation1 [shape = 'u32[144,128]{1,0:T(1,128)}', space=vmem, size = 0x12000, scoped, tag = 'internal scratch']
  %s0 = inlined_call_operand.vmem [shape: f32[2,8,32], index: 0, kind: input, shape index: {}]
  %s1 = inlined_call_operand.vmem [shape: f32[2,1,8], index: 1, kind: input, shape index: {}]
  %s2 = inlined_call_operand.vmem [shape: f32[2,32,96], index: 2, kind: input, shape index: {}]
  %s3 = inlined_call_operand.vmem [shape: f32[2,1,96], index: 3, kind: input, shape index: {}]
  %s4 = inlined_call_operand.vmem [shape: f32[2,32,32], index: 4, kind: input, shape index: {}]
  %s5 = inlined_call_operand.vmem [shape: f32[2,1,32], index: 5, kind: input, shape index: {}]
  %s6 = inlined_call_operand.vmem [shape: f32[2,1,32], index: 6, kind: input, shape index: {}]
  %s7 = inlined_call_operand.vmem [shape: f32[2,1,32], index: 7, kind: input, shape index: {}]
  %s8 = inlined_call_operand.vmem [shape: f32[2,32,64], index: 8, kind: input, shape index: {}]
  %s9 = inlined_call_operand.vmem [shape: f32[2,1,64], index: 9, kind: input, shape index: {}]
  %s10 = inlined_call_operand.vmem [shape: f32[2,64,32], index: 10, kind: input, shape index: {}]
  %s11 = inlined_call_operand.vmem [shape: f32[2,1,32], index: 11, kind: input, shape index: {}]
  %s12 = inlined_call_operand.vmem [shape: f32[2,1,32], index: 12, kind: input, shape index: {}]
  %s13 = inlined_call_operand.vmem [shape: f32[2,1,32], index: 13, kind: input, shape index: {}]
  %s14 = inlined_call_operand.vmem [shape: f32[32,128], index: 14, kind: input, shape index: {}]
  %s15 = inlined_call_operand.vmem [shape: f32[1,128], index: 15, kind: input, shape index: {}]
  %s16 = inlined_call_operand.hbm [shape: f32[2,128], index: 16, kind: output, shape index: {}]
  %s17 = sld [smem:[#allocation0]]
  $region74: #{forward.1} parent=0
    _
  %s19 = ssub.s32 1, %s17
  %s20 = scalar_select 0, %s19, %s17
  $region1: #{forward.1} parent=0
    #allocation2 [shape = 'u8[1024]{0}', space=vmem, size = 0x400, scoped, tag = 'output window, operand 0, single buffered']
    #allocation3 [shape = 's32[1]{0}', space=sflag, size = 0x4, scoped, tag = 'scoped memory for forward.1']
    %21 = vsyncpa [#allocation3], 0
    // Predicated region
    $region2: #{forward.1} parent=1 // pred_check
      _
    $region3: #{forward.1} parent=1 // pred_check_branch
      %23 = sbr.rel (0) target = $region5
    $region4: #{forward.1} parent=1 // pred_region
      _
    $region5: #{forward.1} parent=1 // pred_fallthru
      _
    // Predicated region
    $region6: #{forward.1} parent=1 // pred_check
      _
    $region7: #{forward.1} parent=1 // pred_check_branch
      %25 = sbr.rel (0) target = $region9
    $region8: #{forward.1} parent=1 // pred_region
      _
    $region9: #{forward.1} parent=1 // pred_fallthru
      _
    // Predicated region
    $region10: #{forward.1} parent=1 // pred_check
      _
    $region11: #{forward.1} parent=1 // pred_check_branch
      %27 = sbr.rel (0) target = $region13
    $region12: #{forward.1} parent=1 // pred_region
      _
    $region13: #{forward.1} parent=1 // pred_fallthru
      _
    // Predicated region
    $region14: #{forward.1} parent=1 // pred_check
      _
    $region15: #{forward.1} parent=1 // pred_check_branch
      %29 = sbr.rel (0) target = $region17
    $region16: #{forward.1} parent=1 // pred_region
      _
    $region17: #{forward.1} parent=1 // pred_fallthru
      _
    // Predicated region
    $region18: #{forward.1} parent=1 // pred_check
      _
    $region19: #{forward.1} parent=1 // pred_check_branch
      %31 = sbr.rel (0) target = $region21
    $region20: #{forward.1} parent=1 // pred_region
      _
    $region21: #{forward.1} parent=1 // pred_fallthru
      _
    // Predicated region
    $region22: #{forward.1} parent=1 // pred_check
      _
    $region23: #{forward.1} parent=1 // pred_check_branch
      %33 = sbr.rel (0) target = $region25
    $region24: #{forward.1} parent=1 // pred_region
      _
    $region25: #{forward.1} parent=1 // pred_fallthru
      _
    // Predicated region
    $region26: #{forward.1} parent=1 // pred_check
      _
    $region27: #{forward.1} parent=1 // pred_check_branch
      %35 = sbr.rel (0) target = $region29
    $region28: #{forward.1} parent=1 // pred_region
      _
    $region29: #{forward.1} parent=1 // pred_fallthru
      _
    // Predicated region
    $region30: #{forward.1} parent=1 // pred_check
      _
    $region31: #{forward.1} parent=1 // pred_check_branch
      %37 = sbr.rel (0) target = $region33
    $region32: #{forward.1} parent=1 // pred_region
      _
    $region33: #{forward.1} parent=1 // pred_fallthru
      _
    // Predicated region
    $region34: #{forward.1} parent=1 // pred_check
      _
    $region35: #{forward.1} parent=1 // pred_check_branch
      %39 = sbr.rel (0) target = $region37
    $region36: #{forward.1} parent=1 // pred_region
      _
    $region37: #{forward.1} parent=1 // pred_fallthru
      _
    // Predicated region
    $region38: #{forward.1} parent=1 // pred_check
      _
    $region39: #{forward.1} parent=1 // pred_check_branch
      %41 = sbr.rel (0) target = $region41
    $region40: #{forward.1} parent=1 // pred_region
      _
    $region41: #{forward.1} parent=1 // pred_fallthru
      _
    // Predicated region
    $region42: #{forward.1} parent=1 // pred_check
      _
    $region43: #{forward.1} parent=1 // pred_check_branch
      %43 = sbr.rel (0) target = $region45
    $region44: #{forward.1} parent=1 // pred_region
      _
    $region45: #{forward.1} parent=1 // pred_fallthru
      _
    // Predicated region
    $region46: #{forward.1} parent=1 // pred_check
      _
    $region47: #{forward.1} parent=1 // pred_check_branch
      %45 = sbr.rel (0) target = $region49
    $region48: #{forward.1} parent=1 // pred_region
      _
    $region49: #{forward.1} parent=1 // pred_fallthru
      _
    // Predicated region
    $region50: #{forward.1} parent=1 // pred_check
      _
    $region51: #{forward.1} parent=1 // pred_check_branch
      %47 = sbr.rel (0) target = $region53
    $region52: #{forward.1} parent=1 // pred_region
      _
    $region53: #{forward.1} parent=1 // pred_fallthru
      _
    // Predicated region
    $region54: #{forward.1} parent=1 // pred_check
      _
    $region55: #{forward.1} parent=1 // pred_check_branch
      %49 = sbr.rel (0) target = $region57
    $region56: #{forward.1} parent=1 // pred_region
      _
    $region57: #{forward.1} parent=1 // pred_fallthru
      _
    // Predicated region
    $region58: #{forward.1} parent=1 // pred_check
      _
    $region59: #{forward.1} parent=1 // pred_check_branch
      %51 = sbr.rel (0) target = $region61
    $region60: #{forward.1} parent=1 // pred_region
      _
    $region61: #{forward.1} parent=1 // pred_fallthru
      _
    // Predicated region
    $region62: #{forward.1} parent=1 // pred_check
      _
    $region63: #{forward.1} parent=1 // pred_check_branch
      %53 = sbr.rel (0) target = $region65
    $region64: #{forward.1} parent=1 // pred_region
      _
    $region65: #{forward.1} parent=1 // pred_fallthru
      _
    %v54 = vld [vmem:[%s0] sm:$0xff]
    %v55 = vld [vmem:[%s0 + $0x8] sm:$0xff]
    %v56 = vld [vmem:[%s1] sm:$0x1]
    %v57 = vld [vmem:[%s1 + $0x1] sm:$0x1]
    %v58 = vld [vmem:[%s2] sm:$0xff]
    %v59 = vld [vmem:[%s2 + $0x8] sm:$0xff]
    %v60 = vld [vmem:[%s2 + $0x10] sm:$0xff]
    %v61 = vld [vmem:[%s2 + $0x18] sm:$0xff]
    %v62 = vld [vmem:[%s3] sm:$0x1]
    %v64 = vlaneseq
    %v65 = vshrl.u32 %v64, 7
    %v66 = vsub.s32 0, %v65
    %v67 = vrot.slane %v62, %v66
    %vm69 = vcmask 261120
    %v71 = vsel %vm69, %v54, 0
    %v74 = vsel %vm69, %v55, 0
    %76 = vmatprep.subr.mxu0 0.0
    %77 = vmatpush1.msra.mxu0 0.0
    %78 = vmatprep.subr.mxu0 0.0
    %79 = vmatpush1.msra.mxu0 0.0
    %80 = vmatprep.subr.mxu0 0.0
    %81 = vmatpush1.msra.mxu0 0.0
    %82 = vmatprep.subr.mxu0 0.0
    %83 = vmatpush1.msra.mxu0 0.0
    %84 = vmatprep.subr.mxu0 0.0
    %85 = vmatpush1.msra.mxu0 0.0
    %86 = vmatprep.subr.mxu0 0.0
    %87 = vmatpush1.msra.mxu0 0.0
    %88 = vmatprep.subr.mxu0 0.0
    %89 = vmatpush1.msra.mxu0 0.0
    %90 = vmatprep.subr.mxu0 0.0
    %91 = vmatpush1.msra.mxu0 0.0
    %92 = vmatprep.subr.mxu0 0.0
    %93 = vmatpush1.msra.mxu0 0.0
    %94 = vmatprep.subr.mxu0 0.0
    %95 = vmatpush1.msra.mxu0 0.0
    %96 = vmatprep.subr.mxu0 0.0
    %97 = vmatpush1.msra.mxu0 0.0
    %98 = vmatprep.subr.mxu0 0.0
    %99 = vmatpush1.msra.mxu0 0.0
    %100 = vmatprep.subr.mxu0 0.0
    %101 = vmatpush1.msra.mxu0 %v61
    %102 = vmatprep.subr.mxu0 0.0
    %103 = vmatpush1.msra.mxu0 %v60
    %104 = vmatprep.subr.mxu0 0.0
    %105 = vmatpush1.msra.mxu0 %v59
    %106 = vmatprep.subr.mxu0 0.0
    %107 = vmatpush1.msra.mxu0 %v58
    %108 = vmatprep.subr.mxu0 0.0
    %109 = vmatpush2.msra.mxu0 0.0
    %110 = vmatprep.subr.mxu0 0.0
    %111 = vmatpush2.msra.mxu0 0.0
    %112 = vmatprep.subr.mxu0 0.0
    %113 = vmatpush2.msra.mxu0 0.0
    %114 = vmatprep.subr.mxu0 0.0
    %115 = vmatpush2.msra.mxu0 0.0
    %116 = vmatprep.subr.mxu0 0.0
    %117 = vmatpush2.msra.mxu0 0.0
    %118 = vmatprep.subr.mxu0 0.0
    %119 = vmatpush2.msra.mxu0 0.0
    %120 = vmatprep.subr.mxu0 0.0
    %121 = vmatpush2.msra.mxu0 0.0
    %122 = vmatprep.subr.mxu0 0.0
    %123 = vmatpush2.msra.mxu0 0.0
    %124 = vmatprep.subr.mxu0 0.0
    %125 = vmatpush2.msra.mxu0 0.0
    %126 = vmatprep.subr.mxu0 0.0
    %127 = vmatpush2.msra.mxu0 0.0
    %128 = vmatprep.subr.mxu0 0.0
    %129 = vmatpush2.msra.mxu0 0.0
    %130 = vmatprep.subr.mxu0 0.0
    %131 = vmatpush2.msra.mxu0 0.0
    %132 = vmatprep.subr.mxu0 0.0
    %133 = vmatpush2.msra.mxu0 0.0
    %134 = vmatprep.subr.mxu0 0.0
    %135 = vmatpush2.msra.mxu0 0.0
    %136 = vmatprep.subr.mxu0 0.0
    %137 = vmatpush2.msra.mxu0 0.0
    %138 = vmatprep.subr.mxu0 0.0
    %139 = vmatpush2.msra.mxu0 0.0
    %140 = vmatprep.mubr.f32.mxu0 0.0
    %141 = vmatmul.mubr.f32.gmra.mxu0 %v71
    %v142 = vpop.f32.mrf.mxu0
    %v143 = vadd.f32 %v67, %v142
    %v144 = vpop.f32.mrf.mxu0
    %145 = vmatprep.mubr.f32.mxu0 0.0
    %146 = vmatmul.mubr.f32.gmra.mxu0 %v74
    %v147 = vpop.f32.mrf.mxu0
    %v148 = vadd.f32 %v67, %v147
    %v149 = vpop.f32.mrf.mxu0
    %150 = vdwg.mxu0
    %152 = vrot.lane.b32.xlu0 %v143, 96
    %v153 = vpop.permute.xlu0 %152
    %vm154 = vcmask 130048
    %v155 = vsel %vm154, %v143, 0
    %v157 = vsel %vm154, %v153, 0
    %159 = vmatprep.subr.mxu0 0.0
    %160 = vmatpush1.xpose.msra.mxu0 0.0
    %161 = vmatprep.subr.mxu0 0.0
    %162 = vmatpush1.xpose.msra.mxu0 0.0
    %163 = vmatprep.subr.mxu0 0.0
    %164 = vmatpush1.xpose.msra.mxu0 0.0
    %165 = vmatprep.subr.mxu0 0.0
    %166 = vmatpush1.xpose.msra.mxu0 0.0
    %167 = vmatprep.subr.mxu0 0.0
    %168 = vmatpush1.xpose.msra.mxu0 0.0
    %169 = vmatprep.subr.mxu0 0.0
    %170 = vmatpush1.xpose.msra.mxu0 0.0
    %171 = vmatprep.subr.mxu0 0.0
    %172 = vmatpush1.xpose.msra.mxu0 0.0
    %173 = vmatprep.subr.mxu0 0.0
    %174 = vmatpush1.xpose.msra.mxu0 0.0
    %175 = vmatprep.subr.mxu0 0.0
    %176 = vmatpush1.xpose.msra.mxu0 0.0
    %177 = vmatprep.subr.mxu0 0.0
    %178 = vmatpush1.xpose.msra.mxu0 0.0
    %179 = vmatprep.subr.mxu0 0.0
    %180 = vmatpush1.xpose.msra.mxu0 0.0
    %181 = vmatprep.subr.mxu0 0.0
    %182 = vmatpush1.xpose.msra.mxu0 0.0
    %183 = vmatprep.subr.mxu0 0.0
    %184 = vmatpush1.xpose.msra.mxu0 0.0
    %185 = vmatprep.subr.mxu0 0.0
    %186 = vmatpush1.xpose.msra.mxu0 0.0
    %187 = vmatprep.subr.mxu0 0.0
    %188 = vmatpush1.xpose.msra.mxu0 0.0
    %189 = vmatprep.subr.mxu0 0.0
    %190 = vmatpush1.xpose.msra.mxu0 %v157
    %191 = vmatprep.subr.mxu0 0.0
    %192 = vmatpush2.xpose.msra.mxu0 0.0
    %193 = vmatprep.subr.mxu0 0.0
    %194 = vmatpush2.xpose.msra.mxu0 0.0
    %195 = vmatprep.subr.mxu0 0.0
    %196 = vmatpush2.xpose.msra.mxu0 0.0
    %197 = vmatprep.subr.mxu0 0.0
    %198 = vmatpush2.xpose.msra.mxu0 0.0
    %199 = vmatprep.subr.mxu0 0.0
    %200 = vmatpush2.xpose.msra.mxu0 0.0
    %201 = vmatprep.subr.mxu0 0.0
    %202 = vmatpush2.xpose.msra.mxu0 0.0
    %203 = vmatprep.subr.mxu0 0.0
    %204 = vmatpush2.xpose.msra.mxu0 0.0
    %205 = vmatprep.subr.mxu0 0.0
    %206 = vmatpush2.xpose.msra.mxu0 0.0
    %207 = vmatprep.subr.mxu0 0.0
    %208 = vmatpush2.xpose.msra.mxu0 0.0
    %209 = vmatprep.subr.mxu0 0.0
    %210 = vmatpush2.xpose.msra.mxu0 0.0
    %211 = vmatprep.subr.mxu0 0.0
    %212 = vmatpush2.xpose.msra.mxu0 0.0
    %213 = vmatprep.subr.mxu0 0.0
    %214 = vmatpush2.xpose.msra.mxu0 0.0
    %215 = vmatprep.subr.mxu0 0.0
    %216 = vmatpush2.xpose.msra.mxu0 0.0
    %217 = vmatprep.subr.mxu0 0.0
    %218 = vmatpush2.xpose.msra.mxu0 0.0
    %219 = vmatprep.subr.mxu0 0.0
    %220 = vmatpush2.xpose.msra.mxu0 0.0
    %221 = vmatprep.subr.mxu0 0.0
    %222 = vmatpush2.xpose.msra.mxu0 0.0
    %223 = vmatprep.mubr.f32.mxu0 0.0
    %224 = vmatmul.mubr.f32.gmra.mxu0 %v155
    %v225 = vpop.f32.mrf.mxu0
    %v226 = vadd.f32 0.0, %v225
    %v227 = vpop.f32.mrf.mxu0
    %228 = vdwg.mxu0
    %230 = vrot.lane.b32.xlu0 %v148, 96
    %v231 = vpop.permute.xlu0 %230
    %v232 = vsel %vm154, %v148, 0
    %v234 = vsel %vm154, %v231, 0
    %236 = vmatprep.subr.mxu0 0.0
    %237 = vmatpush1.xpose.msra.mxu0 0.0
    %238 = vmatprep.subr.mxu0 0.0
    %239 = vmatpush1.xpose.msra.mxu0 0.0
    %240 = vmatprep.subr.mxu0 0.0
    %241 = vmatpush1.xpose.msra.mxu0 0.0
    %242 = vmatprep.subr.mxu0 0.0
    %243 = vmatpush1.xpose.msra.mxu0 0.0
    %244 = vmatprep.subr.mxu0 0.0
    %245 = vmatpush1.xpose.msra.mxu0 0.0
    %246 = vmatprep.subr.mxu0 0.0
    %247 = vmatpush1.xpose.msra.mxu0 0.0
    %248 = vmatprep.subr.mxu0 0.0
    %249 = vmatpush1.xpose.msra.mxu0 0.0
    %250 = vmatprep.subr.mxu0 0.0
    %251 = vmatpush1.xpose.msra.mxu0 0.0
    %252 = vmatprep.subr.mxu0 0.0
    %253 = vmatpush1.xpose.msra.mxu0 0.0
    %254 = vmatprep.subr.mxu0 0.0
    %255 = vmatpush1.xpose.msra.mxu0 0.0
    %256 = vmatprep.subr.mxu0 0.0
    %257 = vmatpush1.xpose.msra.mxu0 0.0
    %258 = vmatprep.subr.mxu0 0.0
    %259 = vmatpush1.xpose.msra.mxu0 0.0
    %260 = vmatprep.subr.mxu0 0.0
    %261 = vmatpush1.xpose.msra.mxu0 0.0
    %262 = vmatprep.subr.mxu0 0.0
    %263 = vmatpush1.xpose.msra.mxu0 0.0
    %264 = vmatprep.subr.mxu0 0.0
    %265 = vmatpush1.xpose.msra.mxu0 0.0
    %266 = vmatprep.subr.mxu0 0.0
    %267 = vmatpush1.xpose.msra.mxu0 %v234
    %268 = vmatprep.subr.mxu0 0.0
    %269 = vmatpush2.xpose.msra.mxu0 0.0
    %270 = vmatprep.subr.mxu0 0.0
    %271 = vmatpush2.xpose.msra.mxu0 0.0
    %272 = vmatprep.subr.mxu0 0.0
    %273 = vmatpush2.xpose.msra.mxu0 0.0
    %274 = vmatprep.subr.mxu0 0.0
    %275 = vmatpush2.xpose.msra.mxu0 0.0
    %276 = vmatprep.subr.mxu0 0.0
    %277 = vmatpush2.xpose.msra.mxu0 0.0
    %278 = vmatprep.subr.mxu0 0.0
    %279 = vmatpush2.xpose.msra.mxu0 0.0
    %280 = vmatprep.subr.mxu0 0.0
    %281 = vmatpush2.xpose.msra.mxu0 0.0
    %282 = vmatprep.subr.mxu0 0.0
    %283 = vmatpush2.xpose.msra.mxu0 0.0
    %284 = vmatprep.subr.mxu0 0.0
    %285 = vmatpush2.xpose.msra.mxu0 0.0
    %286 = vmatprep.subr.mxu0 0.0
    %287 = vmatpush2.xpose.msra.mxu0 0.0
    %288 = vmatprep.subr.mxu0 0.0
    %289 = vmatpush2.xpose.msra.mxu0 0.0
    %290 = vmatprep.subr.mxu0 0.0
    %291 = vmatpush2.xpose.msra.mxu0 0.0
    %292 = vmatprep.subr.mxu0 0.0
    %293 = vmatpush2.xpose.msra.mxu0 0.0
    %294 = vmatprep.subr.mxu0 0.0
    %295 = vmatpush2.xpose.msra.mxu0 0.0
    %296 = vmatprep.subr.mxu0 0.0
    %297 = vmatpush2.xpose.msra.mxu0 0.0
    %298 = vmatprep.subr.mxu0 0.0
    %299 = vmatpush2.xpose.msra.mxu0 0.0
    %300 = vmatprep.mubr.f32.mxu0 0.0
    %301 = vmatmul.mubr.f32.gmra.mxu0 %v232
    %v302 = vpop.f32.mrf.mxu0
    %v303 = vadd.f32 0.0, %v302
    %v304 = vpop.f32.mrf.mxu0
    %305 = vdwg.mxu0
    %v306 = vmul.f32 %v226, 0.25
    %v307 = vmul.f32 %v303, 0.25
    %v310 = vlaneseq
    %v311 = vshrl.u32 %v310, 7
    %v312 = vsub.s32 0, %v311
    %v313 = vrot.slane %v56, %v312
    %v314 = vlaneseq
    %v315 = vshrl.u32 %v314, 7
    %v316 = vsub.s32 0, %v315
    %v317 = vrot.slane %v57, %v316
    %v320 = vadd.f32 %v306, %v313
    %v321 = vadd.f32 %v307, %v317
    %vm322 = vcmask 64512
    %v323 = vsel %vm322, %v320, -inf
    %324 = vmax.xlane.f32.xlu0 %v323
    %v325 = vpop.xlane.xlu0 %324
    %v326 = vsel %vm322, %v321, -inf
    %327 = vmax.xlane.f32.xlu0 %v326
    %v328 = vpop.xlane.xlu0 %327
    %v329 = vsub.f32 %v320, %v325
    %v330 = vsub.f32 %v321, %v328
    %v331 = vmul.f32 %v329, 1.442695
    %v332 = vpow.pop %v331
    %v333 = vmul.f32 %v330, 1.442695
    %v334 = vpow.pop %v333
    %v335 = vsel %vm322, %v332, 0.0
    %336 = vadd.xlane.f32.xlu0 %v335
    %v337 = vpop.xlane.xlu0 %336
    %v338 = vsel %vm322, %v334, 0.0
    %339 = vadd.xlane.f32.xlu0 %v338
    %v340 = vpop.xlane.xlu0 %339
    %v341 = vrcp.pop %v337
    %v342 = vrcp.pop %v340
    %v343 = vmul.f32 %v332, %v341
    %v344 = vmul.f32 %v334, %v342
    %345 = vrot.lane.b32.xlu0 %v143, 64
    %v346 = vpop.permute.xlu0 %345
    %v349 = vsel %vm322, %v343, 0
    %351 = vmatprep.subr.mxu0 0.0
    %352 = vmatpush1.msra.mxu0 0.0
    %353 = vmatprep.subr.mxu0 0.0
    %354 = vmatpush1.msra.mxu0 0.0
    %355 = vmatprep.subr.mxu0 0.0
    %356 = vmatpush1.msra.mxu0 0.0
    %357 = vmatprep.subr.mxu0 0.0
    %358 = vmatpush1.msra.mxu0 0.0
    %359 = vmatprep.subr.mxu0 0.0
    %360 = vmatpush1.msra.mxu0 0.0
    %361 = vmatprep.subr.mxu0 0.0
    %362 = vmatpush1.msra.mxu0 0.0
    %363 = vmatprep.subr.mxu0 0.0
    %364 = vmatpush1.msra.mxu0 0.0
    %365 = vmatprep.subr.mxu0 0.0
    %366 = vmatpush1.msra.mxu0 0.0
    %367 = vmatprep.subr.mxu0 0.0
    %368 = vmatpush1.msra.mxu0 0.0
    %369 = vmatprep.subr.mxu0 0.0
    %370 = vmatpush1.msra.mxu0 0.0
    %371 = vmatprep.subr.mxu0 0.0
    %372 = vmatpush1.msra.mxu0 0.0
    %373 = vmatprep.subr.mxu0 0.0
    %374 = vmatpush1.msra.mxu0 0.0
    %375 = vmatprep.subr.mxu0 0.0
    %376 = vmatpush1.msra.mxu0 0.0
    %377 = vmatprep.subr.mxu0 0.0
    %378 = vmatpush1.msra.mxu0 0.0
    %379 = vmatprep.subr.mxu0 0.0
    %380 = vmatpush1.msra.mxu0 0.0
    %381 = vmatprep.subr.mxu0 0.0
    %382 = vmatpush1.msra.mxu0 %v346
    %383 = vmatprep.subr.mxu0 0.0
    %384 = vmatpush2.msra.mxu0 0.0
    %385 = vmatprep.subr.mxu0 0.0
    %386 = vmatpush2.msra.mxu0 0.0
    %387 = vmatprep.subr.mxu0 0.0
    %388 = vmatpush2.msra.mxu0 0.0
    %389 = vmatprep.subr.mxu0 0.0
    %390 = vmatpush2.msra.mxu0 0.0
    %391 = vmatprep.subr.mxu0 0.0
    %392 = vmatpush2.msra.mxu0 0.0
    %393 = vmatprep.subr.mxu0 0.0
    %394 = vmatpush2.msra.mxu0 0.0
    %395 = vmatprep.subr.mxu0 0.0
    %396 = vmatpush2.msra.mxu0 0.0
    %397 = vmatprep.subr.mxu0 0.0
    %398 = vmatpush2.msra.mxu0 0.0
    %399 = vmatprep.subr.mxu0 0.0
    %400 = vmatpush2.msra.mxu0 0.0
    %401 = vmatprep.subr.mxu0 0.0
    %402 = vmatpush2.msra.mxu0 0.0
    %403 = vmatprep.subr.mxu0 0.0
    %404 = vmatpush2.msra.mxu0 0.0
    %405 = vmatprep.subr.mxu0 0.0
    %406 = vmatpush2.msra.mxu0 0.0
    %407 = vmatprep.subr.mxu0 0.0
    %408 = vmatpush2.msra.mxu0 0.0
    %409 = vmatprep.subr.mxu0 0.0
    %410 = vmatpush2.msra.mxu0 0.0
    %411 = vmatprep.subr.mxu0 0.0
    %412 = vmatpush2.msra.mxu0 0.0
    %413 = vmatprep.subr.mxu0 0.0
    %414 = vmatpush2.msra.mxu0 0.0
    %415 = vmatprep.mubr.f32.mxu0 0.0
    %416 = vmatmul.mubr.f32.gmra.mxu0 %v349
    %v417 = vpop.f32.mrf.mxu0
    %v418 = vadd.f32 0.0, %v417
    %v419 = vpop.f32.mrf.mxu0
    %420 = vdwg.mxu0
    %421 = vrot.lane.b32.xlu0 %v148, 64
    %v422 = vpop.permute.xlu0 %421
    %v425 = vsel %vm322, %v344, 0
    %427 = vmatprep.subr.mxu0 0.0
    %428 = vmatpush1.msra.mxu0 0.0
    %429 = vmatprep.subr.mxu0 0.0
    %430 = vmatpush1.msra.mxu0 0.0
    %431 = vmatprep.subr.mxu0 0.0
    %432 = vmatpush1.msra.mxu0 0.0
    %433 = vmatprep.subr.mxu0 0.0
    %434 = vmatpush1.msra.mxu0 0.0
    %435 = vmatprep.subr.mxu0 0.0
    %436 = vmatpush1.msra.mxu0 0.0
    %437 = vmatprep.subr.mxu0 0.0
    %438 = vmatpush1.msra.mxu0 0.0
    %439 = vmatprep.subr.mxu0 0.0
    %440 = vmatpush1.msra.mxu0 0.0
    %441 = vmatprep.subr.mxu0 0.0
    %442 = vmatpush1.msra.mxu0 0.0
    %443 = vmatprep.subr.mxu0 0.0
    %444 = vmatpush1.msra.mxu0 0.0
    %445 = vmatprep.subr.mxu0 0.0
    %446 = vmatpush1.msra.mxu0 0.0
    %447 = vmatprep.subr.mxu0 0.0
    %448 = vmatpush1.msra.mxu0 0.0
    %449 = vmatprep.subr.mxu0 0.0
    %450 = vmatpush1.msra.mxu0 0.0
    %451 = vmatprep.subr.mxu0 0.0
    %452 = vmatpush1.msra.mxu0 0.0
    %453 = vmatprep.subr.mxu0 0.0
    %454 = vmatpush1.msra.mxu0 0.0
    %455 = vmatprep.subr.mxu0 0.0
    %456 = vmatpush1.msra.mxu0 0.0
    %457 = vmatprep.subr.mxu0 0.0
    %458 = vmatpush1.msra.mxu0 %v422
    %459 = vmatprep.subr.mxu0 0.0
    %460 = vmatpush2.msra.mxu0 0.0
    %461 = vmatprep.subr.mxu0 0.0
    %462 = vmatpush2.msra.mxu0 0.0
    %463 = vmatprep.subr.mxu0 0.0
    %464 = vmatpush2.msra.mxu0 0.0
    %465 = vmatprep.subr.mxu0 0.0
    %466 = vmatpush2.msra.mxu0 0.0
    %467 = vmatprep.subr.mxu0 0.0
    %468 = vmatpush2.msra.mxu0 0.0
    %469 = vmatprep.subr.mxu0 0.0
    %470 = vmatpush2.msra.mxu0 0.0
    %471 = vmatprep.subr.mxu0 0.0
    %472 = vmatpush2.msra.mxu0 0.0
    %473 = vmatprep.subr.mxu0 0.0
    %474 = vmatpush2.msra.mxu0 0.0
    %475 = vmatprep.subr.mxu0 0.0
    %476 = vmatpush2.msra.mxu0 0.0
    %477 = vmatprep.subr.mxu0 0.0
    %478 = vmatpush2.msra.mxu0 0.0
    %479 = vmatprep.subr.mxu0 0.0
    %480 = vmatpush2.msra.mxu0 0.0
    %481 = vmatprep.subr.mxu0 0.0
    %482 = vmatpush2.msra.mxu0 0.0
    %483 = vmatprep.subr.mxu0 0.0
    %484 = vmatpush2.msra.mxu0 0.0
    %485 = vmatprep.subr.mxu0 0.0
    %486 = vmatpush2.msra.mxu0 0.0
    %487 = vmatprep.subr.mxu0 0.0
    %488 = vmatpush2.msra.mxu0 0.0
    %489 = vmatprep.subr.mxu0 0.0
    %490 = vmatpush2.msra.mxu0 0.0
    %491 = vmatprep.mubr.f32.mxu0 0.0
    %492 = vmatmul.mubr.f32.gmra.mxu0 %v425
    %v493 = vpop.f32.mrf.mxu0
    %v494 = vadd.f32 0.0, %v493
    %v495 = vpop.f32.mrf.mxu0
    %496 = vdwg.mxu0
    %497 = vrot.lane.b32.xlu0 %v143, 112
    %v498 = vpop.permute.xlu0 %497
    %499 = vrot.lane.b32.xlu0 %v143, 80
    %v500 = vpop.permute.xlu0 %499
    %v501 = vsel %vm154, %v498, 0
    %v503 = vsel %vm154, %v500, 0
    %505 = vmatprep.subr.mxu0 0.0
    %506 = vmatpush1.xpose.msra.mxu0 0.0
    %507 = vmatprep.subr.mxu0 0.0
    %508 = vmatpush1.xpose.msra.mxu0 0.0
    %509 = vmatprep.subr.mxu0 0.0
    %510 = vmatpush1.xpose.msra.mxu0 0.0
    %511 = vmatprep.subr.mxu0 0.0
    %512 = vmatpush1.xpose.msra.mxu0 0.0
    %513 = vmatprep.subr.mxu0 0.0
    %514 = vmatpush1.xpose.msra.mxu0 0.0
    %515 = vmatprep.subr.mxu0 0.0
    %516 = vmatpush1.xpose.msra.mxu0 0.0
    %517 = vmatprep.subr.mxu0 0.0
    %518 = vmatpush1.xpose.msra.mxu0 0.0
    %519 = vmatprep.subr.mxu0 0.0
    %520 = vmatpush1.xpose.msra.mxu0 0.0
    %521 = vmatprep.subr.mxu0 0.0
    %522 = vmatpush1.xpose.msra.mxu0 0.0
    %523 = vmatprep.subr.mxu0 0.0
    %524 = vmatpush1.xpose.msra.mxu0 0.0
    %525 = vmatprep.subr.mxu0 0.0
    %526 = vmatpush1.xpose.msra.mxu0 0.0
    %527 = vmatprep.subr.mxu0 0.0
    %528 = vmatpush1.xpose.msra.mxu0 0.0
    %529 = vmatprep.subr.mxu0 0.0
    %530 = vmatpush1.xpose.msra.mxu0 0.0
    %531 = vmatprep.subr.mxu0 0.0
    %532 = vmatpush1.xpose.msra.mxu0 0.0
    %533 = vmatprep.subr.mxu0 0.0
    %534 = vmatpush1.xpose.msra.mxu0 0.0
    %535 = vmatprep.subr.mxu0 0.0
    %536 = vmatpush1.xpose.msra.mxu0 %v503
    %537 = vmatprep.subr.mxu0 0.0
    %538 = vmatpush2.xpose.msra.mxu0 0.0
    %539 = vmatprep.subr.mxu0 0.0
    %540 = vmatpush2.xpose.msra.mxu0 0.0
    %541 = vmatprep.subr.mxu0 0.0
    %542 = vmatpush2.xpose.msra.mxu0 0.0
    %543 = vmatprep.subr.mxu0 0.0
    %544 = vmatpush2.xpose.msra.mxu0 0.0
    %545 = vmatprep.subr.mxu0 0.0
    %546 = vmatpush2.xpose.msra.mxu0 0.0
    %547 = vmatprep.subr.mxu0 0.0
    %548 = vmatpush2.xpose.msra.mxu0 0.0
    %549 = vmatprep.subr.mxu0 0.0
    %550 = vmatpush2.xpose.msra.mxu0 0.0
    %551 = vmatprep.subr.mxu0 0.0
    %552 = vmatpush2.xpose.msra.mxu0 0.0
    %553 = vmatprep.subr.mxu0 0.0
    %554 = vmatpush2.xpose.msra.mxu0 0.0
    %555 = vmatprep.subr.mxu0 0.0
    %556 = vmatpush2.xpose.msra.mxu0 0.0
    %557 = vmatprep.subr.mxu0 0.0
    %558 = vmatpush2.xpose.msra.mxu0 0.0
    %559 = vmatprep.subr.mxu0 0.0
    %560 = vmatpush2.xpose.msra.mxu0 0.0
    %561 = vmatprep.subr.mxu0 0.0
    %562 = vmatpush2.xpose.msra.mxu0 0.0
    %563 = vmatprep.subr.mxu0 0.0
    %564 = vmatpush2.xpose.msra.mxu0 0.0
    %565 = vmatprep.subr.mxu0 0.0
    %566 = vmatpush2.xpose.msra.mxu0 0.0
    %567 = vmatprep.subr.mxu0 0.0
    %568 = vmatpush2.xpose.msra.mxu0 0.0
    %569 = vmatprep.mubr.f32.mxu0 0.0
    %570 = vmatmul.mubr.f32.gmra.mxu0 %v501
    %v571 = vpop.f32.mrf.mxu0
    %v572 = vadd.f32 0.0, %v571
    %v573 = vpop.f32.mrf.mxu0
    %574 = vdwg.mxu0
    %575 = vrot.lane.b32.xlu0 %v148, 112
    %v576 = vpop.permute.xlu0 %575
    %577 = vrot.lane.b32.xlu0 %v148, 80
    %v578 = vpop.permute.xlu0 %577
    %v579 = vsel %vm154, %v576, 0
    %v581 = vsel %vm154, %v578, 0
    %583 = vmatprep.subr.mxu0 0.0
    %584 = vmatpush1.xpose.msra.mxu0 0.0
    %585 = vmatprep.subr.mxu0 0.0
    %586 = vmatpush1.xpose.msra.mxu0 0.0
    %587 = vmatprep.subr.mxu0 0.0
    %588 = vmatpush1.xpose.msra.mxu0 0.0
    %589 = vmatprep.subr.mxu0 0.0
    %590 = vmatpush1.xpose.msra.mxu0 0.0
    %591 = vmatprep.subr.mxu0 0.0
    %592 = vmatpush1.xpose.msra.mxu0 0.0
    %593 = vmatprep.subr.mxu0 0.0
    %594 = vmatpush1.xpose.msra.mxu0 0.0
    %595 = vmatprep.subr.mxu0 0.0
    %596 = vmatpush1.xpose.msra.mxu0 0.0
    %597 = vmatprep.subr.mxu0 0.0
    %598 = vmatpush1.xpose.msra.mxu0 0.0
    %599 = vmatprep.subr.mxu0 0.0
    %600 = vmatpush1.xpose.msra.mxu0 0.0
    %601 = vmatprep.subr.mxu0 0.0
    %602 = vmatpush1.xpose.msra.mxu0 0.0
    %603 = vmatprep.subr.mxu0 0.0
    %604 = vmatpush1.xpose.msra.mxu0 0.0
    %605 = vmatprep.subr.mxu0 0.0
    %606 = vmatpush1.xpose.msra.mxu0 0.0
    %607 = vmatprep.subr.mxu0 0.0
    %608 = vmatpush1.xpose.msra.mxu0 0.0
    %609 = vmatprep.subr.mxu0 0.0
    %610 = vmatpush1.xpose.msra.mxu0 0.0
    %611 = vmatprep.subr.mxu0 0.0
    %612 = vmatpush1.xpose.msra.mxu0 0.0
    %613 = vmatprep.subr.mxu0 0.0
    %614 = vmatpush1.xpose.msra.mxu0 %v581
    %615 = vmatprep.subr.mxu0 0.0
    %616 = vmatpush2.xpose.msra.mxu0 0.0
    %617 = vmatprep.subr.mxu0 0.0
    %618 = vmatpush2.xpose.msra.mxu0 0.0
    %619 = vmatprep.subr.mxu0 0.0
    %620 = vmatpush2.xpose.msra.mxu0 0.0
    %621 = vmatprep.subr.mxu0 0.0
    %622 = vmatpush2.xpose.msra.mxu0 0.0
    %623 = vmatprep.subr.mxu0 0.0
    %624 = vmatpush2.xpose.msra.mxu0 0.0
    %625 = vmatprep.subr.mxu0 0.0
    %626 = vmatpush2.xpose.msra.mxu0 0.0
    %627 = vmatprep.subr.mxu0 0.0
    %628 = vmatpush2.xpose.msra.mxu0 0.0
    %629 = vmatprep.subr.mxu0 0.0
    %630 = vmatpush2.xpose.msra.mxu0 0.0
    %631 = vmatprep.subr.mxu0 0.0
    %632 = vmatpush2.xpose.msra.mxu0 0.0
    %633 = vmatprep.subr.mxu0 0.0
    %634 = vmatpush2.xpose.msra.mxu0 0.0
    %635 = vmatprep.subr.mxu0 0.0
    %636 = vmatpush2.xpose.msra.mxu0 0.0
    %637 = vmatprep.subr.mxu0 0.0
    %638 = vmatpush2.xpose.msra.mxu0 0.0
    %639 = vmatprep.subr.mxu0 0.0
    %640 = vmatpush2.xpose.msra.mxu0 0.0
    %641 = vmatprep.subr.mxu0 0.0
    %642 = vmatpush2.xpose.msra.mxu0 0.0
    %643 = vmatprep.subr.mxu0 0.0
    %644 = vmatpush2.xpose.msra.mxu0 0.0
    %645 = vmatprep.subr.mxu0 0.0
    %646 = vmatpush2.xpose.msra.mxu0 0.0
    %647 = vmatprep.mubr.f32.mxu0 0.0
    %648 = vmatmul.mubr.f32.gmra.mxu0 %v579
    %v649 = vpop.f32.mrf.mxu0
    %v650 = vadd.f32 0.0, %v649
    %v651 = vpop.f32.mrf.mxu0
    %652 = vdwg.mxu0
    %v653 = vmul.f32 %v572, 0.25
    %v654 = vmul.f32 %v650, 0.25
    %v655 = vadd.f32 %v653, %v313
    %v656 = vadd.f32 %v654, %v317
    %v657 = vsel %vm322, %v655, -inf
    %658 = vmax.xlane.f32.xlu0 %v657
    %v659 = vpop.xlane.xlu0 %658
    %v660 = vsel %vm322, %v656, -inf
    %661 = vmax.xlane.f32.xlu0 %v660
    %v662 = vpop.xlane.xlu0 %661
    %v663 = vsub.f32 %v655, %v659
    %v664 = vsub.f32 %v656, %v662
    %v665 = vmul.f32 %v663, 1.442695
    %v666 = vpow.pop %v665
    %v667 = vmul.f32 %v664, 1.442695
    %v668 = vpow.pop %v667
    %v669 = vsel %vm322, %v666, 0.0
    %670 = vadd.xlane.f32.xlu0 %v669
    %v671 = vpop.xlane.xlu0 %670
    %v672 = vsel %vm322, %v668, 0.0
    %673 = vadd.xlane.f32.xlu0 %v672
    %v674 = vpop.xlane.xlu0 %673
    %v675 = vrcp.pop %v671
    %v676 = vrcp.pop %v674
    %v677 = vmul.f32 %v666, %v675
    %v678 = vmul.f32 %v668, %v676
    %679 = vrot.lane.b32.xlu0 %v143, 48
    %v680 = vpop.permute.xlu0 %679
    %v683 = vsel %vm322, %v677, 0
    %685 = vmatprep.subr.mxu0 0.0
    %686 = vmatpush1.msra.mxu0 0.0
    %687 = vmatprep.subr.mxu0 0.0
    %688 = vmatpush1.msra.mxu0 0.0
    %689 = vmatprep.subr.mxu0 0.0
    %690 = vmatpush1.msra.mxu0 0.0
    %691 = vmatprep.subr.mxu0 0.0
    %692 = vmatpush1.msra.mxu0 0.0
    %693 = vmatprep.subr.mxu0 0.0
    %694 = vmatpush1.msra.mxu0 0.0
    %695 = vmatprep.subr.mxu0 0.0
    %696 = vmatpush1.msra.mxu0 0.0
    %697 = vmatprep.subr.mxu0 0.0
    %698 = vmatpush1.msra.mxu0 0.0
    %699 = vmatprep.subr.mxu0 0.0
    %700 = vmatpush1.msra.mxu0 0.0
    %701 = vmatprep.subr.mxu0 0.0
    %702 = vmatpush1.msra.mxu0 0.0
    %703 = vmatprep.subr.mxu0 0.0
    %704 = vmatpush1.msra.mxu0 0.0
    %705 = vmatprep.subr.mxu0 0.0
    %706 = vmatpush1.msra.mxu0 0.0
    %707 = vmatprep.subr.mxu0 0.0
    %708 = vmatpush1.msra.mxu0 0.0
    %709 = vmatprep.subr.mxu0 0.0
    %710 = vmatpush1.msra.mxu0 0.0
    %711 = vmatprep.subr.mxu0 0.0
    %712 = vmatpush1.msra.mxu0 0.0
    %713 = vmatprep.subr.mxu0 0.0
    %714 = vmatpush1.msra.mxu0 0.0
    %715 = vmatprep.subr.mxu0 0.0
    %716 = vmatpush1.msra.mxu0 %v680
    %717 = vmatprep.subr.mxu0 0.0
    %718 = vmatpush2.msra.mxu0 0.0
    %719 = vmatprep.subr.mxu0 0.0
    %720 = vmatpush2.msra.mxu0 0.0
    %721 = vmatprep.subr.mxu0 0.0
    %722 = vmatpush2.msra.mxu0 0.0
    %723 = vmatprep.subr.mxu0 0.0
    %724 = vmatpush2.msra.mxu0 0.0
    %725 = vmatprep.subr.mxu0 0.0
    %726 = vmatpush2.msra.mxu0 0.0
    %727 = vmatprep.subr.mxu0 0.0
    %728 = vmatpush2.msra.mxu0 0.0
    %729 = vmatprep.subr.mxu0 0.0
    %730 = vmatpush2.msra.mxu0 0.0
    %731 = vmatprep.subr.mxu0 0.0
    %732 = vmatpush2.msra.mxu0 0.0
    %733 = vmatprep.subr.mxu0 0.0
    %734 = vmatpush2.msra.mxu0 0.0
    %735 = vmatprep.subr.mxu0 0.0
    %736 = vmatpush2.msra.mxu0 0.0
    %737 = vmatprep.subr.mxu0 0.0
    %738 = vmatpush2.msra.mxu0 0.0
    %739 = vmatprep.subr.mxu0 0.0
    %740 = vmatpush2.msra.mxu0 0.0
    %741 = vmatprep.subr.mxu0 0.0
    %742 = vmatpush2.msra.mxu0 0.0
    %743 = vmatprep.subr.mxu0 0.0
    %744 = vmatpush2.msra.mxu0 0.0
    %745 = vmatprep.subr.mxu0 0.0
    %746 = vmatpush2.msra.mxu0 0.0
    %747 = vmatprep.subr.mxu0 0.0
    %748 = vmatpush2.msra.mxu0 0.0
    %749 = vmatprep.mubr.f32.mxu0 0.0
    %750 = vmatmul.mubr.f32.gmra.mxu0 %v683
    %v751 = vpop.f32.mrf.mxu0
    %v752 = vadd.f32 0.0, %v751
    %v753 = vpop.f32.mrf.mxu0
    %754 = vdwg.mxu0
    %755 = vrot.lane.b32.xlu0 %v148, 48
    %v756 = vpop.permute.xlu0 %755
    %v759 = vsel %vm322, %v678, 0
    %761 = vmatprep.subr.mxu0 0.0
    %762 = vmatpush1.msra.mxu0 0.0
    %763 = vmatprep.subr.mxu0 0.0
    %764 = vmatpush1.msra.mxu0 0.0
    %765 = vmatprep.subr.mxu0 0.0
    %766 = vmatpush1.msra.mxu0 0.0
    %767 = vmatprep.subr.mxu0 0.0
    %768 = vmatpush1.msra.mxu0 0.0
    %769 = vmatprep.subr.mxu0 0.0
    %770 = vmatpush1.msra.mxu0 0.0
    %771 = vmatprep.subr.mxu0 0.0
    %772 = vmatpush1.msra.mxu0 0.0
    %773 = vmatprep.subr.mxu0 0.0
    %774 = vmatpush1.msra.mxu0 0.0
    %775 = vmatprep.subr.mxu0 0.0
    %776 = vmatpush1.msra.mxu0 0.0
    %777 = vmatprep.subr.mxu0 0.0
    %778 = vmatpush1.msra.mxu0 0.0
    %779 = vmatprep.subr.mxu0 0.0
    %780 = vmatpush1.msra.mxu0 0.0
    %781 = vmatprep.subr.mxu0 0.0
    %782 = vmatpush1.msra.mxu0 0.0
    %783 = vmatprep.subr.mxu0 0.0
    %784 = vmatpush1.msra.mxu0 0.0
    %785 = vmatprep.subr.mxu0 0.0
    %786 = vmatpush1.msra.mxu0 0.0
    %787 = vmatprep.subr.mxu0 0.0
    %788 = vmatpush1.msra.mxu0 0.0
    %789 = vmatprep.subr.mxu0 0.0
    %790 = vmatpush1.msra.mxu0 0.0
    %791 = vmatprep.subr.mxu0 0.0
    %792 = vmatpush1.msra.mxu0 %v756
    %793 = vmatprep.subr.mxu0 0.0
    %794 = vmatpush2.msra.mxu0 0.0
    %795 = vmatprep.subr.mxu0 0.0
    %796 = vmatpush2.msra.mxu0 0.0
    %797 = vmatprep.subr.mxu0 0.0
    %798 = vmatpush2.msra.mxu0 0.0
    %799 = vmatprep.subr.mxu0 0.0
    %800 = vmatpush2.msra.mxu0 0.0
    %801 = vmatprep.subr.mxu0 0.0
    %802 = vmatpush2.msra.mxu0 0.0
    %803 = vmatprep.subr.mxu0 0.0
    %804 = vmatpush2.msra.mxu0 0.0
    %805 = vmatprep.subr.mxu0 0.0
    %806 = vmatpush2.msra.mxu0 0.0
    %807 = vmatprep.subr.mxu0 0.0
    %808 = vmatpush2.msra.mxu0 0.0
    %809 = vmatprep.subr.mxu0 0.0
    %810 = vmatpush2.msra.mxu0 0.0
    %811 = vmatprep.subr.mxu0 0.0
    %812 = vmatpush2.msra.mxu0 0.0
    %813 = vmatprep.subr.mxu0 0.0
    %814 = vmatpush2.msra.mxu0 0.0
    %815 = vmatprep.subr.mxu0 0.0
    %816 = vmatpush2.msra.mxu0 0.0
    %817 = vmatprep.subr.mxu0 0.0
    %818 = vmatpush2.msra.mxu0 0.0
    %819 = vmatprep.subr.mxu0 0.0
    %820 = vmatpush2.msra.mxu0 0.0
    %821 = vmatprep.subr.mxu0 0.0
    %822 = vmatpush2.msra.mxu0 0.0
    %823 = vmatprep.subr.mxu0 0.0
    %824 = vmatpush2.msra.mxu0 0.0
    %825 = vmatprep.mubr.f32.mxu0 0.0
    %826 = vmatmul.mubr.f32.gmra.mxu0 %v759
    %v827 = vpop.f32.mrf.mxu0
    %v828 = vadd.f32 0.0, %v827
    %v829 = vpop.f32.mrf.mxu0
    %830 = vdwg.mxu0
    %833 = vrot.lane.b32.xlu0 %v752, 16
    %v834 = vpop.permute.xlu0 %833
    %835 = vrot.lane.b32.xlu0 %v828, 16
    %v836 = vpop.permute.xlu0 %835
    %v839 = vsel %vm154, %v418, %v834
    %v840 = vsel %vm154, %v494, %v836
    %v841 = vld [vmem:[%s4] sm:$0xff]
    %v842 = vld [vmem:[%s4 + $0x8] sm:$0xff]
    %v843 = vld [vmem:[%s4 + $0x10] sm:$0xff]
    %v844 = vld [vmem:[%s4 + $0x18] sm:$0xff]
    %v845 = vld [vmem:[%s5] sm:$0x1]
    %v847 = vlaneseq
    %v848 = vshrl.u32 %v847, 7
    %v849 = vsub.s32 0, %v848
    %v850 = vrot.slane %v845, %v849
    %v853 = vsel %vm69, %v839, 0
    %v856 = vsel %vm69, %v840, 0
    %858 = vmatprep.subr.mxu0 0.0
    %859 = vmatpush1.msra.mxu0 0.0
    %860 = vmatprep.subr.mxu0 0.0
    %861 = vmatpush1.msra.mxu0 0.0
    %862 = vmatprep.subr.mxu0 0.0
    %863 = vmatpush1.msra.mxu0 0.0
    %864 = vmatprep.subr.mxu0 0.0
    %865 = vmatpush1.msra.mxu0 0.0
    %866 = vmatprep.subr.mxu0 0.0
    %867 = vmatpush1.msra.mxu0 0.0
    %868 = vmatprep.subr.mxu0 0.0
    %869 = vmatpush1.msra.mxu0 0.0
    %870 = vmatprep.subr.mxu0 0.0
    %871 = vmatpush1.msra.mxu0 0.0
    %872 = vmatprep.subr.mxu0 0.0
    %873 = vmatpush1.msra.mxu0 0.0
    %874 = vmatprep.subr.mxu0 0.0
    %875 = vmatpush1.msra.mxu0 0.0
    %876 = vmatprep.subr.mxu0 0.0
    %877 = vmatpush1.msra.mxu0 0.0
    %878 = vmatprep.subr.mxu0 0.0
    %879 = vmatpush1.msra.mxu0 0.0
    %880 = vmatprep.subr.mxu0 0.0
    %881 = vmatpush1.msra.mxu0 0.0
    %882 = vmatprep.subr.mxu0 0.0
    %883 = vmatpush1.msra.mxu0 %v844
    %884 = vmatprep.subr.mxu0 0.0
    %885 = vmatpush1.msra.mxu0 %v843
    %886 = vmatprep.subr.mxu0 0.0
    %887 = vmatpush1.msra.mxu0 %v842
    %888 = vmatprep.subr.mxu0 0.0
    %889 = vmatpush1.msra.mxu0 %v841
    %890 = vmatprep.subr.mxu0 0.0
    %891 = vmatpush2.msra.mxu0 0.0
    %892 = vmatprep.subr.mxu0 0.0
    %893 = vmatpush2.msra.mxu0 0.0
    %894 = vmatprep.subr.mxu0 0.0
    %895 = vmatpush2.msra.mxu0 0.0
    %896 = vmatprep.subr.mxu0 0.0
    %897 = vmatpush2.msra.mxu0 0.0
    %898 = vmatprep.subr.mxu0 0.0
    %899 = vmatpush2.msra.mxu0 0.0
    %900 = vmatprep.subr.mxu0 0.0
    %901 = vmatpush2.msra.mxu0 0.0
    %902 = vmatprep.subr.mxu0 0.0
    %903 = vmatpush2.msra.mxu0 0.0
    %904 = vmatprep.subr.mxu0 0.0
    %905 = vmatpush2.msra.mxu0 0.0
    %906 = vmatprep.subr.mxu0 0.0
    %907 = vmatpush2.msra.mxu0 0.0
    %908 = vmatprep.subr.mxu0 0.0
    %909 = vmatpush2.msra.mxu0 0.0
    %910 = vmatprep.subr.mxu0 0.0
    %911 = vmatpush2.msra.mxu0 0.0
    %912 = vmatprep.subr.mxu0 0.0
    %913 = vmatpush2.msra.mxu0 0.0
    %914 = vmatprep.subr.mxu0 0.0
    %915 = vmatpush2.msra.mxu0 0.0
    %916 = vmatprep.subr.mxu0 0.0
    %917 = vmatpush2.msra.mxu0 0.0
    %918 = vmatprep.subr.mxu0 0.0
    %919 = vmatpush2.msra.mxu0 0.0
    %920 = vmatprep.subr.mxu0 0.0
    %921 = vmatpush2.msra.mxu0 0.0
    %922 = vmatprep.mubr.f32.mxu0 0.0
    %923 = vmatmul.mubr.f32.gmra.mxu0 %v853
    %v924 = vpop.f32.mrf.mxu0
    %v925 = vadd.f32 %v850, %v924
    %v926 = vpop.f32.mrf.mxu0
    %927 = vmatprep.mubr.f32.mxu0 0.0
    %928 = vmatmul.mubr.f32.gmra.mxu0 %v856
    %v929 = vpop.f32.mrf.mxu0
    %v930 = vadd.f32 %v850, %v929
    %v931 = vpop.f32.mrf.mxu0
    %932 = vdwg.mxu0
    %v933 = vadd.f32 %v54, %v925
    %v934 = vadd.f32 %v55, %v930
    %v935 = vsel %vm69, %v933, 0.0
    %936 = vadd.xlane.f32.xlu0 %v935
    %v937 = vpop.xlane.xlu0 %936
    %v938 = vsel %vm69, %v934, 0.0
    %939 = vadd.xlane.f32.xlu0 %v938
    %v940 = vpop.xlane.xlu0 %939
    %v941 = vrcp.pop 32.0
    %v942 = vmul.f32 %v937, %v941
    %v943 = vmul.f32 %v940, %v941
    %v944 = vsub.f32 %v933, %v942
    %v945 = vsub.f32 %v934, %v943
    %v946 = vmul.f32 %v944, %v944
    %v947 = vmul.f32 %v945, %v945
    %v948 = vsel %vm69, %v946, 0.0
    %949 = vadd.xlane.f32.xlu0 %v948
    %v950 = vpop.xlane.xlu0 %949
    %v951 = vsel %vm69, %v947, 0.0
    %952 = vadd.xlane.f32.xlu0 %v951
    %v953 = vpop.xlane.xlu0 %952
    %v954 = vmul.f32 %v950, %v941
    %v955 = vmul.f32 %v953, %v941
    %v956 = vadd.f32 %v954, 1e-12
    %v957 = vadd.f32 %v955, 1e-12
    %v958 = vrsqrt.pop %v956
    %v959 = vrsqrt.pop %v957
    %v960 = vmul.f32 %v944, %v958
    %v961 = vmul.f32 %v945, %v959
    %v962 = vld [vmem:[%s6] sm:$0x1]
    %v964 = vlaneseq
    %v965 = vshrl.u32 %v964, 7
    %v966 = vsub.s32 0, %v965
    %v967 = vrot.slane %v962, %v966
    %v969 = vmul.f32 %v960, %v967
    %v970 = vmul.f32 %v961, %v967
    %v971 = vld [vmem:[%s7] sm:$0x1]
    %v973 = vlaneseq
    %v974 = vshrl.u32 %v973, 7
    %v975 = vsub.s32 0, %v974
    %v976 = vrot.slane %v971, %v975
    %v978 = vadd.f32 %v969, %v976
    %v979 = vadd.f32 %v970, %v976
    %v980 = vld [vmem:[%s8] sm:$0xff]
    %v981 = vld [vmem:[%s8 + $0x8] sm:$0xff]
    %v982 = vld [vmem:[%s8 + $0x10] sm:$0xff]
    %v983 = vld [vmem:[%s8 + $0x18] sm:$0xff]
    %v984 = vld [vmem:[%s9] sm:$0x1]
    %v986 = vlaneseq
    %v987 = vshrl.u32 %v986, 7
    %v988 = vsub.s32 0, %v987
    %v989 = vrot.slane %v984, %v988
    %v992 = vsel %vm69, %v978, 0
    %v995 = vsel %vm69, %v979, 0
    %997 = vmatprep.subr.mxu0 0.0
    %998 = vmatpush1.msra.mxu0 0.0
    %999 = vmatprep.subr.mxu0 0.0
    %1000 = vmatpush1.msra.mxu0 0.0
    %1001 = vmatprep.subr.mxu0 0.0
    %1002 = vmatpush1.msra.mxu0 0.0
    %1003 = vmatprep.subr.mxu0 0.0
    %1004 = vmatpush1.msra.mxu0 0.0
    %1005 = vmatprep.subr.mxu0 0.0
    %1006 = vmatpush1.msra.mxu0 0.0
    %1007 = vmatprep.subr.mxu0 0.0
    %1008 = vmatpush1.msra.mxu0 0.0
    %1009 = vmatprep.subr.mxu0 0.0
    %1010 = vmatpush1.msra.mxu0 0.0
    %1011 = vmatprep.subr.mxu0 0.0
    %1012 = vmatpush1.msra.mxu0 0.0
    %1013 = vmatprep.subr.mxu0 0.0
    %1014 = vmatpush1.msra.mxu0 0.0
    %1015 = vmatprep.subr.mxu0 0.0
    %1016 = vmatpush1.msra.mxu0 0.0
    %1017 = vmatprep.subr.mxu0 0.0
    %1018 = vmatpush1.msra.mxu0 0.0
    %1019 = vmatprep.subr.mxu0 0.0
    %1020 = vmatpush1.msra.mxu0 0.0
    %1021 = vmatprep.subr.mxu0 0.0
    %1022 = vmatpush1.msra.mxu0 %v983
    %1023 = vmatprep.subr.mxu0 0.0
    %1024 = vmatpush1.msra.mxu0 %v982
    %1025 = vmatprep.subr.mxu0 0.0
    %1026 = vmatpush1.msra.mxu0 %v981
    %1027 = vmatprep.subr.mxu0 0.0
    %1028 = vmatpush1.msra.mxu0 %v980
    %1029 = vmatprep.subr.mxu0 0.0
    %1030 = vmatpush2.msra.mxu0 0.0
    %1031 = vmatprep.subr.mxu0 0.0
    %1032 = vmatpush2.msra.mxu0 0.0
    %1033 = vmatprep.subr.mxu0 0.0
    %1034 = vmatpush2.msra.mxu0 0.0
    %1035 = vmatprep.subr.mxu0 0.0
    %1036 = vmatpush2.msra.mxu0 0.0
    %1037 = vmatprep.subr.mxu0 0.0
    %1038 = vmatpush2.msra.mxu0 0.0
    %1039 = vmatprep.subr.mxu0 0.0
    %1040 = vmatpush2.msra.mxu0 0.0
    %1041 = vmatprep.subr.mxu0 0.0
    %1042 = vmatpush2.msra.mxu0 0.0
    %1043 = vmatprep.subr.mxu0 0.0
    %1044 = vmatpush2.msra.mxu0 0.0
    %1045 = vmatprep.subr.mxu0 0.0
    %1046 = vmatpush2.msra.mxu0 0.0
    %1047 = vmatprep.subr.mxu0 0.0
    %1048 = vmatpush2.msra.mxu0 0.0
    %1049 = vmatprep.subr.mxu0 0.0
    %1050 = vmatpush2.msra.mxu0 0.0
    %1051 = vmatprep.subr.mxu0 0.0
    %1052 = vmatpush2.msra.mxu0 0.0
    %1053 = vmatprep.subr.mxu0 0.0
    %1054 = vmatpush2.msra.mxu0 0.0
    %1055 = vmatprep.subr.mxu0 0.0
    %1056 = vmatpush2.msra.mxu0 0.0
    %1057 = vmatprep.subr.mxu0 0.0
    %1058 = vmatpush2.msra.mxu0 0.0
    %1059 = vmatprep.subr.mxu0 0.0
    %1060 = vmatpush2.msra.mxu0 0.0
    %1061 = vmatprep.mubr.f32.mxu0 0.0
    %1062 = vmatmul.mubr.f32.gmra.mxu0 %v992
    %v1063 = vpop.f32.mrf.mxu0
    %v1064 = vadd.f32 %v989, %v1063
    %v1065 = vpop.f32.mrf.mxu0
    %1066 = vmatprep.mubr.f32.mxu0 0.0
    %1067 = vmatmul.mubr.f32.gmra.mxu0 %v995
    %v1068 = vpop.f32.mrf.mxu0
    %v1069 = vadd.f32 %v989, %v1068
    %v1070 = vpop.f32.mrf.mxu0
    %1071 = vdwg.mxu0
    %v1072 = vmul.f32 %v1064, %v1064
    %v1073 = vmul.f32 %v1069, %v1069
    %v1074 = vmul.f32 %v1064, %v1072
    %v1075 = vmul.f32 %v1069, %v1073
    %v1076 = vmul.f32 %v1074, 0.044715
    %v1077 = vmul.f32 %v1075, 0.044715
    %v1078 = vadd.f32 %v1064, %v1076
    %v1079 = vadd.f32 %v1069, %v1077
    %v1080 = vmul.f32 %v1078, 0.7978846
    %v1081 = vmul.f32 %v1079, 0.7978846
    %v1082 = vtanh.pop %v1080
    %v1083 = vtanh.pop %v1081
    %v1084 = vadd.f32 %v1082, 1.0
    %v1085 = vadd.f32 %v1083, 1.0
    %v1086 = vmul.f32 %v1084, 0.5
    %v1087 = vmul.f32 %v1085, 0.5
    %v1088 = vmul.f32 %v1064, %v1086
    %v1089 = vmul.f32 %v1069, %v1087
    %v1090 = vld [vmem:[%s10] sm:$0xff]
    %v1091 = vld [vmem:[%s10 + $0x8] sm:$0xff]
    %v1092 = vld [vmem:[%s10 + $0x10] sm:$0xff]
    %v1093 = vld [vmem:[%s10 + $0x18] sm:$0xff]
    %v1094 = vld [vmem:[%s10 + $0x20] sm:$0xff]
    %v1095 = vld [vmem:[%s10 + $0x28] sm:$0xff]
    %v1096 = vld [vmem:[%s10 + $0x30] sm:$0xff]
    %v1097 = vld [vmem:[%s10 + $0x38] sm:$0xff]
    %v1098 = vld [vmem:[%s11] sm:$0x1]
    %v1100 = vlaneseq
    %v1101 = vshrl.u32 %v1100, 7
    %v1102 = vsub.s32 0, %v1101
    %v1103 = vrot.slane %v1098, %v1102
    %vm1105 = vcmask 523264
    %v1107 = vsel %vm1105, %v1088, 0
    %v1110 = vsel %vm1105, %v1089, 0
    %1112 = vmatprep.subr.mxu0 0.0
    %1113 = vmatpush1.msra.mxu0 0.0
    %1114 = vmatprep.subr.mxu0 0.0
    %1115 = vmatpush1.msra.mxu0 0.0
    %1116 = vmatprep.subr.mxu0 0.0
    %1117 = vmatpush1.msra.mxu0 0.0
    %1118 = vmatprep.subr.mxu0 0.0
    %1119 = vmatpush1.msra.mxu0 0.0
    %1120 = vmatprep.subr.mxu0 0.0
    %1121 = vmatpush1.msra.mxu0 0.0
    %1122 = vmatprep.subr.mxu0 0.0
    %1123 = vmatpush1.msra.mxu0 0.0
    %1124 = vmatprep.subr.mxu0 0.0
    %1125 = vmatpush1.msra.mxu0 0.0
    %1126 = vmatprep.subr.mxu0 0.0
    %1127 = vmatpush1.msra.mxu0 0.0
    %1128 = vmatprep.subr.mxu0 0.0
    %1129 = vmatpush1.msra.mxu0 %v1097
    %1130 = vmatprep.subr.mxu0 0.0
    %1131 = vmatpush1.msra.mxu0 %v1096
    %1132 = vmatprep.subr.mxu0 0.0
    %1133 = vmatpush1.msra.mxu0 %v1095
    %1134 = vmatprep.subr.mxu0 0.0
    %1135 = vmatpush1.msra.mxu0 %v1094
    %1136 = vmatprep.subr.mxu0 0.0
    %1137 = vmatpush1.msra.mxu0 %v1093
    %1138 = vmatprep.subr.mxu0 0.0
    %1139 = vmatpush1.msra.mxu0 %v1092
    %1140 = vmatprep.subr.mxu0 0.0
    %1141 = vmatpush1.msra.mxu0 %v1091
    %1142 = vmatprep.subr.mxu0 0.0
    %1143 = vmatpush1.msra.mxu0 %v1090
    %1144 = vmatprep.subr.mxu0 0.0
    %1145 = vmatpush2.msra.mxu0 0.0
    %1146 = vmatprep.subr.mxu0 0.0
    %1147 = vmatpush2.msra.mxu0 0.0
    %1148 = vmatprep.subr.mxu0 0.0
    %1149 = vmatpush2.msra.mxu0 0.0
    %1150 = vmatprep.subr.mxu0 0.0
    %1151 = vmatpush2.msra.mxu0 0.0
    %1152 = vmatprep.subr.mxu0 0.0
    %1153 = vmatpush2.msra.mxu0 0.0
    %1154 = vmatprep.subr.mxu0 0.0
    %1155 = vmatpush2.msra.mxu0 0.0
    %1156 = vmatprep.subr.mxu0 0.0
    %1157 = vmatpush2.msra.mxu0 0.0
    %1158 = vmatprep.subr.mxu0 0.0
    %1159 = vmatpush2.msra.mxu0 0.0
    %1160 = vmatprep.subr.mxu0 0.0
    %1161 = vmatpush2.msra.mxu0 0.0
    %1162 = vmatprep.subr.mxu0 0.0
    %1163 = vmatpush2.msra.mxu0 0.0
    %1164 = vmatprep.subr.mxu0 0.0
    %1165 = vmatpush2.msra.mxu0 0.0
    %1166 = vmatprep.subr.mxu0 0.0
    %1167 = vmatpush2.msra.mxu0 0.0
    %1168 = vmatprep.subr.mxu0 0.0
    %1169 = vmatpush2.msra.mxu0 0.0
    %1170 = vmatprep.subr.mxu0 0.0
    %1171 = vmatpush2.msra.mxu0 0.0
    %1172 = vmatprep.subr.mxu0 0.0
    %1173 = vmatpush2.msra.mxu0 0.0
    %1174 = vmatprep.subr.mxu0 0.0
    %1175 = vmatpush2.msra.mxu0 0.0
    %1176 = vmatprep.mubr.f32.mxu0 0.0
    %1177 = vmatmul.mubr.f32.gmra.mxu0 %v1107
    %v1178 = vpop.f32.mrf.mxu0
    %v1179 = vadd.f32 %v1103, %v1178
    %v1180 = vpop.f32.mrf.mxu0
    %1181 = vmatprep.mubr.f32.mxu0 0.0
    %1182 = vmatmul.mubr.f32.gmra.mxu0 %v1110
    %v1183 = vpop.f32.mrf.mxu0
    %v1184 = vadd.f32 %v1103, %v1183
    %v1185 = vpop.f32.mrf.mxu0
    %1186 = vdwg.mxu0
    %v1187 = vadd.f32 %v978, %v1179
    %v1188 = vadd.f32 %v979, %v1184
    %v1189 = vsel %vm69, %v1187, 0.0
    %1190 = vadd.xlane.f32.xlu0 %v1189
    %v1191 = vpop.xlane.xlu0 %1190
    %v1192 = vsel %vm69, %v1188, 0.0
    %1193 = vadd.xlane.f32.xlu0 %v1192
    %v1194 = vpop.xlane.xlu0 %1193
    %v1195 = vmul.f32 %v1191, %v941
    %v1196 = vmul.f32 %v1194, %v941
    %v1197 = vsub.f32 %v1187, %v1195
    %v1198 = vsub.f32 %v1188, %v1196
    %v1199 = vmul.f32 %v1197, %v1197
    %v1200 = vmul.f32 %v1198, %v1198
    %v1201 = vsel %vm69, %v1199, 0.0
    %1202 = vadd.xlane.f32.xlu0 %v1201
    %v1203 = vpop.xlane.xlu0 %1202
    %v1204 = vsel %vm69, %v1200, 0.0
    %1205 = vadd.xlane.f32.xlu0 %v1204
    %v1206 = vpop.xlane.xlu0 %1205
    %v1207 = vmul.f32 %v1203, %v941
    %v1208 = vmul.f32 %v1206, %v941
    %v1209 = vadd.f32 %v1207, 1e-12
    %v1210 = vadd.f32 %v1208, 1e-12
    %v1211 = vrsqrt.pop %v1209
    %v1212 = vrsqrt.pop %v1210
    %v1213 = vmul.f32 %v1197, %v1211
    %v1214 = vmul.f32 %v1198, %v1212
    %v1215 = vld [vmem:[%s12] sm:$0x1]
    %v1217 = vlaneseq
    %v1218 = vshrl.u32 %v1217, 7
    %v1219 = vsub.s32 0, %v1218
    %v1220 = vrot.slane %v1215, %v1219
    %v1222 = vmul.f32 %v1213, %v1220
    %v1223 = vmul.f32 %v1214, %v1220
    %v1224 = vld [vmem:[%s13] sm:$0x1]
    %v1226 = vlaneseq
    %v1227 = vshrl.u32 %v1226, 7
    %v1228 = vsub.s32 0, %v1227
    %v1229 = vrot.slane %v1224, %v1228
    %v1231 = vadd.f32 %v1222, %v1229
    %v1232 = vadd.f32 %v1223, %v1229
    %s1233 = scalar_lea.vmem %s2, 32
    %v1234 = vld [vmem:[%s1233] sm:$0xff]
    %v1235 = vld [vmem:[%s1233 + $0x8] sm:$0xff]
    %v1236 = vld [vmem:[%s1233 + $0x10] sm:$0xff]
    %v1237 = vld [vmem:[%s1233 + $0x18] sm:$0xff]
    %s1238 = scalar_lea.vmem %s3, 1
    %v1239 = vld [vmem:[%s1238] sm:$0x1]
    %v1241 = vlaneseq
    %v1242 = vshrl.u32 %v1241, 7
    %v1243 = vsub.s32 0, %v1242
    %v1244 = vrot.slane %v1239, %v1243
    %v1247 = vsel %vm69, %v1231, 0
    %v1250 = vsel %vm69, %v1232, 0
    %1252 = vmatprep.subr.mxu0 0.0
    %1253 = vmatpush1.msra.mxu0 0.0
    %1254 = vmatprep.subr.mxu0 0.0
    %1255 = vmatpush1.msra.mxu0 0.0
    %1256 = vmatprep.subr.mxu0 0.0
    %1257 = vmatpush1.msra.mxu0 0.0
    %1258 = vmatprep.subr.mxu0 0.0
    %1259 = vmatpush1.msra.mxu0 0.0
    %1260 = vmatprep.subr.mxu0 0.0
    %1261 = vmatpush1.msra.mxu0 0.0
    %1262 = vmatprep.subr.mxu0 0.0
    %1263 = vmatpush1.msra.mxu0 0.0
    %1264 = vmatprep.subr.mxu0 0.0
    %1265 = vmatpush1.msra.mxu0 0.0
    %1266 = vmatprep.subr.mxu0 0.0
    %1267 = vmatpush1.msra.mxu0 0.0
    %1268 = vmatprep.subr.mxu0 0.0
    %1269 = vmatpush1.msra.mxu0 0.0
    %1270 = vmatprep.subr.mxu0 0.0
    %1271 = vmatpush1.msra.mxu0 0.0
    %1272 = vmatprep.subr.mxu0 0.0
    %1273 = vmatpush1.msra.mxu0 0.0
    %1274 = vmatprep.subr.mxu0 0.0
    %1275 = vmatpush1.msra.mxu0 0.0
    %1276 = vmatprep.subr.mxu0 0.0
    %1277 = vmatpush1.msra.mxu0 %v1237
    %1278 = vmatprep.subr.mxu0 0.0
    %1279 = vmatpush1.msra.mxu0 %v1236
    %1280 = vmatprep.subr.mxu0 0.0
    %1281 = vmatpush1.msra.mxu0 %v1235
    %1282 = vmatprep.subr.mxu0 0.0
    %1283 = vmatpush1.msra.mxu0 %v1234
    %1284 = vmatprep.subr.mxu0 0.0
    %1285 = vmatpush2.msra.mxu0 0.0
    %1286 = vmatprep.subr.mxu0 0.0
    %1287 = vmatpush2.msra.mxu0 0.0
    %1288 = vmatprep.subr.mxu0 0.0
    %1289 = vmatpush2.msra.mxu0 0.0
    %1290 = vmatprep.subr.mxu0 0.0
    %1291 = vmatpush2.msra.mxu0 0.0
    %1292 = vmatprep.subr.mxu0 0.0
    %1293 = vmatpush2.msra.mxu0 0.0
    %1294 = vmatprep.subr.mxu0 0.0
    %1295 = vmatpush2.msra.mxu0 0.0
    %1296 = vmatprep.subr.mxu0 0.0
    %1297 = vmatpush2.msra.mxu0 0.0
    %1298 = vmatprep.subr.mxu0 0.0
    %1299 = vmatpush2.msra.mxu0 0.0
    %1300 = vmatprep.subr.mxu0 0.0
    %1301 = vmatpush2.msra.mxu0 0.0
    %1302 = vmatprep.subr.mxu0 0.0
    %1303 = vmatpush2.msra.mxu0 0.0
    %1304 = vmatprep.subr.mxu0 0.0
    %1305 = vmatpush2.msra.mxu0 0.0
    %1306 = vmatprep.subr.mxu0 0.0
    %1307 = vmatpush2.msra.mxu0 0.0
    %1308 = vmatprep.subr.mxu0 0.0
    %1309 = vmatpush2.msra.mxu0 0.0
    %1310 = vmatprep.subr.mxu0 0.0
    %1311 = vmatpush2.msra.mxu0 0.0
    %1312 = vmatprep.subr.mxu0 0.0
    %1313 = vmatpush2.msra.mxu0 0.0
    %1314 = vmatprep.subr.mxu0 0.0
    %1315 = vmatpush2.msra.mxu0 0.0
    %1316 = vmatprep.mubr.f32.mxu0 0.0
    %1317 = vmatmul.mubr.f32.gmra.mxu0 %v1247
    %v1318 = vpop.f32.mrf.mxu0
    %v1319 = vadd.f32 %v1244, %v1318
    %v1320 = vpop.f32.mrf.mxu0
    %1321 = vmatprep.mubr.f32.mxu0 0.0
    %1322 = vmatmul.mubr.f32.gmra.mxu0 %v1250
    %v1323 = vpop.f32.mrf.mxu0
    %v1324 = vadd.f32 %v1244, %v1323
    %v1325 = vpop.f32.mrf.mxu0
    %1326 = vdwg.mxu0
    %1328 = vrot.lane.b32.xlu0 %v1319, 96
    %v1329 = vpop.permute.xlu0 %1328
    %v1330 = vsel %vm154, %v1319, 0
    %v1332 = vsel %vm154, %v1329, 0
    %1334 = vmatprep.subr.mxu0 0.0
    %1335 = vmatpush1.xpose.msra.mxu0 0.0
    %1336 = vmatprep.subr.mxu0 0.0
    %1337 = vmatpush1.xpose.msra.mxu0 0.0
    %1338 = vmatprep.subr.mxu0 0.0
    %1339 = vmatpush1.xpose.msra.mxu0 0.0
    %1340 = vmatprep.subr.mxu0 0.0
    %1341 = vmatpush1.xpose.msra.mxu0 0.0
    %1342 = vmatprep.subr.mxu0 0.0
    %1343 = vmatpush1.xpose.msra.mxu0 0.0
    %1344 = vmatprep.subr.mxu0 0.0
    %1345 = vmatpush1.xpose.msra.mxu0 0.0
    %1346 = vmatprep.subr.mxu0 0.0
    %1347 = vmatpush1.xpose.msra.mxu0 0.0
    %1348 = vmatprep.subr.mxu0 0.0
    %1349 = vmatpush1.xpose.msra.mxu0 0.0
    %1350 = vmatprep.subr.mxu0 0.0
    %1351 = vmatpush1.xpose.msra.mxu0 0.0
    %1352 = vmatprep.subr.mxu0 0.0
    %1353 = vmatpush1.xpose.msra.mxu0 0.0
    %1354 = vmatprep.subr.mxu0 0.0
    %1355 = vmatpush1.xpose.msra.mxu0 0.0
    %1356 = vmatprep.subr.mxu0 0.0
    %1357 = vmatpush1.xpose.msra.mxu0 0.0
    %1358 = vmatprep.subr.mxu0 0.0
    %1359 = vmatpush1.xpose.msra.mxu0 0.0
    %1360 = vmatprep.subr.mxu0 0.0
    %1361 = vmatpush1.xpose.msra.mxu0 0.0
    %1362 = vmatprep.subr.mxu0 0.0
    %1363 = vmatpush1.xpose.msra.mxu0 0.0
    %1364 = vmatprep.subr.mxu0 0.0
    %1365 = vmatpush1.xpose.msra.mxu0 %v1332
    %1366 = vmatprep.subr.mxu0 0.0
    %1367 = vmatpush2.xpose.msra.mxu0 0.0
    %1368 = vmatprep.subr.mxu0 0.0
    %1369 = vmatpush2.xpose.msra.mxu0 0.0
    %1370 = vmatprep.subr.mxu0 0.0
    %1371 = vmatpush2.xpose.msra.mxu0 0.0
    %1372 = vmatprep.subr.mxu0 0.0
    %1373 = vmatpush2.xpose.msra.mxu0 0.0
    %1374 = vmatprep.subr.mxu0 0.0
    %1375 = vmatpush2.xpose.msra.mxu0 0.0
    %1376 = vmatprep.subr.mxu0 0.0
    %1377 = vmatpush2.xpose.msra.mxu0 0.0
    %1378 = vmatprep.subr.mxu0 0.0
    %1379 = vmatpush2.xpose.msra.mxu0 0.0
    %1380 = vmatprep.subr.mxu0 0.0
    %1381 = vmatpush2.xpose.msra.mxu0 0.0
    %1382 = vmatprep.subr.mxu0 0.0
    %1383 = vmatpush2.xpose.msra.mxu0 0.0
    %1384 = vmatprep.subr.mxu0 0.0
    %1385 = vmatpush2.xpose.msra.mxu0 0.0
    %1386 = vmatprep.subr.mxu0 0.0
    %1387 = vmatpush2.xpose.msra.mxu0 0.0
    %1388 = vmatprep.subr.mxu0 0.0
    %1389 = vmatpush2.xpose.msra.mxu0 0.0
    %1390 = vmatprep.subr.mxu0 0.0
    %1391 = vmatpush2.xpose.msra.mxu0 0.0
    %1392 = vmatprep.subr.mxu0 0.0
    %1393 = vmatpush2.xpose.msra.mxu0 0.0
    %1394 = vmatprep.subr.mxu0 0.0
    %1395 = vmatpush2.xpose.msra.mxu0 0.0
    %1396 = vmatprep.subr.mxu0 0.0
    %1397 = vmatpush2.xpose.msra.mxu0 0.0
    %1398 = vmatprep.mubr.f32.mxu0 0.0
    %1399 = vmatmul.mubr.f32.gmra.mxu0 %v1330
    %v1400 = vpop.f32.mrf.mxu0
    %v1401 = vadd.f32 0.0, %v1400
    %v1402 = vpop.f32.mrf.mxu0
    %1403 = vdwg.mxu0
    %1405 = vrot.lane.b32.xlu0 %v1324, 96
    %v1406 = vpop.permute.xlu0 %1405
    %v1407 = vsel %vm154, %v1324, 0
    %v1409 = vsel %vm154, %v1406, 0
    %1411 = vmatprep.subr.mxu0 0.0
    %1412 = vmatpush1.xpose.msra.mxu0 0.0
    %1413 = vmatprep.subr.mxu0 0.0
    %1414 = vmatpush1.xpose.msra.mxu0 0.0
    %1415 = vmatprep.subr.mxu0 0.0
    %1416 = vmatpush1.xpose.msra.mxu0 0.0
    %1417 = vmatprep.subr.mxu0 0.0
    %1418 = vmatpush1.xpose.msra.mxu0 0.0
    %1419 = vmatprep.subr.mxu0 0.0
    %1420 = vmatpush1.xpose.msra.mxu0 0.0
    %1421 = vmatprep.subr.mxu0 0.0
    %1422 = vmatpush1.xpose.msra.mxu0 0.0
    %1423 = vmatprep.subr.mxu0 0.0
    %1424 = vmatpush1.xpose.msra.mxu0 0.0
    %1425 = vmatprep.subr.mxu0 0.0
    %1426 = vmatpush1.xpose.msra.mxu0 0.0
    %1427 = vmatprep.subr.mxu0 0.0
    %1428 = vmatpush1.xpose.msra.mxu0 0.0
    %1429 = vmatprep.subr.mxu0 0.0
    %1430 = vmatpush1.xpose.msra.mxu0 0.0
    %1431 = vmatprep.subr.mxu0 0.0
    %1432 = vmatpush1.xpose.msra.mxu0 0.0
    %1433 = vmatprep.subr.mxu0 0.0
    %1434 = vmatpush1.xpose.msra.mxu0 0.0
    %1435 = vmatprep.subr.mxu0 0.0
    %1436 = vmatpush1.xpose.msra.mxu0 0.0
    %1437 = vmatprep.subr.mxu0 0.0
    %1438 = vmatpush1.xpose.msra.mxu0 0.0
    %1439 = vmatprep.subr.mxu0 0.0
    %1440 = vmatpush1.xpose.msra.mxu0 0.0
    %1441 = vmatprep.subr.mxu0 0.0
    %1442 = vmatpush1.xpose.msra.mxu0 %v1409
    %1443 = vmatprep.subr.mxu0 0.0
    %1444 = vmatpush2.xpose.msra.mxu0 0.0
    %1445 = vmatprep.subr.mxu0 0.0
    %1446 = vmatpush2.xpose.msra.mxu0 0.0
    %1447 = vmatprep.subr.mxu0 0.0
    %1448 = vmatpush2.xpose.msra.mxu0 0.0
    %1449 = vmatprep.subr.mxu0 0.0
    %1450 = vmatpush2.xpose.msra.mxu0 0.0
    %1451 = vmatprep.subr.mxu0 0.0
    %1452 = vmatpush2.xpose.msra.mxu0 0.0
    %1453 = vmatprep.subr.mxu0 0.0
    %1454 = vmatpush2.xpose.msra.mxu0 0.0
    %1455 = vmatprep.subr.mxu0 0.0
    %1456 = vmatpush2.xpose.msra.mxu0 0.0
    %1457 = vmatprep.subr.mxu0 0.0
    %1458 = vmatpush2.xpose.msra.mxu0 0.0
    %1459 = vmatprep.subr.mxu0 0.0
    %1460 = vmatpush2.xpose.msra.mxu0 0.0
    %1461 = vmatprep.subr.mxu0 0.0
    %1462 = vmatpush2.xpose.msra.mxu0 0.0
    %1463 = vmatprep.subr.mxu0 0.0
    %1464 = vmatpush2.xpose.msra.mxu0 0.0
    %1465 = vmatprep.subr.mxu0 0.0
    %1466 = vmatpush2.xpose.msra.mxu0 0.0
    %1467 = vmatprep.subr.mxu0 0.0
    %1468 = vmatpush2.xpose.msra.mxu0 0.0
    %1469 = vmatprep.subr.mxu0 0.0
    %1470 = vmatpush2.xpose.msra.mxu0 0.0
    %1471 = vmatprep.subr.mxu0 0.0
    %1472 = vmatpush2.xpose.msra.mxu0 0.0
    %1473 = vmatprep.subr.mxu0 0.0
    %1474 = vmatpush2.xpose.msra.mxu0 0.0
    %1475 = vmatprep.mubr.f32.mxu0 0.0
    %1476 = vmatmul.mubr.f32.gmra.mxu0 %v1407
    %v1477 = vpop.f32.mrf.mxu0
    %v1478 = vadd.f32 0.0, %v1477
    %v1479 = vpop.f32.mrf.mxu0
    %1480 = vdwg.mxu0
    %v1481 = vmul.f32 %v1401, 0.25
    %v1482 = vmul.f32 %v1478, 0.25
    %v1483 = vadd.f32 %v1481, %v313
    %v1484 = vadd.f32 %v1482, %v317
    %v1485 = vsel %vm322, %v1483, -inf
    %1486 = vmax.xlane.f32.xlu0 %v1485
    %v1487 = vpop.xlane.xlu0 %1486
    %v1488 = vsel %vm322, %v1484, -inf
    %1489 = vmax.xlane.f32.xlu0 %v1488
    %v1490 = vpop.xlane.xlu0 %1489
    %v1491 = vsub.f32 %v1483, %v1487
    %v1492 = vsub.f32 %v1484, %v1490
    %v1493 = vmul.f32 %v1491, 1.442695
    %v1494 = vpow.pop %v1493
    %v1495 = vmul.f32 %v1492, 1.442695
    %v1496 = vpow.pop %v1495
    %v1497 = vsel %vm322, %v1494, 0.0
    %1498 = vadd.xlane.f32.xlu0 %v1497
    %v1499 = vpop.xlane.xlu0 %1498
    %v1500 = vsel %vm322, %v1496, 0.0
    %1501 = vadd.xlane.f32.xlu0 %v1500
    %v1502 = vpop.xlane.xlu0 %1501
    %v1503 = vrcp.pop %v1499
    %v1504 = vrcp.pop %v1502
    %v1505 = vmul.f32 %v1494, %v1503
    %v1506 = vmul.f32 %v1496, %v1504
    %1507 = vrot.lane.b32.xlu0 %v1319, 64
    %v1508 = vpop.permute.xlu0 %1507
    %v1511 = vsel %vm322, %v1505, 0
    %1513 = vmatprep.subr.mxu0 0.0
    %1514 = vmatpush1.msra.mxu0 0.0
    %1515 = vmatprep.subr.mxu0 0.0
    %1516 = vmatpush1.msra.mxu0 0.0
    %1517 = vmatprep.subr.mxu0 0.0
    %1518 = vmatpush1.msra.mxu0 0.0
    %1519 = vmatprep.subr.mxu0 0.0
    %1520 = vmatpush1.msra.mxu0 0.0
    %1521 = vmatprep.subr.mxu0 0.0
    %1522 = vmatpush1.msra.mxu0 0.0
    %1523 = vmatprep.subr.mxu0 0.0
    %1524 = vmatpush1.msra.mxu0 0.0
    %1525 = vmatprep.subr.mxu0 0.0
    %1526 = vmatpush1.msra.mxu0 0.0
    %1527 = vmatprep.subr.mxu0 0.0
    %1528 = vmatpush1.msra.mxu0 0.0
    %1529 = vmatprep.subr.mxu0 0.0
    %1530 = vmatpush1.msra.mxu0 0.0
    %1531 = vmatprep.subr.mxu0 0.0
    %1532 = vmatpush1.msra.mxu0 0.0
    %1533 = vmatprep.subr.mxu0 0.0
    %1534 = vmatpush1.msra.mxu0 0.0
    %1535 = vmatprep.subr.mxu0 0.0
    %1536 = vmatpush1.msra.mxu0 0.0
    %1537 = vmatprep.subr.mxu0 0.0
    %1538 = vmatpush1.msra.mxu0 0.0
    %1539 = vmatprep.subr.mxu0 0.0
    %1540 = vmatpush1.msra.mxu0 0.0
    %1541 = vmatprep.subr.mxu0 0.0
    %1542 = vmatpush1.msra.mxu0 0.0
    %1543 = vmatprep.subr.mxu0 0.0
    %1544 = vmatpush1.msra.mxu0 %v1508
    %1545 = vmatprep.subr.mxu0 0.0
    %1546 = vmatpush2.msra.mxu0 0.0
    %1547 = vmatprep.subr.mxu0 0.0
    %1548 = vmatpush2.msra.mxu0 0.0
    %1549 = vmatprep.subr.mxu0 0.0
    %1550 = vmatpush2.msra.mxu0 0.0
    %1551 = vmatprep.subr.mxu0 0.0
    %1552 = vmatpush2.msra.mxu0 0.0
    %1553 = vmatprep.subr.mxu0 0.0
    %1554 = vmatpush2.msra.mxu0 0.0
    %1555 = vmatprep.subr.mxu0 0.0
    %1556 = vmatpush2.msra.mxu0 0.0
    %1557 = vmatprep.subr.mxu0 0.0
    %1558 = vmatpush2.msra.mxu0 0.0
    %1559 = vmatprep.subr.mxu0 0.0
    %1560 = vmatpush2.msra.mxu0 0.0
    %1561 = vmatprep.subr.mxu0 0.0
    %1562 = vmatpush2.msra.mxu0 0.0
    %1563 = vmatprep.subr.mxu0 0.0
    %1564 = vmatpush2.msra.mxu0 0.0
    %1565 = vmatprep.subr.mxu0 0.0
    %1566 = vmatpush2.msra.mxu0 0.0
    %1567 = vmatprep.subr.mxu0 0.0
    %1568 = vmatpush2.msra.mxu0 0.0
    %1569 = vmatprep.subr.mxu0 0.0
    %1570 = vmatpush2.msra.mxu0 0.0
    %1571 = vmatprep.subr.mxu0 0.0
    %1572 = vmatpush2.msra.mxu0 0.0
    %1573 = vmatprep.subr.mxu0 0.0
    %1574 = vmatpush2.msra.mxu0 0.0
    %1575 = vmatprep.subr.mxu0 0.0
    %1576 = vmatpush2.msra.mxu0 0.0
    %1577 = vmatprep.mubr.f32.mxu0 0.0
    %1578 = vmatmul.mubr.f32.gmra.mxu0 %v1511
    %v1579 = vpop.f32.mrf.mxu0
    %v1580 = vadd.f32 0.0, %v1579
    %v1581 = vpop.f32.mrf.mxu0
    %1582 = vdwg.mxu0
    %1583 = vrot.lane.b32.xlu0 %v1324, 64
    %v1584 = vpop.permute.xlu0 %1583
    %v1587 = vsel %vm322, %v1506, 0
    %1589 = vmatprep.subr.mxu0 0.0
    %1590 = vmatpush1.msra.mxu0 0.0
    %1591 = vmatprep.subr.mxu0 0.0
    %1592 = vmatpush1.msra.mxu0 0.0
    %1593 = vmatprep.subr.mxu0 0.0
    %1594 = vmatpush1.msra.mxu0 0.0
    %1595 = vmatprep.subr.mxu0 0.0
    %1596 = vmatpush1.msra.mxu0 0.0
    %1597 = vmatprep.subr.mxu0 0.0
    %1598 = vmatpush1.msra.mxu0 0.0
    %1599 = vmatprep.subr.mxu0 0.0
    %1600 = vmatpush1.msra.mxu0 0.0
    %1601 = vmatprep.subr.mxu0 0.0
    %1602 = vmatpush1.msra.mxu0 0.0
    %1603 = vmatprep.subr.mxu0 0.0
    %1604 = vmatpush1.msra.mxu0 0.0
    %1605 = vmatprep.subr.mxu0 0.0
    %1606 = vmatpush1.msra.mxu0 0.0
    %1607 = vmatprep.subr.mxu0 0.0
    %1608 = vmatpush1.msra.mxu0 0.0
    %1609 = vmatprep.subr.mxu0 0.0
    %1610 = vmatpush1.msra.mxu0 0.0
    %1611 = vmatprep.subr.mxu0 0.0
    %1612 = vmatpush1.msra.mxu0 0.0
    %1613 = vmatprep.subr.mxu0 0.0
    %1614 = vmatpush1.msra.mxu0 0.0
    %1615 = vmatprep.subr.mxu0 0.0
    %1616 = vmatpush1.msra.mxu0 0.0
    %1617 = vmatprep.subr.mxu0 0.0
    %1618 = vmatpush1.msra.mxu0 0.0
    %1619 = vmatprep.subr.mxu0 0.0
    %1620 = vmatpush1.msra.mxu0 %v1584
    %1621 = vmatprep.subr.mxu0 0.0
    %1622 = vmatpush2.msra.mxu0 0.0
    %1623 = vmatprep.subr.mxu0 0.0
    %1624 = vmatpush2.msra.mxu0 0.0
    %1625 = vmatprep.subr.mxu0 0.0
    %1626 = vmatpush2.msra.mxu0 0.0
    %1627 = vmatprep.subr.mxu0 0.0
    %1628 = vmatpush2.msra.mxu0 0.0
    %1629 = vmatprep.subr.mxu0 0.0
    %1630 = vmatpush2.msra.mxu0 0.0
    %1631 = vmatprep.subr.mxu0 0.0
    %1632 = vmatpush2.msra.mxu0 0.0
    %1633 = vmatprep.subr.mxu0 0.0
    %1634 = vmatpush2.msra.mxu0 0.0
    %1635 = vmatprep.subr.mxu0 0.0
    %1636 = vmatpush2.msra.mxu0 0.0
    %1637 = vmatprep.subr.mxu0 0.0
    %1638 = vmatpush2.msra.mxu0 0.0
    %1639 = vmatprep.subr.mxu0 0.0
    %1640 = vmatpush2.msra.mxu0 0.0
    %1641 = vmatprep.subr.mxu0 0.0
    %1642 = vmatpush2.msra.mxu0 0.0
    %1643 = vmatprep.subr.mxu0 0.0
    %1644 = vmatpush2.msra.mxu0 0.0
    %1645 = vmatprep.subr.mxu0 0.0
    %1646 = vmatpush2.msra.mxu0 0.0
    %1647 = vmatprep.subr.mxu0 0.0
    %1648 = vmatpush2.msra.mxu0 0.0
    %1649 = vmatprep.subr.mxu0 0.0
    %1650 = vmatpush2.msra.mxu0 0.0
    %1651 = vmatprep.subr.mxu0 0.0
    %1652 = vmatpush2.msra.mxu0 0.0
    %1653 = vmatprep.mubr.f32.mxu0 0.0
    %1654 = vmatmul.mubr.f32.gmra.mxu0 %v1587
    %v1655 = vpop.f32.mrf.mxu0
    %v1656 = vadd.f32 0.0, %v1655
    %v1657 = vpop.f32.mrf.mxu0
    %1658 = vdwg.mxu0
    %1659 = vrot.lane.b32.xlu0 %v1319, 112
    %v1660 = vpop.permute.xlu0 %1659
    %1661 = vrot.lane.b32.xlu0 %v1319, 80
    %v1662 = vpop.permute.xlu0 %1661
    %v1663 = vsel %vm154, %v1660, 0
    %v1665 = vsel %vm154, %v1662, 0
    %1667 = vmatprep.subr.mxu0 0.0
    %1668 = vmatpush1.xpose.msra.mxu0 0.0
    %1669 = vmatprep.subr.mxu0 0.0
    %1670 = vmatpush1.xpose.msra.mxu0 0.0
    %1671 = vmatprep.subr.mxu0 0.0
    %1672 = vmatpush1.xpose.msra.mxu0 0.0
    %1673 = vmatprep.subr.mxu0 0.0
    %1674 = vmatpush1.xpose.msra.mxu0 0.0
    %1675 = vmatprep.subr.mxu0 0.0
    %1676 = vmatpush1.xpose.msra.mxu0 0.0
    %1677 = vmatprep.subr.mxu0 0.0
    %1678 = vmatpush1.xpose.msra.mxu0 0.0
    %1679 = vmatprep.subr.mxu0 0.0
    %1680 = vmatpush1.xpose.msra.mxu0 0.0
    %1681 = vmatprep.subr.mxu0 0.0
    %1682 = vmatpush1.xpose.msra.mxu0 0.0
    %1683 = vmatprep.subr.mxu0 0.0
    %1684 = vmatpush1.xpose.msra.mxu0 0.0
    %1685 = vmatprep.subr.mxu0 0.0
    %1686 = vmatpush1.xpose.msra.mxu0 0.0
    %1687 = vmatprep.subr.mxu0 0.0
    %1688 = vmatpush1.xpose.msra.mxu0 0.0
    %1689 = vmatprep.subr.mxu0 0.0
    %1690 = vmatpush1.xpose.msra.mxu0 0.0
    %1691 = vmatprep.subr.mxu0 0.0
    %1692 = vmatpush1.xpose.msra.mxu0 0.0
    %1693 = vmatprep.subr.mxu0 0.0
    %1694 = vmatpush1.xpose.msra.mxu0 0.0
    %1695 = vmatprep.subr.mxu0 0.0
    %1696 = vmatpush1.xpose.msra.mxu0 0.0
    %1697 = vmatprep.subr.mxu0 0.0
    %1698 = vmatpush1.xpose.msra.mxu0 %v1665
    %1699 = vmatprep.subr.mxu0 0.0
    %1700 = vmatpush2.xpose.msra.mxu0 0.0
    %1701 = vmatprep.subr.mxu0 0.0
    %1702 = vmatpush2.xpose.msra.mxu0 0.0
    %1703 = vmatprep.subr.mxu0 0.0
    %1704 = vmatpush2.xpose.msra.mxu0 0.0
    %1705 = vmatprep.subr.mxu0 0.0
    %1706 = vmatpush2.xpose.msra.mxu0 0.0
    %1707 = vmatprep.subr.mxu0 0.0
    %1708 = vmatpush2.xpose.msra.mxu0 0.0
    %1709 = vmatprep.subr.mxu0 0.0
    %1710 = vmatpush2.xpose.msra.mxu0 0.0
    %1711 = vmatprep.subr.mxu0 0.0
    %1712 = vmatpush2.xpose.msra.mxu0 0.0
    %1713 = vmatprep.subr.mxu0 0.0
    %1714 = vmatpush2.xpose.msra.mxu0 0.0
    %1715 = vmatprep.subr.mxu0 0.0
    %1716 = vmatpush2.xpose.msra.mxu0 0.0
    %1717 = vmatprep.subr.mxu0 0.0
    %1718 = vmatpush2.xpose.msra.mxu0 0.0
    %1719 = vmatprep.subr.mxu0 0.0
    %1720 = vmatpush2.xpose.msra.mxu0 0.0
    %1721 = vmatprep.subr.mxu0 0.0
    %1722 = vmatpush2.xpose.msra.mxu0 0.0
    %1723 = vmatprep.subr.mxu0 0.0
    %1724 = vmatpush2.xpose.msra.mxu0 0.0
    %1725 = vmatprep.subr.mxu0 0.0
    %1726 = vmatpush2.xpose.msra.mxu0 0.0
    %1727 = vmatprep.subr.mxu0 0.0
    %1728 = vmatpush2.xpose.msra.mxu0 0.0
    %1729 = vmatprep.subr.mxu0 0.0
    %1730 = vmatpush2.xpose.msra.mxu0 0.0
    %1731 = vmatprep.mubr.f32.mxu0 0.0
    %1732 = vmatmul.mubr.f32.gmra.mxu0 %v1663
    %v1733 = vpop.f32.mrf.mxu0
    %v1734 = vadd.f32 0.0, %v1733
    %v1735 = vpop.f32.mrf.mxu0
    %1736 = vdwg.mxu0
    %1737 = vrot.lane.b32.xlu0 %v1324, 112
    %v1738 = vpop.permute.xlu0 %1737
    %1739 = vrot.lane.b32.xlu0 %v1324, 80
    %v1740 = vpop.permute.xlu0 %1739
    %v1741 = vsel %vm154, %v1738, 0
    %v1743 = vsel %vm154, %v1740, 0
    %1745 = vmatprep.subr.mxu0 0.0
    %1746 = vmatpush1.xpose.msra.mxu0 0.0
    %1747 = vmatprep.subr.mxu0 0.0
    %1748 = vmatpush1.xpose.msra.mxu0 0.0
    %1749 = vmatprep.subr.mxu0 0.0
    %1750 = vmatpush1.xpose.msra.mxu0 0.0
    %1751 = vmatprep.subr.mxu0 0.0
    %1752 = vmatpush1.xpose.msra.mxu0 0.0
    %1753 = vmatprep.subr.mxu0 0.0
    %1754 = vmatpush1.xpose.msra.mxu0 0.0
    %1755 = vmatprep.subr.mxu0 0.0
    %1756 = vmatpush1.xpose.msra.mxu0 0.0
    %1757 = vmatprep.subr.mxu0 0.0
    %1758 = vmatpush1.xpose.msra.mxu0 0.0
    %1759 = vmatprep.subr.mxu0 0.0
    %1760 = vmatpush1.xpose.msra.mxu0 0.0
    %1761 = vmatprep.subr.mxu0 0.0
    %1762 = vmatpush1.xpose.msra.mxu0 0.0
    %1763 = vmatprep.subr.mxu0 0.0
    %1764 = vmatpush1.xpose.msra.mxu0 0.0
    %1765 = vmatprep.subr.mxu0 0.0
    %1766 = vmatpush1.xpose.msra.mxu0 0.0
    %1767 = vmatprep.subr.mxu0 0.0
    %1768 = vmatpush1.xpose.msra.mxu0 0.0
    %1769 = vmatprep.subr.mxu0 0.0
    %1770 = vmatpush1.xpose.msra.mxu0 0.0
    %1771 = vmatprep.subr.mxu0 0.0
    %1772 = vmatpush1.xpose.msra.mxu0 0.0
    %1773 = vmatprep.subr.mxu0 0.0
    %1774 = vmatpush1.xpose.msra.mxu0 0.0
    %1775 = vmatprep.subr.mxu0 0.0
    %1776 = vmatpush1.xpose.msra.mxu0 %v1743
    %1777 = vmatprep.subr.mxu0 0.0
    %1778 = vmatpush2.xpose.msra.mxu0 0.0
    %1779 = vmatprep.subr.mxu0 0.0
    %1780 = vmatpush2.xpose.msra.mxu0 0.0
    %1781 = vmatprep.subr.mxu0 0.0
    %1782 = vmatpush2.xpose.msra.mxu0 0.0
    %1783 = vmatprep.subr.mxu0 0.0
    %1784 = vmatpush2.xpose.msra.mxu0 0.0
    %1785 = vmatprep.subr.mxu0 0.0
    %1786 = vmatpush2.xpose.msra.mxu0 0.0
    %1787 = vmatprep.subr.mxu0 0.0
    %1788 = vmatpush2.xpose.msra.mxu0 0.0
    %1789 = vmatprep.subr.mxu0 0.0
    %1790 = vmatpush2.xpose.msra.mxu0 0.0
    %1791 = vmatprep.subr.mxu0 0.0
    %1792 = vmatpush2.xpose.msra.mxu0 0.0
    %1793 = vmatprep.subr.mxu0 0.0
    %1794 = vmatpush2.xpose.msra.mxu0 0.0
    %1795 = vmatprep.subr.mxu0 0.0
    %1796 = vmatpush2.xpose.msra.mxu0 0.0
    %1797 = vmatprep.subr.mxu0 0.0
    %1798 = vmatpush2.xpose.msra.mxu0 0.0
    %1799 = vmatprep.subr.mxu0 0.0
    %1800 = vmatpush2.xpose.msra.mxu0 0.0
    %1801 = vmatprep.subr.mxu0 0.0
    %1802 = vmatpush2.xpose.msra.mxu0 0.0
    %1803 = vmatprep.subr.mxu0 0.0
    %1804 = vmatpush2.xpose.msra.mxu0 0.0
    %1805 = vmatprep.subr.mxu0 0.0
    %1806 = vmatpush2.xpose.msra.mxu0 0.0
    %1807 = vmatprep.subr.mxu0 0.0
    %1808 = vmatpush2.xpose.msra.mxu0 0.0
    %1809 = vmatprep.mubr.f32.mxu0 0.0
    %1810 = vmatmul.mubr.f32.gmra.mxu0 %v1741
    %v1811 = vpop.f32.mrf.mxu0
    %v1812 = vadd.f32 0.0, %v1811
    %v1813 = vpop.f32.mrf.mxu0
    %1814 = vdwg.mxu0
    %v1815 = vmul.f32 %v1734, 0.25
    %v1816 = vmul.f32 %v1812, 0.25
    %v1817 = vadd.f32 %v1815, %v313
    %v1818 = vadd.f32 %v1816, %v317
    %v1819 = vsel %vm322, %v1817, -inf
    %1820 = vmax.xlane.f32.xlu0 %v1819
    %v1821 = vpop.xlane.xlu0 %1820
    %v1822 = vsel %vm322, %v1818, -inf
    %1823 = vmax.xlane.f32.xlu0 %v1822
    %v1824 = vpop.xlane.xlu0 %1823
    %v1825 = vsub.f32 %v1817, %v1821
    %v1826 = vsub.f32 %v1818, %v1824
    %v1827 = vmul.f32 %v1825, 1.442695
    %v1828 = vpow.pop %v1827
    %v1829 = vmul.f32 %v1826, 1.442695
    %v1830 = vpow.pop %v1829
    %v1831 = vsel %vm322, %v1828, 0.0
    %1832 = vadd.xlane.f32.xlu0 %v1831
    %v1833 = vpop.xlane.xlu0 %1832
    %v1834 = vsel %vm322, %v1830, 0.0
    %1835 = vadd.xlane.f32.xlu0 %v1834
    %v1836 = vpop.xlane.xlu0 %1835
    %v1837 = vrcp.pop %v1833
    %v1838 = vrcp.pop %v1836
    %v1839 = vmul.f32 %v1828, %v1837
    %v1840 = vmul.f32 %v1830, %v1838
    %1841 = vrot.lane.b32.xlu0 %v1319, 48
    %v1842 = vpop.permute.xlu0 %1841
    %v1845 = vsel %vm322, %v1839, 0
    %1847 = vmatprep.subr.mxu0 0.0
    %1848 = vmatpush1.msra.mxu0 0.0
    %1849 = vmatprep.subr.mxu0 0.0
    %1850 = vmatpush1.msra.mxu0 0.0
    %1851 = vmatprep.subr.mxu0 0.0
    %1852 = vmatpush1.msra.mxu0 0.0
    %1853 = vmatprep.subr.mxu0 0.0
    %1854 = vmatpush1.msra.mxu0 0.0
    %1855 = vmatprep.subr.mxu0 0.0
    %1856 = vmatpush1.msra.mxu0 0.0
    %1857 = vmatprep.subr.mxu0 0.0
    %1858 = vmatpush1.msra.mxu0 0.0
    %1859 = vmatprep.subr.mxu0 0.0
    %1860 = vmatpush1.msra.mxu0 0.0
    %1861 = vmatprep.subr.mxu0 0.0
    %1862 = vmatpush1.msra.mxu0 0.0
    %1863 = vmatprep.subr.mxu0 0.0
    %1864 = vmatpush1.msra.mxu0 0.0
    %1865 = vmatprep.subr.mxu0 0.0
    %1866 = vmatpush1.msra.mxu0 0.0
    %1867 = vmatprep.subr.mxu0 0.0
    %1868 = vmatpush1.msra.mxu0 0.0
    %1869 = vmatprep.subr.mxu0 0.0
    %1870 = vmatpush1.msra.mxu0 0.0
    %1871 = vmatprep.subr.mxu0 0.0
    %1872 = vmatpush1.msra.mxu0 0.0
    %1873 = vmatprep.subr.mxu0 0.0
    %1874 = vmatpush1.msra.mxu0 0.0
    %1875 = vmatprep.subr.mxu0 0.0
    %1876 = vmatpush1.msra.mxu0 0.0
    %1877 = vmatprep.subr.mxu0 0.0
    %1878 = vmatpush1.msra.mxu0 %v1842
    %1879 = vmatprep.subr.mxu0 0.0
    %1880 = vmatpush2.msra.mxu0 0.0
    %1881 = vmatprep.subr.mxu0 0.0
    %1882 = vmatpush2.msra.mxu0 0.0
    %1883 = vmatprep.subr.mxu0 0.0
    %1884 = vmatpush2.msra.mxu0 0.0
    %1885 = vmatprep.subr.mxu0 0.0
    %1886 = vmatpush2.msra.mxu0 0.0
    %1887 = vmatprep.subr.mxu0 0.0
    %1888 = vmatpush2.msra.mxu0 0.0
    %1889 = vmatprep.subr.mxu0 0.0
    %1890 = vmatpush2.msra.mxu0 0.0
    %1891 = vmatprep.subr.mxu0 0.0
    %1892 = vmatpush2.msra.mxu0 0.0
    %1893 = vmatprep.subr.mxu0 0.0
    %1894 = vmatpush2.msra.mxu0 0.0
    %1895 = vmatprep.subr.mxu0 0.0
    %1896 = vmatpush2.msra.mxu0 0.0
    %1897 = vmatprep.subr.mxu0 0.0
    %1898 = vmatpush2.msra.mxu0 0.0
    %1899 = vmatprep.subr.mxu0 0.0
    %1900 = vmatpush2.msra.mxu0 0.0
    %1901 = vmatprep.subr.mxu0 0.0
    %1902 = vmatpush2.msra.mxu0 0.0
    %1903 = vmatprep.subr.mxu0 0.0
    %1904 = vmatpush2.msra.mxu0 0.0
    %1905 = vmatprep.subr.mxu0 0.0
    %1906 = vmatpush2.msra.mxu0 0.0
    %1907 = vmatprep.subr.mxu0 0.0
    %1908 = vmatpush2.msra.mxu0 0.0
    %1909 = vmatprep.subr.mxu0 0.0
    %1910 = vmatpush2.msra.mxu0 0.0
    %1911 = vmatprep.mubr.f32.mxu0 0.0
    %1912 = vmatmul.mubr.f32.gmra.mxu0 %v1845
    %v1913 = vpop.f32.mrf.mxu0
    %v1914 = vadd.f32 0.0, %v1913
    %v1915 = vpop.f32.mrf.mxu0
    %1916 = vdwg.mxu0
    %1917 = vrot.lane.b32.xlu0 %v1324, 48
    %v1918 = vpop.permute.xlu0 %1917
    %v1921 = vsel %vm322, %v1840, 0
    %1923 = vmatprep.subr.mxu0 0.0
    %1924 = vmatpush1.msra.mxu0 0.0
    %1925 = vmatprep.subr.mxu0 0.0
    %1926 = vmatpush1.msra.mxu0 0.0
    %1927 = vmatprep.subr.mxu0 0.0
    %1928 = vmatpush1.msra.mxu0 0.0
    %1929 = vmatprep.subr.mxu0 0.0
    %1930 = vmatpush1.msra.mxu0 0.0
    %1931 = vmatprep.subr.mxu0 0.0
    %1932 = vmatpush1.msra.mxu0 0.0
    %1933 = vmatprep.subr.mxu0 0.0
    %1934 = vmatpush1.msra.mxu0 0.0
    %1935 = vmatprep.subr.mxu0 0.0
    %1936 = vmatpush1.msra.mxu0 0.0
    %1937 = vmatprep.subr.mxu0 0.0
    %1938 = vmatpush1.msra.mxu0 0.0
    %1939 = vmatprep.subr.mxu0 0.0
    %1940 = vmatpush1.msra.mxu0 0.0
    %1941 = vmatprep.subr.mxu0 0.0
    %1942 = vmatpush1.msra.mxu0 0.0
    %1943 = vmatprep.subr.mxu0 0.0
    %1944 = vmatpush1.msra.mxu0 0.0
    %1945 = vmatprep.subr.mxu0 0.0
    %1946 = vmatpush1.msra.mxu0 0.0
    %1947 = vmatprep.subr.mxu0 0.0
    %1948 = vmatpush1.msra.mxu0 0.0
    %1949 = vmatprep.subr.mxu0 0.0
    %1950 = vmatpush1.msra.mxu0 0.0
    %1951 = vmatprep.subr.mxu0 0.0
    %1952 = vmatpush1.msra.mxu0 0.0
    %1953 = vmatprep.subr.mxu0 0.0
    %1954 = vmatpush1.msra.mxu0 %v1918
    %1955 = vmatprep.subr.mxu0 0.0
    %1956 = vmatpush2.msra.mxu0 0.0
    %1957 = vmatprep.subr.mxu0 0.0
    %1958 = vmatpush2.msra.mxu0 0.0
    %1959 = vmatprep.subr.mxu0 0.0
    %1960 = vmatpush2.msra.mxu0 0.0
    %1961 = vmatprep.subr.mxu0 0.0
    %1962 = vmatpush2.msra.mxu0 0.0
    %1963 = vmatprep.subr.mxu0 0.0
    %1964 = vmatpush2.msra.mxu0 0.0
    %1965 = vmatprep.subr.mxu0 0.0
    %1966 = vmatpush2.msra.mxu0 0.0
    %1967 = vmatprep.subr.mxu0 0.0
    %1968 = vmatpush2.msra.mxu0 0.0
    %1969 = vmatprep.subr.mxu0 0.0
    %1970 = vmatpush2.msra.mxu0 0.0
    %1971 = vmatprep.subr.mxu0 0.0
    %1972 = vmatpush2.msra.mxu0 0.0
    %1973 = vmatprep.subr.mxu0 0.0
    %1974 = vmatpush2.msra.mxu0 0.0
    %1975 = vmatprep.subr.mxu0 0.0
    %1976 = vmatpush2.msra.mxu0 0.0
    %1977 = vmatprep.subr.mxu0 0.0
    %1978 = vmatpush2.msra.mxu0 0.0
    %1979 = vmatprep.subr.mxu0 0.0
    %1980 = vmatpush2.msra.mxu0 0.0
    %1981 = vmatprep.subr.mxu0 0.0
    %1982 = vmatpush2.msra.mxu0 0.0
    %1983 = vmatprep.subr.mxu0 0.0
    %1984 = vmatpush2.msra.mxu0 0.0
    %1985 = vmatprep.subr.mxu0 0.0
    %1986 = vmatpush2.msra.mxu0 0.0
    %1987 = vmatprep.mubr.f32.mxu0 0.0
    %1988 = vmatmul.mubr.f32.gmra.mxu0 %v1921
    %v1989 = vpop.f32.mrf.mxu0
    %v1990 = vadd.f32 0.0, %v1989
    %v1991 = vpop.f32.mrf.mxu0
    %1992 = vdwg.mxu0
    %1995 = vrot.lane.b32.xlu0 %v1914, 16
    %v1996 = vpop.permute.xlu0 %1995
    %1997 = vrot.lane.b32.xlu0 %v1990, 16
    %v1998 = vpop.permute.xlu0 %1997
    %v2001 = vsel %vm154, %v1580, %v1996
    %v2002 = vsel %vm154, %v1656, %v1998
    %s2003 = scalar_lea.vmem %s4, 32
    %v2004 = vld [vmem:[%s2003] sm:$0xff]
    %v2005 = vld [vmem:[%s2003 + $0x8] sm:$0xff]
    %v2006 = vld [vmem:[%s2003 + $0x10] sm:$0xff]
    %v2007 = vld [vmem:[%s2003 + $0x18] sm:$0xff]
    %s2008 = scalar_lea.vmem %s5, 1
    %v2009 = vld [vmem:[%s2008] sm:$0x1]
    %v2011 = vlaneseq
    %v2012 = vshrl.u32 %v2011, 7
    %v2013 = vsub.s32 0, %v2012
    %v2014 = vrot.slane %v2009, %v2013
    %v2017 = vsel %vm69, %v2001, 0
    %v2020 = vsel %vm69, %v2002, 0
    %2022 = vmatprep.subr.mxu0 0.0
    %2023 = vmatpush1.msra.mxu0 0.0
    %2024 = vmatprep.subr.mxu0 0.0
    %2025 = vmatpush1.msra.mxu0 0.0
    %2026 = vmatprep.subr.mxu0 0.0
    %2027 = vmatpush1.msra.mxu0 0.0
    %2028 = vmatprep.subr.mxu0 0.0
    %2029 = vmatpush1.msra.mxu0 0.0
    %2030 = vmatprep.subr.mxu0 0.0
    %2031 = vmatpush1.msra.mxu0 0.0
    %2032 = vmatprep.subr.mxu0 0.0
    %2033 = vmatpush1.msra.mxu0 0.0
    %2034 = vmatprep.subr.mxu0 0.0
    %2035 = vmatpush1.msra.mxu0 0.0
    %2036 = vmatprep.subr.mxu0 0.0
    %2037 = vmatpush1.msra.mxu0 0.0
    %2038 = vmatprep.subr.mxu0 0.0
    %2039 = vmatpush1.msra.mxu0 0.0
    %2040 = vmatprep.subr.mxu0 0.0
    %2041 = vmatpush1.msra.mxu0 0.0
    %2042 = vmatprep.subr.mxu0 0.0
    %2043 = vmatpush1.msra.mxu0 0.0
    %2044 = vmatprep.subr.mxu0 0.0
    %2045 = vmatpush1.msra.mxu0 0.0
    %2046 = vmatprep.subr.mxu0 0.0
    %2047 = vmatpush1.msra.mxu0 %v2007
    %2048 = vmatprep.subr.mxu0 0.0
    %2049 = vmatpush1.msra.mxu0 %v2006
    %2050 = vmatprep.subr.mxu0 0.0
    %2051 = vmatpush1.msra.mxu0 %v2005
    %2052 = vmatprep.subr.mxu0 0.0
    %2053 = vmatpush1.msra.mxu0 %v2004
    %2054 = vmatprep.subr.mxu0 0.0
    %2055 = vmatpush2.msra.mxu0 0.0
    %2056 = vmatprep.subr.mxu0 0.0
    %2057 = vmatpush2.msra.mxu0 0.0
    %2058 = vmatprep.subr.mxu0 0.0
    %2059 = vmatpush2.msra.mxu0 0.0
    %2060 = vmatprep.subr.mxu0 0.0
    %2061 = vmatpush2.msra.mxu0 0.0
    %2062 = vmatprep.subr.mxu0 0.0
    %2063 = vmatpush2.msra.mxu0 0.0
    %2064 = vmatprep.subr.mxu0 0.0
    %2065 = vmatpush2.msra.mxu0 0.0
    %2066 = vmatprep.subr.mxu0 0.0
    %2067 = vmatpush2.msra.mxu0 0.0
    %2068 = vmatprep.subr.mxu0 0.0
    %2069 = vmatpush2.msra.mxu0 0.0
    %2070 = vmatprep.subr.mxu0 0.0
    %2071 = vmatpush2.msra.mxu0 0.0
    %2072 = vmatprep.subr.mxu0 0.0
    %2073 = vmatpush2.msra.mxu0 0.0
    %2074 = vmatprep.subr.mxu0 0.0
    %2075 = vmatpush2.msra.mxu0 0.0
    %2076 = vmatprep.subr.mxu0 0.0
    %2077 = vmatpush2.msra.mxu0 0.0
    %2078 = vmatprep.subr.mxu0 0.0
    %2079 = vmatpush2.msra.mxu0 0.0
    %2080 = vmatprep.subr.mxu0 0.0
    %2081 = vmatpush2.msra.mxu0 0.0
    %2082 = vmatprep.subr.mxu0 0.0
    %2083 = vmatpush2.msra.mxu0 0.0
    %2084 = vmatprep.subr.mxu0 0.0
    %2085 = vmatpush2.msra.mxu0 0.0
    %2086 = vmatprep.mubr.f32.mxu0 0.0
    %2087 = vmatmul.mubr.f32.gmra.mxu0 %v2017
    %v2088 = vpop.f32.mrf.mxu0
    %v2089 = vadd.f32 %v2014, %v2088
    %v2090 = vpop.f32.mrf.mxu0
    %2091 = vmatprep.mubr.f32.mxu0 0.0
    %2092 = vmatmul.mubr.f32.gmra.mxu0 %v2020
    %v2093 = vpop.f32.mrf.mxu0
    %v2094 = vadd.f32 %v2014, %v2093
    %v2095 = vpop.f32.mrf.mxu0
    %2096 = vdwg.mxu0
    %v2097 = vadd.f32 %v1231, %v2089
    %v2098 = vadd.f32 %v1232, %v2094
    %v2099 = vsel %vm69, %v2097, 0.0
    %2100 = vadd.xlane.f32.xlu0 %v2099
    %v2101 = vpop.xlane.xlu0 %2100
    %v2102 = vsel %vm69, %v2098, 0.0
    %2103 = vadd.xlane.f32.xlu0 %v2102
    %v2104 = vpop.xlane.xlu0 %2103
    %v2105 = vmul.f32 %v2101, %v941
    %v2106 = vmul.f32 %v2104, %v941
    %v2107 = vsub.f32 %v2097, %v2105
    %v2108 = vsub.f32 %v2098, %v2106
    %v2109 = vmul.f32 %v2107, %v2107
    %v2110 = vmul.f32 %v2108, %v2108
    %v2111 = vsel %vm69, %v2109, 0.0
    %2112 = vadd.xlane.f32.xlu0 %v2111
    %v2113 = vpop.xlane.xlu0 %2112
    %v2114 = vsel %vm69, %v2110, 0.0
    %2115 = vadd.xlane.f32.xlu0 %v2114
    %v2116 = vpop.xlane.xlu0 %2115
    %v2117 = vmul.f32 %v2113, %v941
    %v2118 = vmul.f32 %v2116, %v941
    %v2119 = vadd.f32 %v2117, 1e-12
    %v2120 = vadd.f32 %v2118, 1e-12
    %v2121 = vrsqrt.pop %v2119
    %v2122 = vrsqrt.pop %v2120
    %v2123 = vmul.f32 %v2107, %v2121
    %v2124 = vmul.f32 %v2108, %v2122
    %s2125 = scalar_lea.vmem %s6, 1
    %v2126 = vld [vmem:[%s2125] sm:$0x1]
    %v2128 = vlaneseq
    %v2129 = vshrl.u32 %v2128, 7
    %v2130 = vsub.s32 0, %v2129
    %v2131 = vrot.slane %v2126, %v2130
    %v2133 = vmul.f32 %v2123, %v2131
    %v2134 = vmul.f32 %v2124, %v2131
    %s2135 = scalar_lea.vmem %s7, 1
    %v2136 = vld [vmem:[%s2135] sm:$0x1]
    %v2138 = vlaneseq
    %v2139 = vshrl.u32 %v2138, 7
    %v2140 = vsub.s32 0, %v2139
    %v2141 = vrot.slane %v2136, %v2140
    %v2143 = vadd.f32 %v2133, %v2141
    %v2144 = vadd.f32 %v2134, %v2141
    %s2145 = scalar_lea.vmem %s8, 32
    %v2146 = vld [vmem:[%s2145] sm:$0xff]
    %v2147 = vld [vmem:[%s2145 + $0x8] sm:$0xff]
    %v2148 = vld [vmem:[%s2145 + $0x10] sm:$0xff]
    %v2149 = vld [vmem:[%s2145 + $0x18] sm:$0xff]
    %s2150 = scalar_lea.vmem %s9, 1
    %v2151 = vld [vmem:[%s2150] sm:$0x1]
    %v2153 = vlaneseq
    %v2154 = vshrl.u32 %v2153, 7
    %v2155 = vsub.s32 0, %v2154
    %v2156 = vrot.slane %v2151, %v2155
    %v2159 = vsel %vm69, %v2143, 0
    %v2162 = vsel %vm69, %v2144, 0
    %2164 = vmatprep.subr.mxu0 0.0
    %2165 = vmatpush1.msra.mxu0 0.0
    %2166 = vmatprep.subr.mxu0 0.0
    %2167 = vmatpush1.msra.mxu0 0.0
    %2168 = vmatprep.subr.mxu0 0.0
    %2169 = vmatpush1.msra.mxu0 0.0
    %2170 = vmatprep.subr.mxu0 0.0
    %2171 = vmatpush1.msra.mxu0 0.0
    %2172 = vmatprep.subr.mxu0 0.0
    %2173 = vmatpush1.msra.mxu0 0.0
    %2174 = vmatprep.subr.mxu0 0.0
    %2175 = vmatpush1.msra.mxu0 0.0
    %2176 = vmatprep.subr.mxu0 0.0
    %2177 = vmatpush1.msra.mxu0 0.0
    %2178 = vmatprep.subr.mxu0 0.0
    %2179 = vmatpush1.msra.mxu0 0.0
    %2180 = vmatprep.subr.mxu0 0.0
    %2181 = vmatpush1.msra.mxu0 0.0
    %2182 = vmatprep.subr.mxu0 0.0
    %2183 = vmatpush1.msra.mxu0 0.0
    %2184 = vmatprep.subr.mxu0 0.0
    %2185 = vmatpush1.msra.mxu0 0.0
    %2186 = vmatprep.subr.mxu0 0.0
    %2187 = vmatpush1.msra.mxu0 0.0
    %2188 = vmatprep.subr.mxu0 0.0
    %2189 = vmatpush1.msra.mxu0 %v2149
    %2190 = vmatprep.subr.mxu0 0.0
    %2191 = vmatpush1.msra.mxu0 %v2148
    %2192 = vmatprep.subr.mxu0 0.0
    %2193 = vmatpush1.msra.mxu0 %v2147
    %2194 = vmatprep.subr.mxu0 0.0
    %2195 = vmatpush1.msra.mxu0 %v2146
    %2196 = vmatprep.subr.mxu0 0.0
    %2197 = vmatpush2.msra.mxu0 0.0
    %2198 = vmatprep.subr.mxu0 0.0
    %2199 = vmatpush2.msra.mxu0 0.0
    %2200 = vmatprep.subr.mxu0 0.0
    %2201 = vmatpush2.msra.mxu0 0.0
    %2202 = vmatprep.subr.mxu0 0.0
    %2203 = vmatpush2.msra.mxu0 0.0
    %2204 = vmatprep.subr.mxu0 0.0
    %2205 = vmatpush2.msra.mxu0 0.0
    %2206 = vmatprep.subr.mxu0 0.0
    %2207 = vmatpush2.msra.mxu0 0.0
    %2208 = vmatprep.subr.mxu0 0.0
    %2209 = vmatpush2.msra.mxu0 0.0
    %2210 = vmatprep.subr.mxu0 0.0
    %2211 = vmatpush2.msra.mxu0 0.0
    %2212 = vmatprep.subr.mxu0 0.0
    %2213 = vmatpush2.msra.mxu0 0.0
    %2214 = vmatprep.subr.mxu0 0.0
    %2215 = vmatpush2.msra.mxu0 0.0
    %2216 = vmatprep.subr.mxu0 0.0
    %2217 = vmatpush2.msra.mxu0 0.0
    %2218 = vmatprep.subr.mxu0 0.0
    %2219 = vmatpush2.msra.mxu0 0.0
    %2220 = vmatprep.subr.mxu0 0.0
    %2221 = vmatpush2.msra.mxu0 0.0
    %2222 = vmatprep.subr.mxu0 0.0
    %2223 = vmatpush2.msra.mxu0 0.0
    %2224 = vmatprep.subr.mxu0 0.0
    %2225 = vmatpush2.msra.mxu0 0.0
    %2226 = vmatprep.subr.mxu0 0.0
    %2227 = vmatpush2.msra.mxu0 0.0
    %2228 = vmatprep.mubr.f32.mxu0 0.0
    %2229 = vmatmul.mubr.f32.gmra.mxu0 %v2159
    %v2230 = vpop.f32.mrf.mxu0
    %v2231 = vadd.f32 %v2156, %v2230
    %v2232 = vpop.f32.mrf.mxu0
    %2233 = vmatprep.mubr.f32.mxu0 0.0
    %2234 = vmatmul.mubr.f32.gmra.mxu0 %v2162
    %v2235 = vpop.f32.mrf.mxu0
    %v2236 = vadd.f32 %v2156, %v2235
    %v2237 = vpop.f32.mrf.mxu0
    %2238 = vdwg.mxu0
    %v2239 = vmul.f32 %v2231, %v2231
    %v2240 = vmul.f32 %v2236, %v2236
    %v2241 = vmul.f32 %v2231, %v2239
    %v2242 = vmul.f32 %v2236, %v2240
    %v2243 = vmul.f32 %v2241, 0.044715
    %v2244 = vmul.f32 %v2242, 0.044715
    %v2245 = vadd.f32 %v2231, %v2243
    %v2246 = vadd.f32 %v2236, %v2244
    %v2247 = vmul.f32 %v2245, 0.7978846
    %v2248 = vmul.f32 %v2246, 0.7978846
    %v2249 = vtanh.pop %v2247
    %v2250 = vtanh.pop %v2248
    %v2251 = vadd.f32 %v2249, 1.0
    %v2252 = vadd.f32 %v2250, 1.0
    %v2253 = vmul.f32 %v2251, 0.5
    %v2254 = vmul.f32 %v2252, 0.5
    %v2255 = vmul.f32 %v2231, %v2253
    %v2256 = vmul.f32 %v2236, %v2254
    %s2257 = scalar_lea.vmem %s10, 64
    %v2258 = vld [vmem:[%s2257] sm:$0xff]
    %v2259 = vld [vmem:[%s2257 + $0x8] sm:$0xff]
    %v2260 = vld [vmem:[%s2257 + $0x10] sm:$0xff]
    %v2261 = vld [vmem:[%s2257 + $0x18] sm:$0xff]
    %v2262 = vld [vmem:[%s2257 + $0x20] sm:$0xff]
    %v2263 = vld [vmem:[%s2257 + $0x28] sm:$0xff]
    %v2264 = vld [vmem:[%s2257 + $0x30] sm:$0xff]
    %v2265 = vld [vmem:[%s2257 + $0x38] sm:$0xff]
    %s2266 = scalar_lea.vmem %s11, 1
    %v2267 = vld [vmem:[%s2266] sm:$0x1]
    %v2269 = vlaneseq
    %v2270 = vshrl.u32 %v2269, 7
    %v2271 = vsub.s32 0, %v2270
    %v2272 = vrot.slane %v2267, %v2271
    %v2275 = vsel %vm1105, %v2255, 0
    %v2278 = vsel %vm1105, %v2256, 0
    %2280 = vmatprep.subr.mxu0 0.0
    %2281 = vmatpush1.msra.mxu0 0.0
    %2282 = vmatprep.subr.mxu0 0.0
    %2283 = vmatpush1.msra.mxu0 0.0
    %2284 = vmatprep.subr.mxu0 0.0
    %2285 = vmatpush1.msra.mxu0 0.0
    %2286 = vmatprep.subr.mxu0 0.0
    %2287 = vmatpush1.msra.mxu0 0.0
    %2288 = vmatprep.subr.mxu0 0.0
    %2289 = vmatpush1.msra.mxu0 0.0
    %2290 = vmatprep.subr.mxu0 0.0
    %2291 = vmatpush1.msra.mxu0 0.0
    %2292 = vmatprep.subr.mxu0 0.0
    %2293 = vmatpush1.msra.mxu0 0.0
    %2294 = vmatprep.subr.mxu0 0.0
    %2295 = vmatpush1.msra.mxu0 0.0
    %2296 = vmatprep.subr.mxu0 0.0
    %2297 = vmatpush1.msra.mxu0 %v2265
    %2298 = vmatprep.subr.mxu0 0.0
    %2299 = vmatpush1.msra.mxu0 %v2264
    %2300 = vmatprep.subr.mxu0 0.0
    %2301 = vmatpush1.msra.mxu0 %v2263
    %2302 = vmatprep.subr.mxu0 0.0
    %2303 = vmatpush1.msra.mxu0 %v2262
    %2304 = vmatprep.subr.mxu0 0.0
    %2305 = vmatpush1.msra.mxu0 %v2261
    %2306 = vmatprep.subr.mxu0 0.0
    %2307 = vmatpush1.msra.mxu0 %v2260
    %2308 = vmatprep.subr.mxu0 0.0
    %2309 = vmatpush1.msra.mxu0 %v2259
    %2310 = vmatprep.subr.mxu0 0.0
    %2311 = vmatpush1.msra.mxu0 %v2258
    %2312 = vmatprep.subr.mxu0 0.0
    %2313 = vmatpush2.msra.mxu0 0.0
    %2314 = vmatprep.subr.mxu0 0.0
    %2315 = vmatpush2.msra.mxu0 0.0
    %2316 = vmatprep.subr.mxu0 0.0
    %2317 = vmatpush2.msra.mxu0 0.0
    %2318 = vmatprep.subr.mxu0 0.0
    %2319 = vmatpush2.msra.mxu0 0.0
    %2320 = vmatprep.subr.mxu0 0.0
    %2321 = vmatpush2.msra.mxu0 0.0
    %2322 = vmatprep.subr.mxu0 0.0
    %2323 = vmatpush2.msra.mxu0 0.0
    %2324 = vmatprep.subr.mxu0 0.0
    %2325 = vmatpush2.msra.mxu0 0.0
    %2326 = vmatprep.subr.mxu0 0.0
    %2327 = vmatpush2.msra.mxu0 0.0
    %2328 = vmatprep.subr.mxu0 0.0
    %2329 = vmatpush2.msra.mxu0 0.0
    %2330 = vmatprep.subr.mxu0 0.0
    %2331 = vmatpush2.msra.mxu0 0.0
    %2332 = vmatprep.subr.mxu0 0.0
    %2333 = vmatpush2.msra.mxu0 0.0
    %2334 = vmatprep.subr.mxu0 0.0
    %2335 = vmatpush2.msra.mxu0 0.0
    %2336 = vmatprep.subr.mxu0 0.0
    %2337 = vmatpush2.msra.mxu0 0.0
    %2338 = vmatprep.subr.mxu0 0.0
    %2339 = vmatpush2.msra.mxu0 0.0
    %2340 = vmatprep.subr.mxu0 0.0
    %2341 = vmatpush2.msra.mxu0 0.0
    %2342 = vmatprep.subr.mxu0 0.0
    %2343 = vmatpush2.msra.mxu0 0.0
    %2344 = vmatprep.mubr.f32.mxu0 0.0
    %2345 = vmatmul.mubr.f32.gmra.mxu0 %v2275
    %v2346 = vpop.f32.mrf.mxu0
    %v2347 = vadd.f32 %v2272, %v2346
    %v2348 = vpop.f32.mrf.mxu0
    %2349 = vmatprep.mubr.f32.mxu0 0.0
    %2350 = vmatmul.mubr.f32.gmra.mxu0 %v2278
    %v2351 = vpop.f32.mrf.mxu0
    %v2352 = vadd.f32 %v2272, %v2351
    %v2353 = vpop.f32.mrf.mxu0
    %2354 = vdwg.mxu0
    %v2355 = vadd.f32 %v2143, %v2347
    %v2356 = vadd.f32 %v2144, %v2352
    %v2357 = vsel %vm69, %v2355, 0.0
    %2358 = vadd.xlane.f32.xlu0 %v2357
    %v2359 = vpop.xlane.xlu0 %2358
    %v2360 = vsel %vm69, %v2356, 0.0
    %2361 = vadd.xlane.f32.xlu0 %v2360
    %v2362 = vpop.xlane.xlu0 %2361
    %v2363 = vmul.f32 %v2359, %v941
    %v2364 = vmul.f32 %v2362, %v941
    %v2365 = vsub.f32 %v2355, %v2363
    %v2366 = vsub.f32 %v2356, %v2364
    %v2367 = vmul.f32 %v2365, %v2365
    %v2368 = vmul.f32 %v2366, %v2366
    %v2369 = vsel %vm69, %v2367, 0.0
    %2370 = vadd.xlane.f32.xlu0 %v2369
    %v2371 = vpop.xlane.xlu0 %2370
    %v2372 = vsel %vm69, %v2368, 0.0
    %2373 = vadd.xlane.f32.xlu0 %v2372
    %v2374 = vpop.xlane.xlu0 %2373
    %v2375 = vmul.f32 %v2371, %v941
    %v2376 = vmul.f32 %v2374, %v941
    %v2377 = vadd.f32 %v2375, 1e-12
    %v2378 = vadd.f32 %v2376, 1e-12
    %v2379 = vrsqrt.pop %v2377
    %v2380 = vrsqrt.pop %v2378
    %v2381 = vmul.f32 %v2365, %v2379
    %v2382 = vmul.f32 %v2366, %v2380
    %s2383 = scalar_lea.vmem %s12, 1
    %v2384 = vld [vmem:[%s2383] sm:$0x1]
    %v2386 = vlaneseq
    %v2387 = vshrl.u32 %v2386, 7
    %v2388 = vsub.s32 0, %v2387
    %v2389 = vrot.slane %v2384, %v2388
    %v2391 = vmul.f32 %v2381, %v2389
    %v2392 = vmul.f32 %v2382, %v2389
    %s2393 = scalar_lea.vmem %s13, 1
    %v2394 = vld [vmem:[%s2393] sm:$0x1]
    %v2396 = vlaneseq
    %v2397 = vshrl.u32 %v2396, 7
    %v2398 = vsub.s32 0, %v2397
    %v2399 = vrot.slane %v2394, %v2398
    %v2401 = vadd.f32 %v2391, %v2399
    %v2402 = vadd.f32 %v2392, %v2399
    %v2403 = vld [vmem:[%s14] sm:$0xff]
    %v2404 = vld [vmem:[%s14 + $0x8] sm:$0xff]
    %v2405 = vld [vmem:[%s14 + $0x10] sm:$0xff]
    %v2406 = vld [vmem:[%s14 + $0x18] sm:$0xff]
    %v2407 = vld [vmem:[%s15] sm:$0x1]
    %v2409 = vlaneseq
    %v2410 = vshrl.u32 %v2409, 7
    %v2411 = vsub.s32 0, %v2410
    %v2412 = vrot.slane %v2407, %v2411
    %v2416 = vrot.slane %v2402, 7
    %vm2417 = vcmask 1041409
    %v2418 = vsel %vm2417, %v2416, %v2401
    %v2419 = vsel %vm69, %v2418, 0
    %2421 = vmatprep.subr.mxu0 0.0
    %2422 = vmatpush1.msra.mxu0 0.0
    %2423 = vmatprep.subr.mxu0 0.0
    %2424 = vmatpush1.msra.mxu0 0.0
    %2425 = vmatprep.subr.mxu0 0.0
    %2426 = vmatpush1.msra.mxu0 0.0
    %2427 = vmatprep.subr.mxu0 0.0
    %2428 = vmatpush1.msra.mxu0 0.0
    %2429 = vmatprep.subr.mxu0 0.0
    %2430 = vmatpush1.msra.mxu0 0.0
    %2431 = vmatprep.subr.mxu0 0.0
    %2432 = vmatpush1.msra.mxu0 0.0
    %2433 = vmatprep.subr.mxu0 0.0
    %2434 = vmatpush1.msra.mxu0 0.0
    %2435 = vmatprep.subr.mxu0 0.0
    %2436 = vmatpush1.msra.mxu0 0.0
    %2437 = vmatprep.subr.mxu0 0.0
    %2438 = vmatpush1.msra.mxu0 0.0
    %2439 = vmatprep.subr.mxu0 0.0
    %2440 = vmatpush1.msra.mxu0 0.0
    %2441 = vmatprep.subr.mxu0 0.0
    %2442 = vmatpush1.msra.mxu0 0.0
    %2443 = vmatprep.subr.mxu0 0.0
    %2444 = vmatpush1.msra.mxu0 0.0
    %2445 = vmatprep.subr.mxu0 0.0
    %2446 = vmatpush1.msra.mxu0 %v2406
    %2447 = vmatprep.subr.mxu0 0.0
    %2448 = vmatpush1.msra.mxu0 %v2405
    %2449 = vmatprep.subr.mxu0 0.0
    %2450 = vmatpush1.msra.mxu0 %v2404
    %2451 = vmatprep.subr.mxu0 0.0
    %2452 = vmatpush1.msra.mxu0 %v2403
    %2453 = vmatprep.subr.mxu0 0.0
    %2454 = vmatpush2.msra.mxu0 0.0
    %2455 = vmatprep.subr.mxu0 0.0
    %2456 = vmatpush2.msra.mxu0 0.0
    %2457 = vmatprep.subr.mxu0 0.0
    %2458 = vmatpush2.msra.mxu0 0.0
    %2459 = vmatprep.subr.mxu0 0.0
    %2460 = vmatpush2.msra.mxu0 0.0
    %2461 = vmatprep.subr.mxu0 0.0
    %2462 = vmatpush2.msra.mxu0 0.0
    %2463 = vmatprep.subr.mxu0 0.0
    %2464 = vmatpush2.msra.mxu0 0.0
    %2465 = vmatprep.subr.mxu0 0.0
    %2466 = vmatpush2.msra.mxu0 0.0
    %2467 = vmatprep.subr.mxu0 0.0
    %2468 = vmatpush2.msra.mxu0 0.0
    %2469 = vmatprep.subr.mxu0 0.0
    %2470 = vmatpush2.msra.mxu0 0.0
    %2471 = vmatprep.subr.mxu0 0.0
    %2472 = vmatpush2.msra.mxu0 0.0
    %2473 = vmatprep.subr.mxu0 0.0
    %2474 = vmatpush2.msra.mxu0 0.0
    %2475 = vmatprep.subr.mxu0 0.0
    %2476 = vmatpush2.msra.mxu0 0.0
    %2477 = vmatprep.subr.mxu0 0.0
    %2478 = vmatpush2.msra.mxu0 0.0
    %2479 = vmatprep.subr.mxu0 0.0
    %2480 = vmatpush2.msra.mxu0 0.0
    %2481 = vmatprep.subr.mxu0 0.0
    %2482 = vmatpush2.msra.mxu0 0.0
    %2483 = vmatprep.subr.mxu0 0.0
    %2484 = vmatpush2.msra.mxu0 0.0
    %2485 = vmatprep.mubr.f32.mxu0 0.0
    %2486 = vmatmul.mubr.f32.gmra.mxu0 %v2419
    %v2487 = vpop.f32.mrf.mxu0
    %v2488 = vadd.f32 %v2412, %v2487
    %v2489 = vpop.f32.mrf.mxu0
    %2490 = vdwg.mxu0
    %2491 = vst [vmem:[#allocation2] sm:$0x3] %v2488
    // Predicated region
    $region66: #{forward.1} parent=1 // pred_check
      _
    $region67: #{forward.1} parent=1 // pred_check_branch
      %2493 = sbr.rel (0) target = $region69
    $region68: #{forward.1} parent=1 // pred_region
      %s2495 = ssub.s32 32, 32
      %2496 = vsyncadd [#allocation3], %s2495
      %s2498 = sshll.u32 [#allocation2], 4
      %s2499 = int_to_ptr.vmem [resolvable:$true] %s2498
      %2501 = dma.vmem_to_hbm [thread:$0]  %s2499, 32, %s16, [#allocation3]
    $region69: #{forward.1} parent=1 // pred_fallthru
      _
    // Predicated region
    $region70: #{forward.1} parent=1 // pred_check
      _
    $region71: #{forward.1} parent=1 // pred_check_branch
      %2503 = sbr.rel (0) target = $region73
    $region72: #{forward.1} parent=1 // pred_region
      %2504 = dma.done [#allocation3], 32
    $region73: #{forward.1} parent=1 // pred_fallthru
      _
    %2505 = vsyncpa [#allocation3], 1

</llo_original>
